<compile_context>
chip_gen: v7x
topology: tpu7x:2x2x1
jax: 0.10.0
libtpu: 0.0.40
codegen_flags: <defaults>
</compile_context>

<pallas_src>
import math

import jax
import jax.numpy as jnp
from jax.experimental import pallas as pl
from jax.experimental.pallas import tpu as pltpu  # noqa: F401  (TPU backend)

LANE = 128  # TPU lane width; pad fc3's output dim to this for dense stores.


def _coolnet_fused_kernel(x_ref, w1_ref, b1_ref, w2_ref, b2_ref, w3_ref, b3_ref,
                          o_ref):
    """Fused fc1+ReLU -> fc2+ReLU -> fc3 on fully VMEM-resident operands.

    Single launch, grid=(): one jnp.dot per layer on the MXU with f32
    accumulation; intermediates h1/h2 live only in vregs/VMEM (never HBM).
    """
    h1 = jnp.dot(x_ref[...], w1_ref[...], preferred_element_type=jnp.float32)
    h1 = jnp.maximum(h1 + b1_ref[...], 0.0).astype(jnp.bfloat16)

    h2 = jnp.dot(h1, w2_ref[...], preferred_element_type=jnp.float32)
    h2 = jnp.maximum(h2 + b2_ref[...], 0.0).astype(jnp.bfloat16)

    y = jnp.dot(h2, w3_ref[...], preferred_element_type=jnp.float32)
    o_ref[...] = (y + b3_ref[...]).astype(o_ref.dtype)


def coolnet_forward(x_nchw, params):
    """Equivalent of CoolNet.forward: flatten -> relu(fc1) -> relu(fc2) -> fc3."""
    B = x_nchw.shape[0]
    x = x_nchw.reshape(B, -1).astype(jnp.bfloat16)  # == torch x.view(-1, C*H*W)

    # PyTorch (out, in) weights -> (in, out) for x @ W; bf16 for the MXU.
    w1_t = params["fc1_w"].T.astype(jnp.bfloat16)
    w2_t = params["fc2_w"].T.astype(jnp.bfloat16)
    w3_t = params["fc3_w"].T.astype(jnp.bfloat16)
    b1 = params["fc1_b"].reshape(1, -1).astype(jnp.float32)
    b2 = params["fc2_b"].reshape(1, -1).astype(jnp.float32)
    b3 = params["fc3_b"].reshape(1, -1).astype(jnp.float32)

    # Pad fc3's tiny output dim (3) up to a full lane group (128) so the kernel's
    # output store is lane-dense; slice back afterwards.
    n_out = w3_t.shape[1]
    n_pad = max(LANE, ((n_out + LANE - 1) // LANE) * LANE)
    w3_p = jnp.pad(w3_t, ((0, 0), (0, n_pad - n_out)))
    b3_p = jnp.pad(b3, ((0, 0), (0, n_pad - n_out)))

    out_padded = pl.pallas_call(
        _coolnet_fused_kernel,
        out_shape=jax.ShapeDtypeStruct((B, n_pad), jnp.float32),
        # No grid / BlockSpecs: every operand is loaded whole into VMEM
        # (total ~2.2 MiB bf16+f32), one kernel invocation, no pipelining needed.
    )(x, w1_t, b1, w2_t, b2, w3_p, b3_p)

    return out_padded[:, :n_out]


def init_coolnet_params(key, in_features):
    """Deterministic PyTorch-style uniform(-1/sqrt(fan_in), 1/sqrt(fan_in)) init.

    Weights use PyTorch layout (out_features, in_features), stored in f32.
    """
    dims = [(1024, in_features), (256, 1024), (3, 256)]
    params = {}
    for i, (out_f, in_f) in enumerate(dims, start=1):
        key, kw, kb = jax.random.split(key, 3)
        bound = 1.0 / math.sqrt(in_f)
        params[f"fc{i}_w"] = jax.random.uniform(
            kw, (out_f, in_f), jnp.float32, minval=-bound, maxval=bound
        )
        params[f"fc{i}_b"] = jax.random.uniform(
            kb, (out_f,), jnp.float32, minval=-bound, maxval=bound
        )
    return params


def coolnet_reference(x_nchw, params):
    """Pure-JAX reference mirroring the kernel's numerics (bf16 in, f32 acc)."""
    B = x_nchw.shape[0]
    x = x_nchw.reshape(B, -1).astype(jnp.bfloat16)
    w1_t = params["fc1_w"].T.astype(jnp.bfloat16)
    w2_t = params["fc2_w"].T.astype(jnp.bfloat16)
    w3_t = params["fc3_w"].T.astype(jnp.bfloat16)
    b1 = params["fc1_b"].astype(jnp.float32)
    b2 = params["fc2_b"].astype(jnp.float32)
    b3 = params["fc3_b"].astype(jnp.float32)

    h1 = jnp.maximum(
        jnp.dot(x, w1_t, preferred_element_type=jnp.float32) + b1, 0.0
    ).astype(jnp.bfloat16)
    h2 = jnp.maximum(
        jnp.dot(h1, w2_t, preferred_element_type=jnp.float32) + b2, 0.0
    ).astype(jnp.bfloat16)
    return jnp.dot(h2, w3_t, preferred_element_type=jnp.float32) + b3


if __name__ == "__main__":
    key = jax.random.PRNGKey(0)
    k_x, k_p = jax.random.split(key)

    B, C, H, W = 2, 3, 16, 16  # small demo spatial (original module uses 224x224)
    x = jax.random.normal(k_x, (B, C, H, W), dtype=jnp.float32)
    params = init_coolnet_params(k_p, C * H * W)

    out = coolnet_forward(x, params)
    out = jax.block_until_ready(out)

    ref = coolnet_reference(x, params)
    assert out.shape == (B, 3), out.shape
    assert jnp.allclose(out, ref, atol=2e-2, rtol=2e-2), (
        "mismatch vs reference: max abs diff "
        f"{float(jnp.max(jnp.abs(out - ref)))}"
    )

    print("KERNEL_OK")
</pallas_src>

<mosaic_0001>
module attributes {stable_mosaic.version = 11 : i64} {
  func.func @_coolnet_fused_kernel(%arg0: memref<2x768xbf16, #tpu.memory_space<vmem>>, %arg1: memref<768x1024xbf16, #tpu.memory_space<vmem>>, %arg2: memref<1x1024xf32, #tpu.memory_space<vmem>>, %arg3: memref<1024x256xbf16, #tpu.memory_space<vmem>>, %arg4: memref<1x256xf32, #tpu.memory_space<vmem>>, %arg5: memref<256x128xbf16, #tpu.memory_space<vmem>>, %arg6: memref<1x128xf32, #tpu.memory_space<vmem>>, %arg7: memref<2x128xf32, #tpu.memory_space<vmem>>) attributes {dimension_semantics = [], scalar_prefetch = 0 : i64, scratch_operands = 0 : i64, tpu.core_type = #tpu.core_type<tc>} {
    %c0 = arith.constant 0 : index
    %c0_0 = arith.constant 0 : index
    %0 = vector.load %arg0[%c0, %c0_0] : memref<2x768xbf16, #tpu.memory_space<vmem>>, vector<2x768xbf16>
    %c0_1 = arith.constant 0 : index
    %c0_2 = arith.constant 0 : index
    %1 = vector.load %arg1[%c0_1, %c0_2] : memref<768x1024xbf16, #tpu.memory_space<vmem>>, vector<768x1024xbf16>
    %cst = arith.constant dense<0.000000e+00> : vector<2x1024xf32>
    %2 = tpu.matmul %0, %1, %cst {dimension_numbers = #tpu.dot_dimension_numbers<[1], [0], [0], [1], [0, 0, 1, 1], [], []>} : vector<2x768xbf16>, vector<768x1024xbf16>, vector<2x1024xf32> -> vector<2x1024xf32>
    %c0_3 = arith.constant 0 : index
    %c0_4 = arith.constant 0 : index
    %3 = vector.load %arg2[%c0_3, %c0_4] : memref<1x1024xf32, #tpu.memory_space<vmem>>, vector<1x1024xf32>
    %4 = vector.broadcast %3 : vector<1x1024xf32> to vector<2x1024xf32>
    %5 = arith.addf %2, %4 : vector<2x1024xf32>
    %cst_5 = arith.constant 0.000000e+00 : f32
    %6 = vector.broadcast %cst_5 : f32 to vector<2x1024xf32>
    %7 = arith.maximumf %5, %6 : vector<2x1024xf32>
    %8 = arith.truncf %7 : vector<2x1024xf32> to vector<2x1024xbf16>
    %c0_6 = arith.constant 0 : index
    %c0_7 = arith.constant 0 : index
    %9 = vector.load %arg3[%c0_6, %c0_7] : memref<1024x256xbf16, #tpu.memory_space<vmem>>, vector<1024x256xbf16>
    %cst_8 = arith.constant dense<0.000000e+00> : vector<2x256xf32>
    %10 = tpu.matmul %8, %9, %cst_8 {dimension_numbers = #tpu.dot_dimension_numbers<[1], [0], [0], [1], [0, 0, 1, 1], [], []>} : vector<2x1024xbf16>, vector<1024x256xbf16>, vector<2x256xf32> -> vector<2x256xf32>
    %c0_9 = arith.constant 0 : index
    %c0_10 = arith.constant 0 : index
    %11 = vector.load %arg4[%c0_9, %c0_10] : memref<1x256xf32, #tpu.memory_space<vmem>>, vector<1x256xf32>
    %12 = vector.broadcast %11 : vector<1x256xf32> to vector<2x256xf32>
    %13 = arith.addf %10, %12 : vector<2x256xf32>
    %cst_11 = arith.constant 0.000000e+00 : f32
    %14 = vector.broadcast %cst_11 : f32 to vector<2x256xf32>
    %15 = arith.maximumf %13, %14 : vector<2x256xf32>
    %16 = arith.truncf %15 : vector<2x256xf32> to vector<2x256xbf16>
    %c0_12 = arith.constant 0 : index
    %c0_13 = arith.constant 0 : index
    %17 = vector.load %arg5[%c0_12, %c0_13] : memref<256x128xbf16, #tpu.memory_space<vmem>>, vector<256x128xbf16>
    %cst_14 = arith.constant dense<0.000000e+00> : vector<2x128xf32>
    %18 = tpu.matmul %16, %17, %cst_14 {dimension_numbers = #tpu.dot_dimension_numbers<[1], [0], [0], [1], [0, 0, 1, 1], [], []>} : vector<2x256xbf16>, vector<256x128xbf16>, vector<2x128xf32> -> vector<2x128xf32>
    %c0_15 = arith.constant 0 : index
    %c0_16 = arith.constant 0 : index
    %19 = vector.load %arg6[%c0_15, %c0_16] : memref<1x128xf32, #tpu.memory_space<vmem>>, vector<1x128xf32>
    %20 = vector.broadcast %19 : vector<1x128xf32> to vector<2x128xf32>
    %21 = arith.addf %18, %20 : vector<2x128xf32>
    %c0_17 = arith.constant 0 : index
    %c0_18 = arith.constant 0 : index
    %22 = vector.load %arg7[%c0_17, %c0_18] : memref<2x128xf32, #tpu.memory_space<vmem>>, vector<2x128xf32>
    tpu.vector_store %arg7[%c0_17, %c0_18], %21 {strides = array<i32>} : memref<2x128xf32, #tpu.memory_space<vmem>>, vector<2x128xf32>,
    return
  }
}

</mosaic_0001>

<llo_original>
// kernel: tpu_custom_call.1
$region0: #{tpu_custom_call.1}
  #allocation0 [shape = 'u32[]', space=smem, size = 0x4, offset = 0x4, fixed_abs, tag = 'smem constant byte address 0x4 - core index']
  #allocation1 [shape = 'u32[144,128]{1,0:T(1,128)}', space=vmem, size = 0x12000, scoped, tag = 'internal scratch']
  %s0 = inlined_call_operand.hbm [shape: bf16[2,768], index: 0, kind: input, shape index: {}]
  %s1 = inlined_call_operand.hbm [shape: bf16[768,1024], index: 1, kind: input, shape index: {}]
  %s2 = inlined_call_operand.hbm [shape: f32[1,1024], index: 2, kind: input, shape index: {}]
  %s3 = inlined_call_operand.hbm [shape: bf16[1024,256], index: 3, kind: input, shape index: {}]
  %s4 = inlined_call_operand.hbm [shape: f32[1,256], index: 4, kind: input, shape index: {}]
  %s5 = inlined_call_operand.hbm [shape: bf16[256,128], index: 5, kind: input, shape index: {}]
  %s6 = inlined_call_operand.hbm [shape: f32[1,128], index: 6, kind: input, shape index: {}]
  %s7 = inlined_call_operand.hbm [shape: f32[2,128], index: 7, kind: output, shape index: {}]
  %s8 = sld [smem:[#allocation0]]
  $region66: #{tpu_custom_call.1} parent=0
    _
  %s10 = ssub.s32 1, %s8
  %s11 = scalar_select 0, %s10, %s8
  $region1: #{tpu_custom_call.1} parent=0
    #allocation2 [shape = 'u8[3072]{0}', space=vmem, size = 0xc00, scoped, tag = 'input window, operand 0, single buffered']
    #allocation3 [shape = 's32[1]{0}', space=sflag, size = 0x4, scoped, tag = 'scoped memory for tpu_custom_call.1']
    #allocation4 [shape = 's32[1]{0}', space=sflag, size = 0x4, scoped, tag = 'scoped memory for tpu_custom_call.1']
    #allocation5 [shape = 'u8[1572864]{0}', space=vmem, size = 0x180000, scoped, tag = 'input window, operand 1, single buffered']
    #allocation6 [shape = 's32[1]{0}', space=sflag, size = 0x4, scoped, tag = 'scoped memory for tpu_custom_call.1']
    #allocation7 [shape = 'u8[4096]{0}', space=vmem, size = 0x1000, scoped, tag = 'input window, operand 2, single buffered']
    #allocation8 [shape = 'u8[524288]{0}', space=vmem, size = 0x80000, scoped, tag = 'input window, operand 3, single buffered']
    #allocation9 [shape = 's32[1]{0}', space=sflag, size = 0x4, scoped, tag = 'scoped memory for tpu_custom_call.1']
    #allocation10 [shape = 'u8[1024]{0}', space=vmem, size = 0x400, scoped, tag = 'input window, operand 4, single buffered']
    #allocation11 [shape = 'u8[65536]{0}', space=vmem, size = 0x10000, scoped, tag = 'input window, operand 5, single buffered']
    #allocation12 [shape = 's32[1]{0}', space=sflag, size = 0x4, scoped, tag = 'scoped memory for tpu_custom_call.1']
    #allocation13 [shape = 'u8[512]{0}', space=vmem, size = 0x400, scoped, tag = 'input window, operand 6, single buffered']
    #allocation14 [shape = 'u8[1024]{0}', space=vmem, size = 0x400, scoped, tag = 'output window, operand 0, single buffered']
    %12 = vsyncpa [#allocation3], 0
    %13 = vsyncpa [#allocation6], 0
    %14 = vsyncpa [#allocation9], 0
    %15 = vsyncpa [#allocation12], 0
    %16 = vsyncpa [#allocation4], 0
    // Predicated region
    $region2: #{tpu_custom_call.1} parent=1 // pred_check
      _
    $region3: #{tpu_custom_call.1} parent=1 // pred_check_branch
      %18 = sbr.rel (0) target = $region5
    $region4: #{tpu_custom_call.1} parent=1 // pred_region
      %s20 = ssub.s32 96, 96
      %21 = vsyncadd [#allocation3], %s20
      %s23 = sshll.u32 [#allocation2], 4
      %s24 = int_to_ptr.vmem [resolvable:$true] %s23
      %26 = dma.hbm_to_vmem [thread:$0]  %s0, 96, %s24, [#allocation3]
    $region5: #{tpu_custom_call.1} parent=1 // pred_fallthru
      _
    // Predicated region
    $region6: #{tpu_custom_call.1} parent=1 // pred_check
      _
    $region7: #{tpu_custom_call.1} parent=1 // pred_check_branch
      %28 = sbr.rel (0) target = $region9
    $region8: #{tpu_custom_call.1} parent=1 // pred_region
      %s30 = ssub.s32 49152, 49152
      %31 = vsyncadd [#allocation6], %s30
      %s32 = sshll.u32 [#allocation5], 4
      %s33 = int_to_ptr.vmem [resolvable:$true] %s32
      %38 = dma.hbm_to_vmem [thread:$0]  %s1, 49152, %s33, [#allocation6], 512, 512, 32
    $region9: #{tpu_custom_call.1} parent=1 // pred_fallthru
      _
    // Predicated region
    $region10: #{tpu_custom_call.1} parent=1 // pred_check
      _
    $region11: #{tpu_custom_call.1} parent=1 // pred_check_branch
      %40 = sbr.rel (0) target = $region13
    $region12: #{tpu_custom_call.1} parent=1 // pred_region
      %s42 = ssub.s32 128, 128
      %43 = vsyncadd [#allocation6], %s42
      %s45 = sshll.u32 [#allocation7], 4
      %s46 = int_to_ptr.vmem [resolvable:$true] %s45
      %48 = dma.hbm_to_vmem [thread:$0]  %s2, 128, %s46, [#allocation6]
    $region13: #{tpu_custom_call.1} parent=1 // pred_fallthru
      _
    // Predicated region
    $region14: #{tpu_custom_call.1} parent=1 // pred_check
      _
    $region15: #{tpu_custom_call.1} parent=1 // pred_check_branch
      %50 = sbr.rel (0) target = $region17
    $region16: #{tpu_custom_call.1} parent=1 // pred_region
      %s52 = ssub.s32 16384, 16384
      %53 = vsyncadd [#allocation9], %s52
      %s54 = sshll.u32 [#allocation8], 4
      %s55 = int_to_ptr.vmem [resolvable:$true] %s54
      %60 = dma.hbm_to_vmem [thread:$0]  %s3, 16384, %s55, [#allocation9], 128, 128, 8
    $region17: #{tpu_custom_call.1} parent=1 // pred_fallthru
      _
    // Predicated region
    $region18: #{tpu_custom_call.1} parent=1 // pred_check
      _
    $region19: #{tpu_custom_call.1} parent=1 // pred_check_branch
      %62 = sbr.rel (0) target = $region21
    $region20: #{tpu_custom_call.1} parent=1 // pred_region
      %s64 = ssub.s32 32, 32
      %65 = vsyncadd [#allocation9], %s64
      %s67 = sshll.u32 [#allocation10], 4
      %s68 = int_to_ptr.vmem [resolvable:$true] %s67
      %70 = dma.hbm_to_vmem [thread:$0]  %s4, 32, %s68, [#allocation9]
    $region21: #{tpu_custom_call.1} parent=1 // pred_fallthru
      _
    // Predicated region
    $region22: #{tpu_custom_call.1} parent=1 // pred_check
      _
    $region23: #{tpu_custom_call.1} parent=1 // pred_check_branch
      %72 = sbr.rel (0) target = $region25
    $region24: #{tpu_custom_call.1} parent=1 // pred_region
      %s74 = ssub.s32 2048, 2048
      %75 = vsyncadd [#allocation12], %s74
      %s76 = sshll.u32 [#allocation11], 4
      %s77 = int_to_ptr.vmem [resolvable:$true] %s76
      %82 = dma.hbm_to_vmem [thread:$0]  %s5, 2048, %s77, [#allocation12], 64, 64, 4
    $region25: #{tpu_custom_call.1} parent=1 // pred_fallthru
      _
    // Predicated region
    $region26: #{tpu_custom_call.1} parent=1 // pred_check
      _
    $region27: #{tpu_custom_call.1} parent=1 // pred_check_branch
      %84 = sbr.rel (0) target = $region29
    $region28: #{tpu_custom_call.1} parent=1 // pred_region
      %s86 = ssub.s32 16, 16
      %87 = vsyncadd [#allocation12], %s86
      %s89 = sshll.u32 [#allocation13], 4
      %s90 = int_to_ptr.vmem [resolvable:$true] %s89
      %92 = dma.hbm_to_vmem [thread:$0]  %s6, 16, %s90, [#allocation12]
    $region29: #{tpu_custom_call.1} parent=1 // pred_fallthru
      _
    // Predicated region
    $region30: #{tpu_custom_call.1} parent=1 // pred_check
      _
    $region31: #{tpu_custom_call.1} parent=1 // pred_check_branch
      %94 = sbr.rel (0) target = $region33
    $region32: #{tpu_custom_call.1} parent=1 // pred_region
      %95 = dma.done [#allocation3], 96
    $region33: #{tpu_custom_call.1} parent=1 // pred_fallthru
      _
    // Predicated region
    $region34: #{tpu_custom_call.1} parent=1 // pred_check
      _
    $region35: #{tpu_custom_call.1} parent=1 // pred_check_branch
      %97 = sbr.rel (0) target = $region37
    $region36: #{tpu_custom_call.1} parent=1 // pred_region
      %98 = dma.done [#allocation6], 49152
    $region37: #{tpu_custom_call.1} parent=1 // pred_fallthru
      _
    // Predicated region
    $region38: #{tpu_custom_call.1} parent=1 // pred_check
      _
    $region39: #{tpu_custom_call.1} parent=1 // pred_check_branch
      %100 = sbr.rel (0) target = $region41
    $region40: #{tpu_custom_call.1} parent=1 // pred_region
      %101 = dma.done [#allocation6], 128
    $region41: #{tpu_custom_call.1} parent=1 // pred_fallthru
      _
    // Predicated region
    $region42: #{tpu_custom_call.1} parent=1 // pred_check
      _
    $region43: #{tpu_custom_call.1} parent=1 // pred_check_branch
      %103 = sbr.rel (0) target = $region45
    $region44: #{tpu_custom_call.1} parent=1 // pred_region
      %104 = dma.done [#allocation9], 16384
    $region45: #{tpu_custom_call.1} parent=1 // pred_fallthru
      _
    // Predicated region
    $region46: #{tpu_custom_call.1} parent=1 // pred_check
      _
    $region47: #{tpu_custom_call.1} parent=1 // pred_check_branch
      %106 = sbr.rel (0) target = $region49
    $region48: #{tpu_custom_call.1} parent=1 // pred_region
      %107 = dma.done [#allocation9], 32
    $region49: #{tpu_custom_call.1} parent=1 // pred_fallthru
      _
    // Predicated region
    $region50: #{tpu_custom_call.1} parent=1 // pred_check
      _
    $region51: #{tpu_custom_call.1} parent=1 // pred_check_branch
      %109 = sbr.rel (0) target = $region53
    $region52: #{tpu_custom_call.1} parent=1 // pred_region
      %110 = dma.done [#allocation12], 2048
    $region53: #{tpu_custom_call.1} parent=1 // pred_fallthru
      _
    // Predicated region
    $region54: #{tpu_custom_call.1} parent=1 // pred_check
      _
    $region55: #{tpu_custom_call.1} parent=1 // pred_check_branch
      %112 = sbr.rel (0) target = $region57
    $region56: #{tpu_custom_call.1} parent=1 // pred_region
      %113 = dma.done [#allocation12], 16
    $region57: #{tpu_custom_call.1} parent=1 // pred_fallthru
      _
    %v115 = vld [vmem:[#allocation2] sm:$0x3f]
    %v116 = vld [vmem:[#allocation5] sm:$0xff]
    %v117 = vld [vmem:[#allocation5 + $0x8] sm:$0xff]
    %v118 = vld [vmem:[#allocation5 + $0x10] sm:$0xff]
    %v119 = vld [vmem:[#allocation5 + $0x18] sm:$0xff]
    %v120 = vld [vmem:[#allocation5 + $0x20] sm:$0xff]
    %v121 = vld [vmem:[#allocation5 + $0x28] sm:$0xff]
    %v122 = vld [vmem:[#allocation5 + $0x30] sm:$0xff]
    %v123 = vld [vmem:[#allocation5 + $0x38] sm:$0xff]
    %v124 = vld [vmem:[#allocation5 + $0x40] sm:$0xff]
    %v125 = vld [vmem:[#allocation5 + $0x48] sm:$0xff]
    %v126 = vld [vmem:[#allocation5 + $0x50] sm:$0xff]
    %v127 = vld [vmem:[#allocation5 + $0x58] sm:$0xff]
    %v128 = vld [vmem:[#allocation5 + $0x60] sm:$0xff]
    %v129 = vld [vmem:[#allocation5 + $0x68] sm:$0xff]
    %v130 = vld [vmem:[#allocation5 + $0x70] sm:$0xff]
    %v131 = vld [vmem:[#allocation5 + $0x78] sm:$0xff]
    %v132 = vld [vmem:[#allocation5 + $0x80] sm:$0xff]
    %v133 = vld [vmem:[#allocation5 + $0x88] sm:$0xff]
    %v134 = vld [vmem:[#allocation5 + $0x90] sm:$0xff]
    %v135 = vld [vmem:[#allocation5 + $0x98] sm:$0xff]
    %v136 = vld [vmem:[#allocation5 + $0xa0] sm:$0xff]
    %v137 = vld [vmem:[#allocation5 + $0xa8] sm:$0xff]
    %v138 = vld [vmem:[#allocation5 + $0xb0] sm:$0xff]
    %v139 = vld [vmem:[#allocation5 + $0xb8] sm:$0xff]
    %v140 = vld [vmem:[#allocation5 + $0xc0] sm:$0xff]
    %v141 = vld [vmem:[#allocation5 + $0xc8] sm:$0xff]
    %v142 = vld [vmem:[#allocation5 + $0xd0] sm:$0xff]
    %v143 = vld [vmem:[#allocation5 + $0xd8] sm:$0xff]
    %v144 = vld [vmem:[#allocation5 + $0xe0] sm:$0xff]
    %v145 = vld [vmem:[#allocation5 + $0xe8] sm:$0xff]
    %v146 = vld [vmem:[#allocation5 + $0xf0] sm:$0xff]
    %v147 = vld [vmem:[#allocation5 + $0xf8] sm:$0xff]
    %v148 = vld [vmem:[#allocation5 + $0x100] sm:$0xff]
    %v149 = vld [vmem:[#allocation5 + $0x108] sm:$0xff]
    %v150 = vld [vmem:[#allocation5 + $0x110] sm:$0xff]
    %v151 = vld [vmem:[#allocation5 + $0x118] sm:$0xff]
    %v152 = vld [vmem:[#allocation5 + $0x120] sm:$0xff]
    %v153 = vld [vmem:[#allocation5 + $0x128] sm:$0xff]
    %v154 = vld [vmem:[#allocation5 + $0x130] sm:$0xff]
    %v155 = vld [vmem:[#allocation5 + $0x138] sm:$0xff]
    %v156 = vld [vmem:[#allocation5 + $0x140] sm:$0xff]
    %v157 = vld [vmem:[#allocation5 + $0x148] sm:$0xff]
    %v158 = vld [vmem:[#allocation5 + $0x150] sm:$0xff]
    %v159 = vld [vmem:[#allocation5 + $0x158] sm:$0xff]
    %v160 = vld [vmem:[#allocation5 + $0x160] sm:$0xff]
    %v161 = vld [vmem:[#allocation5 + $0x168] sm:$0xff]
    %v162 = vld [vmem:[#allocation5 + $0x170] sm:$0xff]
    %v163 = vld [vmem:[#allocation5 + $0x178] sm:$0xff]
    %v164 = vld [vmem:[#allocation5 + $0x180] sm:$0xff]
    %v165 = vld [vmem:[#allocation5 + $0x188] sm:$0xff]
    %v166 = vld [vmem:[#allocation5 + $0x190] sm:$0xff]
    %v167 = vld [vmem:[#allocation5 + $0x198] sm:$0xff]
    %v168 = vld [vmem:[#allocation5 + $0x1a0] sm:$0xff]
    %v169 = vld [vmem:[#allocation5 + $0x1a8] sm:$0xff]
    %v170 = vld [vmem:[#allocation5 + $0x1b0] sm:$0xff]
    %v171 = vld [vmem:[#allocation5 + $0x1b8] sm:$0xff]
    %v172 = vld [vmem:[#allocation5 + $0x1c0] sm:$0xff]
    %v173 = vld [vmem:[#allocation5 + $0x1c8] sm:$0xff]
    %v174 = vld [vmem:[#allocation5 + $0x1d0] sm:$0xff]
    %v175 = vld [vmem:[#allocation5 + $0x1d8] sm:$0xff]
    %v176 = vld [vmem:[#allocation5 + $0x1e0] sm:$0xff]
    %v177 = vld [vmem:[#allocation5 + $0x1e8] sm:$0xff]
    %v178 = vld [vmem:[#allocation5 + $0x1f0] sm:$0xff]
    %v179 = vld [vmem:[#allocation5 + $0x1f8] sm:$0xff]
    %v180 = vld [vmem:[#allocation5 + $0x200] sm:$0xff]
    %v181 = vld [vmem:[#allocation5 + $0x208] sm:$0xff]
    %v182 = vld [vmem:[#allocation5 + $0x210] sm:$0xff]
    %v183 = vld [vmem:[#allocation5 + $0x218] sm:$0xff]
    %v184 = vld [vmem:[#allocation5 + $0x220] sm:$0xff]
    %v185 = vld [vmem:[#allocation5 + $0x228] sm:$0xff]
    %v186 = vld [vmem:[#allocation5 + $0x230] sm:$0xff]
    %v187 = vld [vmem:[#allocation5 + $0x238] sm:$0xff]
    %v188 = vld [vmem:[#allocation5 + $0x240] sm:$0xff]
    %v189 = vld [vmem:[#allocation5 + $0x248] sm:$0xff]
    %v190 = vld [vmem:[#allocation5 + $0x250] sm:$0xff]
    %v191 = vld [vmem:[#allocation5 + $0x258] sm:$0xff]
    %v192 = vld [vmem:[#allocation5 + $0x260] sm:$0xff]
    %v193 = vld [vmem:[#allocation5 + $0x268] sm:$0xff]
    %v194 = vld [vmem:[#allocation5 + $0x270] sm:$0xff]
    %v195 = vld [vmem:[#allocation5 + $0x278] sm:$0xff]
    %v196 = vld [vmem:[#allocation5 + $0x280] sm:$0xff]
    %v197 = vld [vmem:[#allocation5 + $0x288] sm:$0xff]
    %v198 = vld [vmem:[#allocation5 + $0x290] sm:$0xff]
    %v199 = vld [vmem:[#allocation5 + $0x298] sm:$0xff]
    %v200 = vld [vmem:[#allocation5 + $0x2a0] sm:$0xff]
    %v201 = vld [vmem:[#allocation5 + $0x2a8] sm:$0xff]
    %v202 = vld [vmem:[#allocation5 + $0x2b0] sm:$0xff]
    %v203 = vld [vmem:[#allocation5 + $0x2b8] sm:$0xff]
    %v204 = vld [vmem:[#allocation5 + $0x2c0] sm:$0xff]
    %v205 = vld [vmem:[#allocation5 + $0x2c8] sm:$0xff]
    %v206 = vld [vmem:[#allocation5 + $0x2d0] sm:$0xff]
    %v207 = vld [vmem:[#allocation5 + $0x2d8] sm:$0xff]
    %v208 = vld [vmem:[#allocation5 + $0x2e0] sm:$0xff]
    %v209 = vld [vmem:[#allocation5 + $0x2e8] sm:$0xff]
    %v210 = vld [vmem:[#allocation5 + $0x2f0] sm:$0xff]
    %v211 = vld [vmem:[#allocation5 + $0x2f8] sm:$0xff]
    %v212 = vld [vmem:[#allocation5 + $0x300] sm:$0xff]
    %v213 = vld [vmem:[#allocation5 + $0x308] sm:$0xff]
    %v214 = vld [vmem:[#allocation5 + $0x310] sm:$0xff]
    %v215 = vld [vmem:[#allocation5 + $0x318] sm:$0xff]
    %v216 = vld [vmem:[#allocation5 + $0x320] sm:$0xff]
    %v217 = vld [vmem:[#allocation5 + $0x328] sm:$0xff]
    %v218 = vld [vmem:[#allocation5 + $0x330] sm:$0xff]
    %v219 = vld [vmem:[#allocation5 + $0x338] sm:$0xff]
    %v220 = vld [vmem:[#allocation5 + $0x340] sm:$0xff]
    %v221 = vld [vmem:[#allocation5 + $0x348] sm:$0xff]
    %v222 = vld [vmem:[#allocation5 + $0x350] sm:$0xff]
    %v223 = vld [vmem:[#allocation5 + $0x358] sm:$0xff]
    %v224 = vld [vmem:[#allocation5 + $0x360] sm:$0xff]
    %v225 = vld [vmem:[#allocation5 + $0x368] sm:$0xff]
    %v226 = vld [vmem:[#allocation5 + $0x370] sm:$0xff]
    %v227 = vld [vmem:[#allocation5 + $0x378] sm:$0xff]
    %v228 = vld [vmem:[#allocation5 + $0x380] sm:$0xff]
    %v229 = vld [vmem:[#allocation5 + $0x388] sm:$0xff]
    %v230 = vld [vmem:[#allocation5 + $0x390] sm:$0xff]
    %v231 = vld [vmem:[#allocation5 + $0x398] sm:$0xff]
    %v232 = vld [vmem:[#allocation5 + $0x3a0] sm:$0xff]
    %v233 = vld [vmem:[#allocation5 + $0x3a8] sm:$0xff]
    %v234 = vld [vmem:[#allocation5 + $0x3b0] sm:$0xff]
    %v235 = vld [vmem:[#allocation5 + $0x3b8] sm:$0xff]
    %v236 = vld [vmem:[#allocation5 + $0x3c0] sm:$0xff]
    %v237 = vld [vmem:[#allocation5 + $0x3c8] sm:$0xff]
    %v238 = vld [vmem:[#allocation5 + $0x3d0] sm:$0xff]
    %v239 = vld [vmem:[#allocation5 + $0x3d8] sm:$0xff]
    %v240 = vld [vmem:[#allocation5 + $0x3e0] sm:$0xff]
    %v241 = vld [vmem:[#allocation5 + $0x3e8] sm:$0xff]
    %v242 = vld [vmem:[#allocation5 + $0x3f0] sm:$0xff]
    %v243 = vld [vmem:[#allocation5 + $0x3f8] sm:$0xff]
    %v244 = vld [vmem:[#allocation5 + $0x400] sm:$0xff]
    %v245 = vld [vmem:[#allocation5 + $0x408] sm:$0xff]
    %v246 = vld [vmem:[#allocation5 + $0x410] sm:$0xff]
    %v247 = vld [vmem:[#allocation5 + $0x418] sm:$0xff]
    %v248 = vld [vmem:[#allocation5 + $0x420] sm:$0xff]
    %v249 = vld [vmem:[#allocation5 + $0x428] sm:$0xff]
    %v250 = vld [vmem:[#allocation5 + $0x430] sm:$0xff]
    %v251 = vld [vmem:[#allocation5 + $0x438] sm:$0xff]
    %v252 = vld [vmem:[#allocation5 + $0x440] sm:$0xff]
    %v253 = vld [vmem:[#allocation5 + $0x448] sm:$0xff]
    %v254 = vld [vmem:[#allocation5 + $0x450] sm:$0xff]
    %v255 = vld [vmem:[#allocation5 + $0x458] sm:$0xff]
    %v256 = vld [vmem:[#allocation5 + $0x460] sm:$0xff]
    %v257 = vld [vmem:[#allocation5 + $0x468] sm:$0xff]
    %v258 = vld [vmem:[#allocation5 + $0x470] sm:$0xff]
    %v259 = vld [vmem:[#allocation5 + $0x478] sm:$0xff]
    %v260 = vld [vmem:[#allocation5 + $0x480] sm:$0xff]
    %v261 = vld [vmem:[#allocation5 + $0x488] sm:$0xff]
    %v262 = vld [vmem:[#allocation5 + $0x490] sm:$0xff]
    %v263 = vld [vmem:[#allocation5 + $0x498] sm:$0xff]
    %v264 = vld [vmem:[#allocation5 + $0x4a0] sm:$0xff]
    %v265 = vld [vmem:[#allocation5 + $0x4a8] sm:$0xff]
    %v266 = vld [vmem:[#allocation5 + $0x4b0] sm:$0xff]
    %v267 = vld [vmem:[#allocation5 + $0x4b8] sm:$0xff]
    %v268 = vld [vmem:[#allocation5 + $0x4c0] sm:$0xff]
    %v269 = vld [vmem:[#allocation5 + $0x4c8] sm:$0xff]
    %v270 = vld [vmem:[#allocation5 + $0x4d0] sm:$0xff]
    %v271 = vld [vmem:[#allocation5 + $0x4d8] sm:$0xff]
    %v272 = vld [vmem:[#allocation5 + $0x4e0] sm:$0xff]
    %v273 = vld [vmem:[#allocation5 + $0x4e8] sm:$0xff]
    %v274 = vld [vmem:[#allocation5 + $0x4f0] sm:$0xff]
    %v275 = vld [vmem:[#allocation5 + $0x4f8] sm:$0xff]
    %v276 = vld [vmem:[#allocation5 + $0x500] sm:$0xff]
    %v277 = vld [vmem:[#allocation5 + $0x508] sm:$0xff]
    %v278 = vld [vmem:[#allocation5 + $0x510] sm:$0xff]
    %v279 = vld [vmem:[#allocation5 + $0x518] sm:$0xff]
    %v280 = vld [vmem:[#allocation5 + $0x520] sm:$0xff]
    %v281 = vld [vmem:[#allocation5 + $0x528] sm:$0xff]
    %v282 = vld [vmem:[#allocation5 + $0x530] sm:$0xff]
    %v283 = vld [vmem:[#allocation5 + $0x538] sm:$0xff]
    %v284 = vld [vmem:[#allocation5 + $0x540] sm:$0xff]
    %v285 = vld [vmem:[#allocation5 + $0x548] sm:$0xff]
    %v286 = vld [vmem:[#allocation5 + $0x550] sm:$0xff]
    %v287 = vld [vmem:[#allocation5 + $0x558] sm:$0xff]
    %v288 = vld [vmem:[#allocation5 + $0x560] sm:$0xff]
    %v289 = vld [vmem:[#allocation5 + $0x568] sm:$0xff]
    %v290 = vld [vmem:[#allocation5 + $0x570] sm:$0xff]
    %v291 = vld [vmem:[#allocation5 + $0x578] sm:$0xff]
    %v292 = vld [vmem:[#allocation5 + $0x580] sm:$0xff]
    %v293 = vld [vmem:[#allocation5 + $0x588] sm:$0xff]
    %v294 = vld [vmem:[#allocation5 + $0x590] sm:$0xff]
    %v295 = vld [vmem:[#allocation5 + $0x598] sm:$0xff]
    %v296 = vld [vmem:[#allocation5 + $0x5a0] sm:$0xff]
    %v297 = vld [vmem:[#allocation5 + $0x5a8] sm:$0xff]
    %v298 = vld [vmem:[#allocation5 + $0x5b0] sm:$0xff]
    %v299 = vld [vmem:[#allocation5 + $0x5b8] sm:$0xff]
    %v300 = vld [vmem:[#allocation5 + $0x5c0] sm:$0xff]
    %v301 = vld [vmem:[#allocation5 + $0x5c8] sm:$0xff]
    %v302 = vld [vmem:[#allocation5 + $0x5d0] sm:$0xff]
    %v303 = vld [vmem:[#allocation5 + $0x5d8] sm:$0xff]
    %v304 = vld [vmem:[#allocation5 + $0x5e0] sm:$0xff]
    %v305 = vld [vmem:[#allocation5 + $0x5e8] sm:$0xff]
    %v306 = vld [vmem:[#allocation5 + $0x5f0] sm:$0xff]
    %v307 = vld [vmem:[#allocation5 + $0x5f8] sm:$0xff]
    %v308 = vld [vmem:[#allocation5 + $0x600] sm:$0xff]
    %v309 = vld [vmem:[#allocation5 + $0x608] sm:$0xff]
    %v310 = vld [vmem:[#allocation5 + $0x610] sm:$0xff]
    %v311 = vld [vmem:[#allocation5 + $0x618] sm:$0xff]
    %v312 = vld [vmem:[#allocation5 + $0x620] sm:$0xff]
    %v313 = vld [vmem:[#allocation5 + $0x628] sm:$0xff]
    %v314 = vld [vmem:[#allocation5 + $0x630] sm:$0xff]
    %v315 = vld [vmem:[#allocation5 + $0x638] sm:$0xff]
    %v316 = vld [vmem:[#allocation5 + $0x640] sm:$0xff]
    %v317 = vld [vmem:[#allocation5 + $0x648] sm:$0xff]
    %v318 = vld [vmem:[#allocation5 + $0x650] sm:$0xff]
    %v319 = vld [vmem:[#allocation5 + $0x658] sm:$0xff]
    %v320 = vld [vmem:[#allocation5 + $0x660] sm:$0xff]
    %v321 = vld [vmem:[#allocation5 + $0x668] sm:$0xff]
    %v322 = vld [vmem:[#allocation5 + $0x670] sm:$0xff]
    %v323 = vld [vmem:[#allocation5 + $0x678] sm:$0xff]
    %v324 = vld [vmem:[#allocation5 + $0x680] sm:$0xff]
    %v325 = vld [vmem:[#allocation5 + $0x688] sm:$0xff]
    %v326 = vld [vmem:[#allocation5 + $0x690] sm:$0xff]
    %v327 = vld [vmem:[#allocation5 + $0x698] sm:$0xff]
    %v328 = vld [vmem:[#allocation5 + $0x6a0] sm:$0xff]
    %v329 = vld [vmem:[#allocation5 + $0x6a8] sm:$0xff]
    %v330 = vld [vmem:[#allocation5 + $0x6b0] sm:$0xff]
    %v331 = vld [vmem:[#allocation5 + $0x6b8] sm:$0xff]
    %v332 = vld [vmem:[#allocation5 + $0x6c0] sm:$0xff]
    %v333 = vld [vmem:[#allocation5 + $0x6c8] sm:$0xff]
    %v334 = vld [vmem:[#allocation5 + $0x6d0] sm:$0xff]
    %v335 = vld [vmem:[#allocation5 + $0x6d8] sm:$0xff]
    %v336 = vld [vmem:[#allocation5 + $0x6e0] sm:$0xff]
    %v337 = vld [vmem:[#allocation5 + $0x6e8] sm:$0xff]
    %v338 = vld [vmem:[#allocation5 + $0x6f0] sm:$0xff]
    %v339 = vld [vmem:[#allocation5 + $0x6f8] sm:$0xff]
    %v340 = vld [vmem:[#allocation5 + $0x700] sm:$0xff]
    %v341 = vld [vmem:[#allocation5 + $0x708] sm:$0xff]
    %v342 = vld [vmem:[#allocation5 + $0x710] sm:$0xff]
    %v343 = vld [vmem:[#allocation5 + $0x718] sm:$0xff]
    %v344 = vld [vmem:[#allocation5 + $0x720] sm:$0xff]
    %v345 = vld [vmem:[#allocation5 + $0x728] sm:$0xff]
    %v346 = vld [vmem:[#allocation5 + $0x730] sm:$0xff]
    %v347 = vld [vmem:[#allocation5 + $0x738] sm:$0xff]
    %v348 = vld [vmem:[#allocation5 + $0x740] sm:$0xff]
    %v349 = vld [vmem:[#allocation5 + $0x748] sm:$0xff]
    %v350 = vld [vmem:[#allocation5 + $0x750] sm:$0xff]
    %v351 = vld [vmem:[#allocation5 + $0x758] sm:$0xff]
    %v352 = vld [vmem:[#allocation5 + $0x760] sm:$0xff]
    %v353 = vld [vmem:[#allocation5 + $0x768] sm:$0xff]
    %v354 = vld [vmem:[#allocation5 + $0x770] sm:$0xff]
    %v355 = vld [vmem:[#allocation5 + $0x778] sm:$0xff]
    %v356 = vld [vmem:[#allocation5 + $0x780] sm:$0xff]
    %v357 = vld [vmem:[#allocation5 + $0x788] sm:$0xff]
    %v358 = vld [vmem:[#allocation5 + $0x790] sm:$0xff]
    %v359 = vld [vmem:[#allocation5 + $0x798] sm:$0xff]
    %v360 = vld [vmem:[#allocation5 + $0x7a0] sm:$0xff]
    %v361 = vld [vmem:[#allocation5 + $0x7a8] sm:$0xff]
    %v362 = vld [vmem:[#allocation5 + $0x7b0] sm:$0xff]
    %v363 = vld [vmem:[#allocation5 + $0x7b8] sm:$0xff]
    %v364 = vld [vmem:[#allocation5 + $0x7c0] sm:$0xff]
    %v365 = vld [vmem:[#allocation5 + $0x7c8] sm:$0xff]
    %v366 = vld [vmem:[#allocation5 + $0x7d0] sm:$0xff]
    %v367 = vld [vmem:[#allocation5 + $0x7d8] sm:$0xff]
    %v368 = vld [vmem:[#allocation5 + $0x7e0] sm:$0xff]
    %v369 = vld [vmem:[#allocation5 + $0x7e8] sm:$0xff]
    %v370 = vld [vmem:[#allocation5 + $0x7f0] sm:$0xff]
    %v371 = vld [vmem:[#allocation5 + $0x7f8] sm:$0xff]
    %v372 = vld [vmem:[#allocation5 + $0x800] sm:$0xff]
    %v373 = vld [vmem:[#allocation5 + $0x808] sm:$0xff]
    %v374 = vld [vmem:[#allocation5 + $0x810] sm:$0xff]
    %v375 = vld [vmem:[#allocation5 + $0x818] sm:$0xff]
    %v376 = vld [vmem:[#allocation5 + $0x820] sm:$0xff]
    %v377 = vld [vmem:[#allocation5 + $0x828] sm:$0xff]
    %v378 = vld [vmem:[#allocation5 + $0x830] sm:$0xff]
    %v379 = vld [vmem:[#allocation5 + $0x838] sm:$0xff]
    %v380 = vld [vmem:[#allocation5 + $0x840] sm:$0xff]
    %v381 = vld [vmem:[#allocation5 + $0x848] sm:$0xff]
    %v382 = vld [vmem:[#allocation5 + $0x850] sm:$0xff]
    %v383 = vld [vmem:[#allocation5 + $0x858] sm:$0xff]
    %v384 = vld [vmem:[#allocation5 + $0x860] sm:$0xff]
    %v385 = vld [vmem:[#allocation5 + $0x868] sm:$0xff]
    %v386 = vld [vmem:[#allocation5 + $0x870] sm:$0xff]
    %v387 = vld [vmem:[#allocation5 + $0x878] sm:$0xff]
    %v388 = vld [vmem:[#allocation5 + $0x880] sm:$0xff]
    %v389 = vld [vmem:[#allocation5 + $0x888] sm:$0xff]
    %v390 = vld [vmem:[#allocation5 + $0x890] sm:$0xff]
    %v391 = vld [vmem:[#allocation5 + $0x898] sm:$0xff]
    %v392 = vld [vmem:[#allocation5 + $0x8a0] sm:$0xff]
    %v393 = vld [vmem:[#allocation5 + $0x8a8] sm:$0xff]
    %v394 = vld [vmem:[#allocation5 + $0x8b0] sm:$0xff]
    %v395 = vld [vmem:[#allocation5 + $0x8b8] sm:$0xff]
    %v396 = vld [vmem:[#allocation5 + $0x8c0] sm:$0xff]
    %v397 = vld [vmem:[#allocation5 + $0x8c8] sm:$0xff]
    %v398 = vld [vmem:[#allocation5 + $0x8d0] sm:$0xff]
    %v399 = vld [vmem:[#allocation5 + $0x8d8] sm:$0xff]
    %v400 = vld [vmem:[#allocation5 + $0x8e0] sm:$0xff]
    %v401 = vld [vmem:[#allocation5 + $0x8e8] sm:$0xff]
    %v402 = vld [vmem:[#allocation5 + $0x8f0] sm:$0xff]
    %v403 = vld [vmem:[#allocation5 + $0x8f8] sm:$0xff]
    %v404 = vld [vmem:[#allocation5 + $0x900] sm:$0xff]
    %v405 = vld [vmem:[#allocation5 + $0x908] sm:$0xff]
    %v406 = vld [vmem:[#allocation5 + $0x910] sm:$0xff]
    %v407 = vld [vmem:[#allocation5 + $0x918] sm:$0xff]
    %v408 = vld [vmem:[#allocation5 + $0x920] sm:$0xff]
    %v409 = vld [vmem:[#allocation5 + $0x928] sm:$0xff]
    %v410 = vld [vmem:[#allocation5 + $0x930] sm:$0xff]
    %v411 = vld [vmem:[#allocation5 + $0x938] sm:$0xff]
    %v412 = vld [vmem:[#allocation5 + $0x940] sm:$0xff]
    %v413 = vld [vmem:[#allocation5 + $0x948] sm:$0xff]
    %v414 = vld [vmem:[#allocation5 + $0x950] sm:$0xff]
    %v415 = vld [vmem:[#allocation5 + $0x958] sm:$0xff]
    %v416 = vld [vmem:[#allocation5 + $0x960] sm:$0xff]
    %v417 = vld [vmem:[#allocation5 + $0x968] sm:$0xff]
    %v418 = vld [vmem:[#allocation5 + $0x970] sm:$0xff]
    %v419 = vld [vmem:[#allocation5 + $0x978] sm:$0xff]
    %v420 = vld [vmem:[#allocation5 + $0x980] sm:$0xff]
    %v421 = vld [vmem:[#allocation5 + $0x988] sm:$0xff]
    %v422 = vld [vmem:[#allocation5 + $0x990] sm:$0xff]
    %v423 = vld [vmem:[#allocation5 + $0x998] sm:$0xff]
    %v424 = vld [vmem:[#allocation5 + $0x9a0] sm:$0xff]
    %v425 = vld [vmem:[#allocation5 + $0x9a8] sm:$0xff]
    %v426 = vld [vmem:[#allocation5 + $0x9b0] sm:$0xff]
    %v427 = vld [vmem:[#allocation5 + $0x9b8] sm:$0xff]
    %v428 = vld [vmem:[#allocation5 + $0x9c0] sm:$0xff]
    %v429 = vld [vmem:[#allocation5 + $0x9c8] sm:$0xff]
    %v430 = vld [vmem:[#allocation5 + $0x9d0] sm:$0xff]
    %v431 = vld [vmem:[#allocation5 + $0x9d8] sm:$0xff]
    %v432 = vld [vmem:[#allocation5 + $0x9e0] sm:$0xff]
    %v433 = vld [vmem:[#allocation5 + $0x9e8] sm:$0xff]
    %v434 = vld [vmem:[#allocation5 + $0x9f0] sm:$0xff]
    %v435 = vld [vmem:[#allocation5 + $0x9f8] sm:$0xff]
    %v436 = vld [vmem:[#allocation5 + $0xa00] sm:$0xff]
    %v437 = vld [vmem:[#allocation5 + $0xa08] sm:$0xff]
    %v438 = vld [vmem:[#allocation5 + $0xa10] sm:$0xff]
    %v439 = vld [vmem:[#allocation5 + $0xa18] sm:$0xff]
    %v440 = vld [vmem:[#allocation5 + $0xa20] sm:$0xff]
    %v441 = vld [vmem:[#allocation5 + $0xa28] sm:$0xff]
    %v442 = vld [vmem:[#allocation5 + $0xa30] sm:$0xff]
    %v443 = vld [vmem:[#allocation5 + $0xa38] sm:$0xff]
    %v444 = vld [vmem:[#allocation5 + $0xa40] sm:$0xff]
    %v445 = vld [vmem:[#allocation5 + $0xa48] sm:$0xff]
    %v446 = vld [vmem:[#allocation5 + $0xa50] sm:$0xff]
    %v447 = vld [vmem:[#allocation5 + $0xa58] sm:$0xff]
    %v448 = vld [vmem:[#allocation5 + $0xa60] sm:$0xff]
    %v449 = vld [vmem:[#allocation5 + $0xa68] sm:$0xff]
    %v450 = vld [vmem:[#allocation5 + $0xa70] sm:$0xff]
    %v451 = vld [vmem:[#allocation5 + $0xa78] sm:$0xff]
    %v452 = vld [vmem:[#allocation5 + $0xa80] sm:$0xff]
    %v453 = vld [vmem:[#allocation5 + $0xa88] sm:$0xff]
    %v454 = vld [vmem:[#allocation5 + $0xa90] sm:$0xff]
    %v455 = vld [vmem:[#allocation5 + $0xa98] sm:$0xff]
    %v456 = vld [vmem:[#allocation5 + $0xaa0] sm:$0xff]
    %v457 = vld [vmem:[#allocation5 + $0xaa8] sm:$0xff]
    %v458 = vld [vmem:[#allocation5 + $0xab0] sm:$0xff]
    %v459 = vld [vmem:[#allocation5 + $0xab8] sm:$0xff]
    %v460 = vld [vmem:[#allocation5 + $0xac0] sm:$0xff]
    %v461 = vld [vmem:[#allocation5 + $0xac8] sm:$0xff]
    %v462 = vld [vmem:[#allocation5 + $0xad0] sm:$0xff]
    %v463 = vld [vmem:[#allocation5 + $0xad8] sm:$0xff]
    %v464 = vld [vmem:[#allocation5 + $0xae0] sm:$0xff]
    %v465 = vld [vmem:[#allocation5 + $0xae8] sm:$0xff]
    %v466 = vld [vmem:[#allocation5 + $0xaf0] sm:$0xff]
    %v467 = vld [vmem:[#allocation5 + $0xaf8] sm:$0xff]
    %v468 = vld [vmem:[#allocation5 + $0xb00] sm:$0xff]
    %v469 = vld [vmem:[#allocation5 + $0xb08] sm:$0xff]
    %v470 = vld [vmem:[#allocation5 + $0xb10] sm:$0xff]
    %v471 = vld [vmem:[#allocation5 + $0xb18] sm:$0xff]
    %v472 = vld [vmem:[#allocation5 + $0xb20] sm:$0xff]
    %v473 = vld [vmem:[#allocation5 + $0xb28] sm:$0xff]
    %v474 = vld [vmem:[#allocation5 + $0xb30] sm:$0xff]
    %v475 = vld [vmem:[#allocation5 + $0xb38] sm:$0xff]
    %v476 = vld [vmem:[#allocation5 + $0xb40] sm:$0xff]
    %v477 = vld [vmem:[#allocation5 + $0xb48] sm:$0xff]
    %v478 = vld [vmem:[#allocation5 + $0xb50] sm:$0xff]
    %v479 = vld [vmem:[#allocation5 + $0xb58] sm:$0xff]
    %v480 = vld [vmem:[#allocation5 + $0xb60] sm:$0xff]
    %v481 = vld [vmem:[#allocation5 + $0xb68] sm:$0xff]
    %v482 = vld [vmem:[#allocation5 + $0xb70] sm:$0xff]
    %v483 = vld [vmem:[#allocation5 + $0xb78] sm:$0xff]
    %v484 = vld [vmem:[#allocation5 + $0xb80] sm:$0xff]
    %v485 = vld [vmem:[#allocation5 + $0xb88] sm:$0xff]
    %v486 = vld [vmem:[#allocation5 + $0xb90] sm:$0xff]
    %v487 = vld [vmem:[#allocation5 + $0xb98] sm:$0xff]
    %v488 = vld [vmem:[#allocation5 + $0xba0] sm:$0xff]
    %v489 = vld [vmem:[#allocation5 + $0xba8] sm:$0xff]
    %v490 = vld [vmem:[#allocation5 + $0xbb0] sm:$0xff]
    %v491 = vld [vmem:[#allocation5 + $0xbb8] sm:$0xff]
    %v492 = vld [vmem:[#allocation5 + $0xbc0] sm:$0xff]
    %v493 = vld [vmem:[#allocation5 + $0xbc8] sm:$0xff]
    %v494 = vld [vmem:[#allocation5 + $0xbd0] sm:$0xff]
    %v495 = vld [vmem:[#allocation5 + $0xbd8] sm:$0xff]
    %v496 = vld [vmem:[#allocation5 + $0xbe0] sm:$0xff]
    %v497 = vld [vmem:[#allocation5 + $0xbe8] sm:$0xff]
    %v498 = vld [vmem:[#allocation5 + $0xbf0] sm:$0xff]
    %v499 = vld [vmem:[#allocation5 + $0xbf8] sm:$0xff]
    %v500 = vld [vmem:[#allocation7] sm:$0xff]
    %v502 = vlaneseq
    %v503 = vshrl.u32 %v502, 7
    %v504 = vsub.s32 0, %v503
    %v505 = vrot.slane %v500, %v504
    %v506 = vlaneseq
    %v507 = vshrl.u32 %v506, 7
    %v508 = vsub.s32 1, %v507
    %v509 = vrot.slane %v500, %v508
    %v510 = vlaneseq
    %v511 = vshrl.u32 %v510, 7
    %v512 = vsub.s32 2, %v511
    %v513 = vrot.slane %v500, %v512
    %v514 = vlaneseq
    %v515 = vshrl.u32 %v514, 7
    %v516 = vsub.s32 3, %v515
    %v517 = vrot.slane %v500, %v516
    %v518 = vlaneseq
    %v519 = vshrl.u32 %v518, 7
    %v520 = vsub.s32 4, %v519
    %v521 = vrot.slane %v500, %v520
    %v522 = vlaneseq
    %v523 = vshrl.u32 %v522, 7
    %v524 = vsub.s32 5, %v523
    %v525 = vrot.slane %v500, %v524
    %v526 = vlaneseq
    %v527 = vshrl.u32 %v526, 7
    %v528 = vsub.s32 6, %v527
    %v529 = vrot.slane %v500, %v528
    %v530 = vlaneseq
    %v531 = vshrl.u32 %v530, 7
    %v532 = vsub.s32 7, %v531
    %v533 = vrot.slane %v500, %v532
    %v543 = vcombine.high %v115, %v115
    %v545 = vunpack.c.l.s4 1966171168
    %v546 = vunpack.c.0.s8 %v545
    %v547 = vlaneseq
    %v548 = vshrl.u32 %v547, 7
    %v549 = vsub.s32 %v546, %v548
    %v550 = vrot.slane %v115, %v549
    %v552 = vunpack.c.l.s4 1966171168
    %v553 = vunpack.c.0.s8 %v552
    %v554 = vlaneseq
    %v555 = vshrl.u32 %v554, 7
    %v556 = vsub.s32 %v553, %v555
    %v557 = vrot.slane %v543, %v556
    %v558 = vcombine.high %v550, %v550
    %v559 = vcombine.high %v557, %v557
    %v561 = vunpack.c.l.s4 1966171168
    %v562 = vunpack.c.0.s8 %v561
    %v563 = vlaneseq
    %v564 = vshrl.u32 %v563, 7
    %v565 = vsub.s32 %v562, %v564
    %v566 = vrot.slane %v550, %v565
    %v568 = vunpack.c.l.s4 1966171168
    %v569 = vunpack.c.0.s8 %v568
    %v570 = vlaneseq
    %v571 = vshrl.u32 %v570, 7
    %v572 = vsub.s32 %v569, %v571
    %v573 = vrot.slane %v557, %v572
    %v575 = vunpack.c.l.s4 1966171168
    %v576 = vunpack.c.0.s8 %v575
    %v577 = vlaneseq
    %v578 = vshrl.u32 %v577, 7
    %v579 = vsub.s32 %v576, %v578
    %v580 = vrot.slane %v558, %v579
    %v582 = vunpack.c.l.s4 1966171168
    %v583 = vunpack.c.0.s8 %v582
    %v584 = vlaneseq
    %v585 = vshrl.u32 %v584, 7
    %v586 = vsub.s32 %v583, %v585
    %v587 = vrot.slane %v559, %v586
    %v588 = vcombine.high %v566, %v566
    %v589 = vcombine.high %v580, %v580
    %v980 = vunpack.c.l.b16 %v116
    %v981 = vunpack.c.h.b16 %v116
    %v982 = vunpack.c.l.b16 %v117
    %v983 = vunpack.c.h.b16 %v117
    %v984 = vunpack.c.l.b16 %v118
    %v985 = vunpack.c.h.b16 %v118
    %v986 = vunpack.c.l.b16 %v119
    %v987 = vunpack.c.h.b16 %v119
    %v988 = vunpack.c.l.b16 %v120
    %v989 = vunpack.c.h.b16 %v120
    %v990 = vunpack.c.l.b16 %v121
    %v991 = vunpack.c.h.b16 %v121
    %v992 = vunpack.c.l.b16 %v122
    %v993 = vunpack.c.h.b16 %v122
    %v994 = vunpack.c.l.b16 %v123
    %v995 = vunpack.c.h.b16 %v123
    %v996 = vunpack.c.l.b16 %v124
    %v997 = vunpack.c.h.b16 %v124
    %v998 = vunpack.c.l.b16 %v125
    %v999 = vunpack.c.h.b16 %v125
    %v1000 = vunpack.c.l.b16 %v126
    %v1001 = vunpack.c.h.b16 %v126
    %v1002 = vunpack.c.l.b16 %v127
    %v1003 = vunpack.c.h.b16 %v127
    %v1004 = vunpack.c.l.b16 %v128
    %v1005 = vunpack.c.h.b16 %v128
    %v1006 = vunpack.c.l.b16 %v129
    %v1007 = vunpack.c.h.b16 %v129
    %v1008 = vunpack.c.l.b16 %v130
    %v1009 = vunpack.c.h.b16 %v130
    %v1010 = vunpack.c.l.b16 %v131
    %v1011 = vunpack.c.h.b16 %v131
    %v1012 = vunpack.c.l.b16 %v132
    %v1013 = vunpack.c.h.b16 %v132
    %v1014 = vunpack.c.l.b16 %v133
    %v1015 = vunpack.c.h.b16 %v133
    %v1016 = vunpack.c.l.b16 %v134
    %v1017 = vunpack.c.h.b16 %v134
    %v1018 = vunpack.c.l.b16 %v135
    %v1019 = vunpack.c.h.b16 %v135
    %v1020 = vunpack.c.l.b16 %v136
    %v1021 = vunpack.c.h.b16 %v136
    %v1022 = vunpack.c.l.b16 %v137
    %v1023 = vunpack.c.h.b16 %v137
    %v1024 = vunpack.c.l.b16 %v138
    %v1025 = vunpack.c.h.b16 %v138
    %v1026 = vunpack.c.l.b16 %v139
    %v1027 = vunpack.c.h.b16 %v139
    %v1028 = vunpack.c.l.b16 %v140
    %v1029 = vunpack.c.h.b16 %v140
    %v1030 = vunpack.c.l.b16 %v141
    %v1031 = vunpack.c.h.b16 %v141
    %v1032 = vunpack.c.l.b16 %v142
    %v1033 = vunpack.c.h.b16 %v142
    %v1034 = vunpack.c.l.b16 %v143
    %v1035 = vunpack.c.h.b16 %v143
    %v1036 = vunpack.c.l.b16 %v144
    %v1037 = vunpack.c.h.b16 %v144
    %v1038 = vunpack.c.l.b16 %v145
    %v1039 = vunpack.c.h.b16 %v145
    %v1040 = vunpack.c.l.b16 %v146
    %v1041 = vunpack.c.h.b16 %v146
    %v1042 = vunpack.c.l.b16 %v147
    %v1043 = vunpack.c.h.b16 %v147
    %v1044 = vunpack.c.l.b16 %v148
    %v1045 = vunpack.c.h.b16 %v148
    %v1046 = vunpack.c.l.b16 %v149
    %v1047 = vunpack.c.h.b16 %v149
    %v1048 = vunpack.c.l.b16 %v150
    %v1049 = vunpack.c.h.b16 %v150
    %v1050 = vunpack.c.l.b16 %v151
    %v1051 = vunpack.c.h.b16 %v151
    %v1052 = vunpack.c.l.b16 %v152
    %v1053 = vunpack.c.h.b16 %v152
    %v1054 = vunpack.c.l.b16 %v153
    %v1055 = vunpack.c.h.b16 %v153
    %v1056 = vunpack.c.l.b16 %v154
    %v1057 = vunpack.c.h.b16 %v154
    %v1058 = vunpack.c.l.b16 %v155
    %v1059 = vunpack.c.h.b16 %v155
    %v1060 = vunpack.c.l.b16 %v156
    %v1061 = vunpack.c.h.b16 %v156
    %v1062 = vunpack.c.l.b16 %v157
    %v1063 = vunpack.c.h.b16 %v157
    %v1064 = vunpack.c.l.b16 %v158
    %v1065 = vunpack.c.h.b16 %v158
    %v1066 = vunpack.c.l.b16 %v159
    %v1067 = vunpack.c.h.b16 %v159
    %v1068 = vunpack.c.l.b16 %v160
    %v1069 = vunpack.c.h.b16 %v160
    %v1070 = vunpack.c.l.b16 %v161
    %v1071 = vunpack.c.h.b16 %v161
    %v1072 = vunpack.c.l.b16 %v162
    %v1073 = vunpack.c.h.b16 %v162
    %v1074 = vunpack.c.l.b16 %v163
    %v1075 = vunpack.c.h.b16 %v163
    %v1076 = vunpack.c.l.b16 %v164
    %v1077 = vunpack.c.h.b16 %v164
    %v1078 = vunpack.c.l.b16 %v165
    %v1079 = vunpack.c.h.b16 %v165
    %v1080 = vunpack.c.l.b16 %v166
    %v1081 = vunpack.c.h.b16 %v166
    %v1082 = vunpack.c.l.b16 %v167
    %v1083 = vunpack.c.h.b16 %v167
    %v1084 = vunpack.c.l.b16 %v168
    %v1085 = vunpack.c.h.b16 %v168
    %v1086 = vunpack.c.l.b16 %v169
    %v1087 = vunpack.c.h.b16 %v169
    %v1088 = vunpack.c.l.b16 %v170
    %v1089 = vunpack.c.h.b16 %v170
    %v1090 = vunpack.c.l.b16 %v171
    %v1091 = vunpack.c.h.b16 %v171
    %v1092 = vunpack.c.l.b16 %v172
    %v1093 = vunpack.c.h.b16 %v172
    %v1094 = vunpack.c.l.b16 %v173
    %v1095 = vunpack.c.h.b16 %v173
    %v1096 = vunpack.c.l.b16 %v174
    %v1097 = vunpack.c.h.b16 %v174
    %v1098 = vunpack.c.l.b16 %v175
    %v1099 = vunpack.c.h.b16 %v175
    %v1100 = vunpack.c.l.b16 %v176
    %v1101 = vunpack.c.h.b16 %v176
    %v1102 = vunpack.c.l.b16 %v177
    %v1103 = vunpack.c.h.b16 %v177
    %v1104 = vunpack.c.l.b16 %v178
    %v1105 = vunpack.c.h.b16 %v178
    %v1106 = vunpack.c.l.b16 %v179
    %v1107 = vunpack.c.h.b16 %v179
    %v1108 = vunpack.c.l.b16 %v180
    %v1109 = vunpack.c.h.b16 %v180
    %v1110 = vunpack.c.l.b16 %v181
    %v1111 = vunpack.c.h.b16 %v181
    %v1112 = vunpack.c.l.b16 %v182
    %v1113 = vunpack.c.h.b16 %v182
    %v1114 = vunpack.c.l.b16 %v183
    %v1115 = vunpack.c.h.b16 %v183
    %v1116 = vunpack.c.l.b16 %v184
    %v1117 = vunpack.c.h.b16 %v184
    %v1118 = vunpack.c.l.b16 %v185
    %v1119 = vunpack.c.h.b16 %v185
    %v1120 = vunpack.c.l.b16 %v186
    %v1121 = vunpack.c.h.b16 %v186
    %v1122 = vunpack.c.l.b16 %v187
    %v1123 = vunpack.c.h.b16 %v187
    %v1124 = vunpack.c.l.b16 %v188
    %v1125 = vunpack.c.h.b16 %v188
    %v1126 = vunpack.c.l.b16 %v189
    %v1127 = vunpack.c.h.b16 %v189
    %v1128 = vunpack.c.l.b16 %v190
    %v1129 = vunpack.c.h.b16 %v190
    %v1130 = vunpack.c.l.b16 %v191
    %v1131 = vunpack.c.h.b16 %v191
    %v1132 = vunpack.c.l.b16 %v192
    %v1133 = vunpack.c.h.b16 %v192
    %v1134 = vunpack.c.l.b16 %v193
    %v1135 = vunpack.c.h.b16 %v193
    %v1136 = vunpack.c.l.b16 %v194
    %v1137 = vunpack.c.h.b16 %v194
    %v1138 = vunpack.c.l.b16 %v195
    %v1139 = vunpack.c.h.b16 %v195
    %v1140 = vunpack.c.l.b16 %v196
    %v1141 = vunpack.c.h.b16 %v196
    %v1142 = vunpack.c.l.b16 %v197
    %v1143 = vunpack.c.h.b16 %v197
    %v1144 = vunpack.c.l.b16 %v198
    %v1145 = vunpack.c.h.b16 %v198
    %v1146 = vunpack.c.l.b16 %v199
    %v1147 = vunpack.c.h.b16 %v199
    %v1148 = vunpack.c.l.b16 %v200
    %v1149 = vunpack.c.h.b16 %v200
    %v1150 = vunpack.c.l.b16 %v201
    %v1151 = vunpack.c.h.b16 %v201
    %v1152 = vunpack.c.l.b16 %v202
    %v1153 = vunpack.c.h.b16 %v202
    %v1154 = vunpack.c.l.b16 %v203
    %v1155 = vunpack.c.h.b16 %v203
    %v1156 = vunpack.c.l.b16 %v204
    %v1157 = vunpack.c.h.b16 %v204
    %v1158 = vunpack.c.l.b16 %v205
    %v1159 = vunpack.c.h.b16 %v205
    %v1160 = vunpack.c.l.b16 %v206
    %v1161 = vunpack.c.h.b16 %v206
    %v1162 = vunpack.c.l.b16 %v207
    %v1163 = vunpack.c.h.b16 %v207
    %v1164 = vunpack.c.l.b16 %v208
    %v1165 = vunpack.c.h.b16 %v208
    %v1166 = vunpack.c.l.b16 %v209
    %v1167 = vunpack.c.h.b16 %v209
    %v1168 = vunpack.c.l.b16 %v210
    %v1169 = vunpack.c.h.b16 %v210
    %v1170 = vunpack.c.l.b16 %v211
    %v1171 = vunpack.c.h.b16 %v211
    %v1172 = vunpack.c.l.b16 %v212
    %v1173 = vunpack.c.h.b16 %v212
    %v1174 = vunpack.c.l.b16 %v213
    %v1175 = vunpack.c.h.b16 %v213
    %v1176 = vunpack.c.l.b16 %v214
    %v1177 = vunpack.c.h.b16 %v214
    %v1178 = vunpack.c.l.b16 %v215
    %v1179 = vunpack.c.h.b16 %v215
    %v1180 = vunpack.c.l.b16 %v216
    %v1181 = vunpack.c.h.b16 %v216
    %v1182 = vunpack.c.l.b16 %v217
    %v1183 = vunpack.c.h.b16 %v217
    %v1184 = vunpack.c.l.b16 %v218
    %v1185 = vunpack.c.h.b16 %v218
    %v1186 = vunpack.c.l.b16 %v219
    %v1187 = vunpack.c.h.b16 %v219
    %v1188 = vunpack.c.l.b16 %v220
    %v1189 = vunpack.c.h.b16 %v220
    %v1190 = vunpack.c.l.b16 %v221
    %v1191 = vunpack.c.h.b16 %v221
    %v1192 = vunpack.c.l.b16 %v222
    %v1193 = vunpack.c.h.b16 %v222
    %v1194 = vunpack.c.l.b16 %v223
    %v1195 = vunpack.c.h.b16 %v223
    %v1196 = vunpack.c.l.b16 %v224
    %v1197 = vunpack.c.h.b16 %v224
    %v1198 = vunpack.c.l.b16 %v225
    %v1199 = vunpack.c.h.b16 %v225
    %v1200 = vunpack.c.l.b16 %v226
    %v1201 = vunpack.c.h.b16 %v226
    %v1202 = vunpack.c.l.b16 %v227
    %v1203 = vunpack.c.h.b16 %v227
    %v1204 = vunpack.c.l.b16 %v228
    %v1205 = vunpack.c.h.b16 %v228
    %v1206 = vunpack.c.l.b16 %v229
    %v1207 = vunpack.c.h.b16 %v229
    %v1208 = vunpack.c.l.b16 %v230
    %v1209 = vunpack.c.h.b16 %v230
    %v1210 = vunpack.c.l.b16 %v231
    %v1211 = vunpack.c.h.b16 %v231
    %v1212 = vunpack.c.l.b16 %v232
    %v1213 = vunpack.c.h.b16 %v232
    %v1214 = vunpack.c.l.b16 %v233
    %v1215 = vunpack.c.h.b16 %v233
    %v1216 = vunpack.c.l.b16 %v234
    %v1217 = vunpack.c.h.b16 %v234
    %v1218 = vunpack.c.l.b16 %v235
    %v1219 = vunpack.c.h.b16 %v235
    %v1220 = vunpack.c.l.b16 %v236
    %v1221 = vunpack.c.h.b16 %v236
    %v1222 = vunpack.c.l.b16 %v237
    %v1223 = vunpack.c.h.b16 %v237
    %v1224 = vunpack.c.l.b16 %v238
    %v1225 = vunpack.c.h.b16 %v238
    %v1226 = vunpack.c.l.b16 %v239
    %v1227 = vunpack.c.h.b16 %v239
    %v1228 = vunpack.c.l.b16 %v240
    %v1229 = vunpack.c.h.b16 %v240
    %v1230 = vunpack.c.l.b16 %v241
    %v1231 = vunpack.c.h.b16 %v241
    %v1232 = vunpack.c.l.b16 %v242
    %v1233 = vunpack.c.h.b16 %v242
    %v1234 = vunpack.c.l.b16 %v243
    %v1235 = vunpack.c.h.b16 %v243
    %v1236 = vunpack.c.l.b16 %v244
    %v1237 = vunpack.c.h.b16 %v244
    %v1238 = vunpack.c.l.b16 %v245
    %v1239 = vunpack.c.h.b16 %v245
    %v1240 = vunpack.c.l.b16 %v246
    %v1241 = vunpack.c.h.b16 %v246
    %v1242 = vunpack.c.l.b16 %v247
    %v1243 = vunpack.c.h.b16 %v247
    %v1244 = vunpack.c.l.b16 %v248
    %v1245 = vunpack.c.h.b16 %v248
    %v1246 = vunpack.c.l.b16 %v249
    %v1247 = vunpack.c.h.b16 %v249
    %v1248 = vunpack.c.l.b16 %v250
    %v1249 = vunpack.c.h.b16 %v250
    %v1250 = vunpack.c.l.b16 %v251
    %v1251 = vunpack.c.h.b16 %v251
    %v1252 = vunpack.c.l.b16 %v252
    %v1253 = vunpack.c.h.b16 %v252
    %v1254 = vunpack.c.l.b16 %v253
    %v1255 = vunpack.c.h.b16 %v253
    %v1256 = vunpack.c.l.b16 %v254
    %v1257 = vunpack.c.h.b16 %v254
    %v1258 = vunpack.c.l.b16 %v255
    %v1259 = vunpack.c.h.b16 %v255
    %v1260 = vunpack.c.l.b16 %v256
    %v1261 = vunpack.c.h.b16 %v256
    %v1262 = vunpack.c.l.b16 %v257
    %v1263 = vunpack.c.h.b16 %v257
    %v1264 = vunpack.c.l.b16 %v258
    %v1265 = vunpack.c.h.b16 %v258
    %v1266 = vunpack.c.l.b16 %v259
    %v1267 = vunpack.c.h.b16 %v259
    %v1268 = vunpack.c.l.b16 %v260
    %v1269 = vunpack.c.h.b16 %v260
    %v1270 = vunpack.c.l.b16 %v261
    %v1271 = vunpack.c.h.b16 %v261
    %v1272 = vunpack.c.l.b16 %v262
    %v1273 = vunpack.c.h.b16 %v262
    %v1274 = vunpack.c.l.b16 %v263
    %v1275 = vunpack.c.h.b16 %v263
    %v1276 = vunpack.c.l.b16 %v264
    %v1277 = vunpack.c.h.b16 %v264
    %v1278 = vunpack.c.l.b16 %v265
    %v1279 = vunpack.c.h.b16 %v265
    %v1280 = vunpack.c.l.b16 %v266
    %v1281 = vunpack.c.h.b16 %v266
    %v1282 = vunpack.c.l.b16 %v267
    %v1283 = vunpack.c.h.b16 %v267
    %v1284 = vunpack.c.l.b16 %v268
    %v1285 = vunpack.c.h.b16 %v268
    %v1286 = vunpack.c.l.b16 %v269
    %v1287 = vunpack.c.h.b16 %v269
    %v1288 = vunpack.c.l.b16 %v270
    %v1289 = vunpack.c.h.b16 %v270
    %v1290 = vunpack.c.l.b16 %v271
    %v1291 = vunpack.c.h.b16 %v271
    %v1292 = vunpack.c.l.b16 %v272
    %v1293 = vunpack.c.h.b16 %v272
    %v1294 = vunpack.c.l.b16 %v273
    %v1295 = vunpack.c.h.b16 %v273
    %v1296 = vunpack.c.l.b16 %v274
    %v1297 = vunpack.c.h.b16 %v274
    %v1298 = vunpack.c.l.b16 %v275
    %v1299 = vunpack.c.h.b16 %v275
    %v1300 = vunpack.c.l.b16 %v276
    %v1301 = vunpack.c.h.b16 %v276
    %v1302 = vunpack.c.l.b16 %v277
    %v1303 = vunpack.c.h.b16 %v277
    %v1304 = vunpack.c.l.b16 %v278
    %v1305 = vunpack.c.h.b16 %v278
    %v1306 = vunpack.c.l.b16 %v279
    %v1307 = vunpack.c.h.b16 %v279
    %v1308 = vunpack.c.l.b16 %v280
    %v1309 = vunpack.c.h.b16 %v280
    %v1310 = vunpack.c.l.b16 %v281
    %v1311 = vunpack.c.h.b16 %v281
    %v1312 = vunpack.c.l.b16 %v282
    %v1313 = vunpack.c.h.b16 %v282
    %v1314 = vunpack.c.l.b16 %v283
    %v1315 = vunpack.c.h.b16 %v283
    %v1316 = vunpack.c.l.b16 %v284
    %v1317 = vunpack.c.h.b16 %v284
    %v1318 = vunpack.c.l.b16 %v285
    %v1319 = vunpack.c.h.b16 %v285
    %v1320 = vunpack.c.l.b16 %v286
    %v1321 = vunpack.c.h.b16 %v286
    %v1322 = vunpack.c.l.b16 %v287
    %v1323 = vunpack.c.h.b16 %v287
    %v1324 = vunpack.c.l.b16 %v288
    %v1325 = vunpack.c.h.b16 %v288
    %v1326 = vunpack.c.l.b16 %v289
    %v1327 = vunpack.c.h.b16 %v289
    %v1328 = vunpack.c.l.b16 %v290
    %v1329 = vunpack.c.h.b16 %v290
    %v1330 = vunpack.c.l.b16 %v291
    %v1331 = vunpack.c.h.b16 %v291
    %v1332 = vunpack.c.l.b16 %v292
    %v1333 = vunpack.c.h.b16 %v292
    %v1334 = vunpack.c.l.b16 %v293
    %v1335 = vunpack.c.h.b16 %v293
    %v1336 = vunpack.c.l.b16 %v294
    %v1337 = vunpack.c.h.b16 %v294
    %v1338 = vunpack.c.l.b16 %v295
    %v1339 = vunpack.c.h.b16 %v295
    %v1340 = vunpack.c.l.b16 %v296
    %v1341 = vunpack.c.h.b16 %v296
    %v1342 = vunpack.c.l.b16 %v297
    %v1343 = vunpack.c.h.b16 %v297
    %v1344 = vunpack.c.l.b16 %v298
    %v1345 = vunpack.c.h.b16 %v298
    %v1346 = vunpack.c.l.b16 %v299
    %v1347 = vunpack.c.h.b16 %v299
    %v1348 = vunpack.c.l.b16 %v300
    %v1349 = vunpack.c.h.b16 %v300
    %v1350 = vunpack.c.l.b16 %v301
    %v1351 = vunpack.c.h.b16 %v301
    %v1352 = vunpack.c.l.b16 %v302
    %v1353 = vunpack.c.h.b16 %v302
    %v1354 = vunpack.c.l.b16 %v303
    %v1355 = vunpack.c.h.b16 %v303
    %v1356 = vunpack.c.l.b16 %v304
    %v1357 = vunpack.c.h.b16 %v304
    %v1358 = vunpack.c.l.b16 %v305
    %v1359 = vunpack.c.h.b16 %v305
    %v1360 = vunpack.c.l.b16 %v306
    %v1361 = vunpack.c.h.b16 %v306
    %v1362 = vunpack.c.l.b16 %v307
    %v1363 = vunpack.c.h.b16 %v307
    %v1364 = vunpack.c.l.b16 %v308
    %v1365 = vunpack.c.h.b16 %v308
    %v1366 = vunpack.c.l.b16 %v309
    %v1367 = vunpack.c.h.b16 %v309
    %v1368 = vunpack.c.l.b16 %v310
    %v1369 = vunpack.c.h.b16 %v310
    %v1370 = vunpack.c.l.b16 %v311
    %v1371 = vunpack.c.h.b16 %v311
    %v1372 = vunpack.c.l.b16 %v312
    %v1373 = vunpack.c.h.b16 %v312
    %v1374 = vunpack.c.l.b16 %v313
    %v1375 = vunpack.c.h.b16 %v313
    %v1376 = vunpack.c.l.b16 %v314
    %v1377 = vunpack.c.h.b16 %v314
    %v1378 = vunpack.c.l.b16 %v315
    %v1379 = vunpack.c.h.b16 %v315
    %v1380 = vunpack.c.l.b16 %v316
    %v1381 = vunpack.c.h.b16 %v316
    %v1382 = vunpack.c.l.b16 %v317
    %v1383 = vunpack.c.h.b16 %v317
    %v1384 = vunpack.c.l.b16 %v318
    %v1385 = vunpack.c.h.b16 %v318
    %v1386 = vunpack.c.l.b16 %v319
    %v1387 = vunpack.c.h.b16 %v319
    %v1388 = vunpack.c.l.b16 %v320
    %v1389 = vunpack.c.h.b16 %v320
    %v1390 = vunpack.c.l.b16 %v321
    %v1391 = vunpack.c.h.b16 %v321
    %v1392 = vunpack.c.l.b16 %v322
    %v1393 = vunpack.c.h.b16 %v322
    %v1394 = vunpack.c.l.b16 %v323
    %v1395 = vunpack.c.h.b16 %v323
    %v1396 = vunpack.c.l.b16 %v324
    %v1397 = vunpack.c.h.b16 %v324
    %v1398 = vunpack.c.l.b16 %v325
    %v1399 = vunpack.c.h.b16 %v325
    %v1400 = vunpack.c.l.b16 %v326
    %v1401 = vunpack.c.h.b16 %v326
    %v1402 = vunpack.c.l.b16 %v327
    %v1403 = vunpack.c.h.b16 %v327
    %v1404 = vunpack.c.l.b16 %v328
    %v1405 = vunpack.c.h.b16 %v328
    %v1406 = vunpack.c.l.b16 %v329
    %v1407 = vunpack.c.h.b16 %v329
    %v1408 = vunpack.c.l.b16 %v330
    %v1409 = vunpack.c.h.b16 %v330
    %v1410 = vunpack.c.l.b16 %v331
    %v1411 = vunpack.c.h.b16 %v331
    %v1412 = vunpack.c.l.b16 %v332
    %v1413 = vunpack.c.h.b16 %v332
    %v1414 = vunpack.c.l.b16 %v333
    %v1415 = vunpack.c.h.b16 %v333
    %v1416 = vunpack.c.l.b16 %v334
    %v1417 = vunpack.c.h.b16 %v334
    %v1418 = vunpack.c.l.b16 %v335
    %v1419 = vunpack.c.h.b16 %v335
    %v1420 = vunpack.c.l.b16 %v336
    %v1421 = vunpack.c.h.b16 %v336
    %v1422 = vunpack.c.l.b16 %v337
    %v1423 = vunpack.c.h.b16 %v337
    %v1424 = vunpack.c.l.b16 %v338
    %v1425 = vunpack.c.h.b16 %v338
    %v1426 = vunpack.c.l.b16 %v339
    %v1427 = vunpack.c.h.b16 %v339
    %v1428 = vunpack.c.l.b16 %v340
    %v1429 = vunpack.c.h.b16 %v340
    %v1430 = vunpack.c.l.b16 %v341
    %v1431 = vunpack.c.h.b16 %v341
    %v1432 = vunpack.c.l.b16 %v342
    %v1433 = vunpack.c.h.b16 %v342
    %v1434 = vunpack.c.l.b16 %v343
    %v1435 = vunpack.c.h.b16 %v343
    %v1436 = vunpack.c.l.b16 %v344
    %v1437 = vunpack.c.h.b16 %v344
    %v1438 = vunpack.c.l.b16 %v345
    %v1439 = vunpack.c.h.b16 %v345
    %v1440 = vunpack.c.l.b16 %v346
    %v1441 = vunpack.c.h.b16 %v346
    %v1442 = vunpack.c.l.b16 %v347
    %v1443 = vunpack.c.h.b16 %v347
    %v1444 = vunpack.c.l.b16 %v348
    %v1445 = vunpack.c.h.b16 %v348
    %v1446 = vunpack.c.l.b16 %v349
    %v1447 = vunpack.c.h.b16 %v349
    %v1448 = vunpack.c.l.b16 %v350
    %v1449 = vunpack.c.h.b16 %v350
    %v1450 = vunpack.c.l.b16 %v351
    %v1451 = vunpack.c.h.b16 %v351
    %v1452 = vunpack.c.l.b16 %v352
    %v1453 = vunpack.c.h.b16 %v352
    %v1454 = vunpack.c.l.b16 %v353
    %v1455 = vunpack.c.h.b16 %v353
    %v1456 = vunpack.c.l.b16 %v354
    %v1457 = vunpack.c.h.b16 %v354
    %v1458 = vunpack.c.l.b16 %v355
    %v1459 = vunpack.c.h.b16 %v355
    %v1460 = vunpack.c.l.b16 %v356
    %v1461 = vunpack.c.h.b16 %v356
    %v1462 = vunpack.c.l.b16 %v357
    %v1463 = vunpack.c.h.b16 %v357
    %v1464 = vunpack.c.l.b16 %v358
    %v1465 = vunpack.c.h.b16 %v358
    %v1466 = vunpack.c.l.b16 %v359
    %v1467 = vunpack.c.h.b16 %v359
    %v1468 = vunpack.c.l.b16 %v360
    %v1469 = vunpack.c.h.b16 %v360
    %v1470 = vunpack.c.l.b16 %v361
    %v1471 = vunpack.c.h.b16 %v361
    %v1472 = vunpack.c.l.b16 %v362
    %v1473 = vunpack.c.h.b16 %v362
    %v1474 = vunpack.c.l.b16 %v363
    %v1475 = vunpack.c.h.b16 %v363
    %v1476 = vunpack.c.l.b16 %v364
    %v1477 = vunpack.c.h.b16 %v364
    %v1478 = vunpack.c.l.b16 %v365
    %v1479 = vunpack.c.h.b16 %v365
    %v1480 = vunpack.c.l.b16 %v366
    %v1481 = vunpack.c.h.b16 %v366
    %v1482 = vunpack.c.l.b16 %v367
    %v1483 = vunpack.c.h.b16 %v367
    %v1484 = vunpack.c.l.b16 %v368
    %v1485 = vunpack.c.h.b16 %v368
    %v1486 = vunpack.c.l.b16 %v369
    %v1487 = vunpack.c.h.b16 %v369
    %v1488 = vunpack.c.l.b16 %v370
    %v1489 = vunpack.c.h.b16 %v370
    %v1490 = vunpack.c.l.b16 %v371
    %v1491 = vunpack.c.h.b16 %v371
    %v1492 = vunpack.c.l.b16 %v372
    %v1493 = vunpack.c.h.b16 %v372
    %v1494 = vunpack.c.l.b16 %v373
    %v1495 = vunpack.c.h.b16 %v373
    %v1496 = vunpack.c.l.b16 %v374
    %v1497 = vunpack.c.h.b16 %v374
    %v1498 = vunpack.c.l.b16 %v375
    %v1499 = vunpack.c.h.b16 %v375
    %v1500 = vunpack.c.l.b16 %v376
    %v1501 = vunpack.c.h.b16 %v376
    %v1502 = vunpack.c.l.b16 %v377
    %v1503 = vunpack.c.h.b16 %v377
    %v1504 = vunpack.c.l.b16 %v378
    %v1505 = vunpack.c.h.b16 %v378
    %v1506 = vunpack.c.l.b16 %v379
    %v1507 = vunpack.c.h.b16 %v379
    %v1508 = vunpack.c.l.b16 %v380
    %v1509 = vunpack.c.h.b16 %v380
    %v1510 = vunpack.c.l.b16 %v381
    %v1511 = vunpack.c.h.b16 %v381
    %v1512 = vunpack.c.l.b16 %v382
    %v1513 = vunpack.c.h.b16 %v382
    %v1514 = vunpack.c.l.b16 %v383
    %v1515 = vunpack.c.h.b16 %v383
    %v1516 = vunpack.c.l.b16 %v384
    %v1517 = vunpack.c.h.b16 %v384
    %v1518 = vunpack.c.l.b16 %v385
    %v1519 = vunpack.c.h.b16 %v385
    %v1520 = vunpack.c.l.b16 %v386
    %v1521 = vunpack.c.h.b16 %v386
    %v1522 = vunpack.c.l.b16 %v387
    %v1523 = vunpack.c.h.b16 %v387
    %v1524 = vunpack.c.l.b16 %v388
    %v1525 = vunpack.c.h.b16 %v388
    %v1526 = vunpack.c.l.b16 %v389
    %v1527 = vunpack.c.h.b16 %v389
    %v1528 = vunpack.c.l.b16 %v390
    %v1529 = vunpack.c.h.b16 %v390
    %v1530 = vunpack.c.l.b16 %v391
    %v1531 = vunpack.c.h.b16 %v391
    %v1532 = vunpack.c.l.b16 %v392
    %v1533 = vunpack.c.h.b16 %v392
    %v1534 = vunpack.c.l.b16 %v393
    %v1535 = vunpack.c.h.b16 %v393
    %v1536 = vunpack.c.l.b16 %v394
    %v1537 = vunpack.c.h.b16 %v394
    %v1538 = vunpack.c.l.b16 %v395
    %v1539 = vunpack.c.h.b16 %v395
    %v1540 = vunpack.c.l.b16 %v396
    %v1541 = vunpack.c.h.b16 %v396
    %v1542 = vunpack.c.l.b16 %v397
    %v1543 = vunpack.c.h.b16 %v397
    %v1544 = vunpack.c.l.b16 %v398
    %v1545 = vunpack.c.h.b16 %v398
    %v1546 = vunpack.c.l.b16 %v399
    %v1547 = vunpack.c.h.b16 %v399
    %v1548 = vunpack.c.l.b16 %v400
    %v1549 = vunpack.c.h.b16 %v400
    %v1550 = vunpack.c.l.b16 %v401
    %v1551 = vunpack.c.h.b16 %v401
    %v1552 = vunpack.c.l.b16 %v402
    %v1553 = vunpack.c.h.b16 %v402
    %v1554 = vunpack.c.l.b16 %v403
    %v1555 = vunpack.c.h.b16 %v403
    %v1556 = vunpack.c.l.b16 %v404
    %v1557 = vunpack.c.h.b16 %v404
    %v1558 = vunpack.c.l.b16 %v405
    %v1559 = vunpack.c.h.b16 %v405
    %v1560 = vunpack.c.l.b16 %v406
    %v1561 = vunpack.c.h.b16 %v406
    %v1562 = vunpack.c.l.b16 %v407
    %v1563 = vunpack.c.h.b16 %v407
    %v1564 = vunpack.c.l.b16 %v408
    %v1565 = vunpack.c.h.b16 %v408
    %v1566 = vunpack.c.l.b16 %v409
    %v1567 = vunpack.c.h.b16 %v409
    %v1568 = vunpack.c.l.b16 %v410
    %v1569 = vunpack.c.h.b16 %v410
    %v1570 = vunpack.c.l.b16 %v411
    %v1571 = vunpack.c.h.b16 %v411
    %v1572 = vunpack.c.l.b16 %v412
    %v1573 = vunpack.c.h.b16 %v412
    %v1574 = vunpack.c.l.b16 %v413
    %v1575 = vunpack.c.h.b16 %v413
    %v1576 = vunpack.c.l.b16 %v414
    %v1577 = vunpack.c.h.b16 %v414
    %v1578 = vunpack.c.l.b16 %v415
    %v1579 = vunpack.c.h.b16 %v415
    %v1580 = vunpack.c.l.b16 %v416
    %v1581 = vunpack.c.h.b16 %v416
    %v1582 = vunpack.c.l.b16 %v417
    %v1583 = vunpack.c.h.b16 %v417
    %v1584 = vunpack.c.l.b16 %v418
    %v1585 = vunpack.c.h.b16 %v418
    %v1586 = vunpack.c.l.b16 %v419
    %v1587 = vunpack.c.h.b16 %v419
    %v1588 = vunpack.c.l.b16 %v420
    %v1589 = vunpack.c.h.b16 %v420
    %v1590 = vunpack.c.l.b16 %v421
    %v1591 = vunpack.c.h.b16 %v421
    %v1592 = vunpack.c.l.b16 %v422
    %v1593 = vunpack.c.h.b16 %v422
    %v1594 = vunpack.c.l.b16 %v423
    %v1595 = vunpack.c.h.b16 %v423
    %v1596 = vunpack.c.l.b16 %v424
    %v1597 = vunpack.c.h.b16 %v424
    %v1598 = vunpack.c.l.b16 %v425
    %v1599 = vunpack.c.h.b16 %v425
    %v1600 = vunpack.c.l.b16 %v426
    %v1601 = vunpack.c.h.b16 %v426
    %v1602 = vunpack.c.l.b16 %v427
    %v1603 = vunpack.c.h.b16 %v427
    %v1604 = vunpack.c.l.b16 %v428
    %v1605 = vunpack.c.h.b16 %v428
    %v1606 = vunpack.c.l.b16 %v429
    %v1607 = vunpack.c.h.b16 %v429
    %v1608 = vunpack.c.l.b16 %v430
    %v1609 = vunpack.c.h.b16 %v430
    %v1610 = vunpack.c.l.b16 %v431
    %v1611 = vunpack.c.h.b16 %v431
    %v1612 = vunpack.c.l.b16 %v432
    %v1613 = vunpack.c.h.b16 %v432
    %v1614 = vunpack.c.l.b16 %v433
    %v1615 = vunpack.c.h.b16 %v433
    %v1616 = vunpack.c.l.b16 %v434
    %v1617 = vunpack.c.h.b16 %v434
    %v1618 = vunpack.c.l.b16 %v435
    %v1619 = vunpack.c.h.b16 %v435
    %v1620 = vunpack.c.l.b16 %v436
    %v1621 = vunpack.c.h.b16 %v436
    %v1622 = vunpack.c.l.b16 %v437
    %v1623 = vunpack.c.h.b16 %v437
    %v1624 = vunpack.c.l.b16 %v438
    %v1625 = vunpack.c.h.b16 %v438
    %v1626 = vunpack.c.l.b16 %v439
    %v1627 = vunpack.c.h.b16 %v439
    %v1628 = vunpack.c.l.b16 %v440
    %v1629 = vunpack.c.h.b16 %v440
    %v1630 = vunpack.c.l.b16 %v441
    %v1631 = vunpack.c.h.b16 %v441
    %v1632 = vunpack.c.l.b16 %v442
    %v1633 = vunpack.c.h.b16 %v442
    %v1634 = vunpack.c.l.b16 %v443
    %v1635 = vunpack.c.h.b16 %v443
    %v1636 = vunpack.c.l.b16 %v444
    %v1637 = vunpack.c.h.b16 %v444
    %v1638 = vunpack.c.l.b16 %v445
    %v1639 = vunpack.c.h.b16 %v445
    %v1640 = vunpack.c.l.b16 %v446
    %v1641 = vunpack.c.h.b16 %v446
    %v1642 = vunpack.c.l.b16 %v447
    %v1643 = vunpack.c.h.b16 %v447
    %v1644 = vunpack.c.l.b16 %v448
    %v1645 = vunpack.c.h.b16 %v448
    %v1646 = vunpack.c.l.b16 %v449
    %v1647 = vunpack.c.h.b16 %v449
    %v1648 = vunpack.c.l.b16 %v450
    %v1649 = vunpack.c.h.b16 %v450
    %v1650 = vunpack.c.l.b16 %v451
    %v1651 = vunpack.c.h.b16 %v451
    %v1652 = vunpack.c.l.b16 %v452
    %v1653 = vunpack.c.h.b16 %v452
    %v1654 = vunpack.c.l.b16 %v453
    %v1655 = vunpack.c.h.b16 %v453
    %v1656 = vunpack.c.l.b16 %v454
    %v1657 = vunpack.c.h.b16 %v454
    %v1658 = vunpack.c.l.b16 %v455
    %v1659 = vunpack.c.h.b16 %v455
    %v1660 = vunpack.c.l.b16 %v456
    %v1661 = vunpack.c.h.b16 %v456
    %v1662 = vunpack.c.l.b16 %v457
    %v1663 = vunpack.c.h.b16 %v457
    %v1664 = vunpack.c.l.b16 %v458
    %v1665 = vunpack.c.h.b16 %v458
    %v1666 = vunpack.c.l.b16 %v459
    %v1667 = vunpack.c.h.b16 %v459
    %v1668 = vunpack.c.l.b16 %v460
    %v1669 = vunpack.c.h.b16 %v460
    %v1670 = vunpack.c.l.b16 %v461
    %v1671 = vunpack.c.h.b16 %v461
    %v1672 = vunpack.c.l.b16 %v462
    %v1673 = vunpack.c.h.b16 %v462
    %v1674 = vunpack.c.l.b16 %v463
    %v1675 = vunpack.c.h.b16 %v463
    %v1676 = vunpack.c.l.b16 %v464
    %v1677 = vunpack.c.h.b16 %v464
    %v1678 = vunpack.c.l.b16 %v465
    %v1679 = vunpack.c.h.b16 %v465
    %v1680 = vunpack.c.l.b16 %v466
    %v1681 = vunpack.c.h.b16 %v466
    %v1682 = vunpack.c.l.b16 %v467
    %v1683 = vunpack.c.h.b16 %v467
    %v1684 = vunpack.c.l.b16 %v468
    %v1685 = vunpack.c.h.b16 %v468
    %v1686 = vunpack.c.l.b16 %v469
    %v1687 = vunpack.c.h.b16 %v469
    %v1688 = vunpack.c.l.b16 %v470
    %v1689 = vunpack.c.h.b16 %v470
    %v1690 = vunpack.c.l.b16 %v471
    %v1691 = vunpack.c.h.b16 %v471
    %v1692 = vunpack.c.l.b16 %v472
    %v1693 = vunpack.c.h.b16 %v472
    %v1694 = vunpack.c.l.b16 %v473
    %v1695 = vunpack.c.h.b16 %v473
    %v1696 = vunpack.c.l.b16 %v474
    %v1697 = vunpack.c.h.b16 %v474
    %v1698 = vunpack.c.l.b16 %v475
    %v1699 = vunpack.c.h.b16 %v475
    %v1700 = vunpack.c.l.b16 %v476
    %v1701 = vunpack.c.h.b16 %v476
    %v1702 = vunpack.c.l.b16 %v477
    %v1703 = vunpack.c.h.b16 %v477
    %v1704 = vunpack.c.l.b16 %v478
    %v1705 = vunpack.c.h.b16 %v478
    %v1706 = vunpack.c.l.b16 %v479
    %v1707 = vunpack.c.h.b16 %v479
    %v1708 = vunpack.c.l.b16 %v480
    %v1709 = vunpack.c.h.b16 %v480
    %v1710 = vunpack.c.l.b16 %v481
    %v1711 = vunpack.c.h.b16 %v481
    %v1712 = vunpack.c.l.b16 %v482
    %v1713 = vunpack.c.h.b16 %v482
    %v1714 = vunpack.c.l.b16 %v483
    %v1715 = vunpack.c.h.b16 %v483
    %v1716 = vunpack.c.l.b16 %v484
    %v1717 = vunpack.c.h.b16 %v484
    %v1718 = vunpack.c.l.b16 %v485
    %v1719 = vunpack.c.h.b16 %v485
    %v1720 = vunpack.c.l.b16 %v486
    %v1721 = vunpack.c.h.b16 %v486
    %v1722 = vunpack.c.l.b16 %v487
    %v1723 = vunpack.c.h.b16 %v487
    %v1724 = vunpack.c.l.b16 %v488
    %v1725 = vunpack.c.h.b16 %v488
    %v1726 = vunpack.c.l.b16 %v489
    %v1727 = vunpack.c.h.b16 %v489
    %v1728 = vunpack.c.l.b16 %v490
    %v1729 = vunpack.c.h.b16 %v490
    %v1730 = vunpack.c.l.b16 %v491
    %v1731 = vunpack.c.h.b16 %v491
    %v1732 = vunpack.c.l.b16 %v492
    %v1733 = vunpack.c.h.b16 %v492
    %v1734 = vunpack.c.l.b16 %v493
    %v1735 = vunpack.c.h.b16 %v493
    %v1736 = vunpack.c.l.b16 %v494
    %v1737 = vunpack.c.h.b16 %v494
    %v1738 = vunpack.c.l.b16 %v495
    %v1739 = vunpack.c.h.b16 %v495
    %v1740 = vunpack.c.l.b16 %v496
    %v1741 = vunpack.c.h.b16 %v496
    %v1742 = vunpack.c.l.b16 %v497
    %v1743 = vunpack.c.h.b16 %v497
    %v1744 = vunpack.c.l.b16 %v498
    %v1745 = vunpack.c.h.b16 %v498
    %v1746 = vunpack.c.l.b16 %v499
    %v1747 = vunpack.c.h.b16 %v499
    %v1748 = vpack.c.b16 %v988, %v980
    %v1749 = vpack.c.b16 %v989, %v981
    %v1750 = vpack.c.b16 %v990, %v982
    %v1751 = vpack.c.b16 %v991, %v983
    %v1752 = vpack.c.b16 %v992, %v984
    %v1753 = vpack.c.b16 %v993, %v985
    %v1754 = vpack.c.b16 %v994, %v986
    %v1755 = vpack.c.b16 %v995, %v987
    %v1756 = vpack.c.b16 %v1004, %v996
    %v1757 = vpack.c.b16 %v1005, %v997
    %v1758 = vpack.c.b16 %v1006, %v998
    %v1759 = vpack.c.b16 %v1007, %v999
    %v1760 = vpack.c.b16 %v1008, %v1000
    %v1761 = vpack.c.b16 %v1009, %v1001
    %v1762 = vpack.c.b16 %v1010, %v1002
    %v1763 = vpack.c.b16 %v1011, %v1003
    %v1764 = vpack.c.b16 %v1020, %v1012
    %v1765 = vpack.c.b16 %v1021, %v1013
    %v1766 = vpack.c.b16 %v1022, %v1014
    %v1767 = vpack.c.b16 %v1023, %v1015
    %v1768 = vpack.c.b16 %v1024, %v1016
    %v1769 = vpack.c.b16 %v1025, %v1017
    %v1770 = vpack.c.b16 %v1026, %v1018
    %v1771 = vpack.c.b16 %v1027, %v1019
    %v1772 = vpack.c.b16 %v1036, %v1028
    %v1773 = vpack.c.b16 %v1037, %v1029
    %v1774 = vpack.c.b16 %v1038, %v1030
    %v1775 = vpack.c.b16 %v1039, %v1031
    %v1776 = vpack.c.b16 %v1040, %v1032
    %v1777 = vpack.c.b16 %v1041, %v1033
    %v1778 = vpack.c.b16 %v1042, %v1034
    %v1779 = vpack.c.b16 %v1043, %v1035
    %v1780 = vpack.c.b16 %v1052, %v1044
    %v1781 = vpack.c.b16 %v1053, %v1045
    %v1782 = vpack.c.b16 %v1054, %v1046
    %v1783 = vpack.c.b16 %v1055, %v1047
    %v1784 = vpack.c.b16 %v1056, %v1048
    %v1785 = vpack.c.b16 %v1057, %v1049
    %v1786 = vpack.c.b16 %v1058, %v1050
    %v1787 = vpack.c.b16 %v1059, %v1051
    %v1788 = vpack.c.b16 %v1068, %v1060
    %v1789 = vpack.c.b16 %v1069, %v1061
    %v1790 = vpack.c.b16 %v1070, %v1062
    %v1791 = vpack.c.b16 %v1071, %v1063
    %v1792 = vpack.c.b16 %v1072, %v1064
    %v1793 = vpack.c.b16 %v1073, %v1065
    %v1794 = vpack.c.b16 %v1074, %v1066
    %v1795 = vpack.c.b16 %v1075, %v1067
    %v1796 = vpack.c.b16 %v1084, %v1076
    %v1797 = vpack.c.b16 %v1085, %v1077
    %v1798 = vpack.c.b16 %v1086, %v1078
    %v1799 = vpack.c.b16 %v1087, %v1079
    %v1800 = vpack.c.b16 %v1088, %v1080
    %v1801 = vpack.c.b16 %v1089, %v1081
    %v1802 = vpack.c.b16 %v1090, %v1082
    %v1803 = vpack.c.b16 %v1091, %v1083
    %v1804 = vpack.c.b16 %v1100, %v1092
    %v1805 = vpack.c.b16 %v1101, %v1093
    %v1806 = vpack.c.b16 %v1102, %v1094
    %v1807 = vpack.c.b16 %v1103, %v1095
    %v1808 = vpack.c.b16 %v1104, %v1096
    %v1809 = vpack.c.b16 %v1105, %v1097
    %v1810 = vpack.c.b16 %v1106, %v1098
    %v1811 = vpack.c.b16 %v1107, %v1099
    %v1812 = vpack.c.b16 %v1116, %v1108
    %v1813 = vpack.c.b16 %v1117, %v1109
    %v1814 = vpack.c.b16 %v1118, %v1110
    %v1815 = vpack.c.b16 %v1119, %v1111
    %v1816 = vpack.c.b16 %v1120, %v1112
    %v1817 = vpack.c.b16 %v1121, %v1113
    %v1818 = vpack.c.b16 %v1122, %v1114
    %v1819 = vpack.c.b16 %v1123, %v1115
    %v1820 = vpack.c.b16 %v1132, %v1124
    %v1821 = vpack.c.b16 %v1133, %v1125
    %v1822 = vpack.c.b16 %v1134, %v1126
    %v1823 = vpack.c.b16 %v1135, %v1127
    %v1824 = vpack.c.b16 %v1136, %v1128
    %v1825 = vpack.c.b16 %v1137, %v1129
    %v1826 = vpack.c.b16 %v1138, %v1130
    %v1827 = vpack.c.b16 %v1139, %v1131
    %v1828 = vpack.c.b16 %v1148, %v1140
    %v1829 = vpack.c.b16 %v1149, %v1141
    %v1830 = vpack.c.b16 %v1150, %v1142
    %v1831 = vpack.c.b16 %v1151, %v1143
    %v1832 = vpack.c.b16 %v1152, %v1144
    %v1833 = vpack.c.b16 %v1153, %v1145
    %v1834 = vpack.c.b16 %v1154, %v1146
    %v1835 = vpack.c.b16 %v1155, %v1147
    %v1836 = vpack.c.b16 %v1164, %v1156
    %v1837 = vpack.c.b16 %v1165, %v1157
    %v1838 = vpack.c.b16 %v1166, %v1158
    %v1839 = vpack.c.b16 %v1167, %v1159
    %v1840 = vpack.c.b16 %v1168, %v1160
    %v1841 = vpack.c.b16 %v1169, %v1161
    %v1842 = vpack.c.b16 %v1170, %v1162
    %v1843 = vpack.c.b16 %v1171, %v1163
    %v1844 = vpack.c.b16 %v1180, %v1172
    %v1845 = vpack.c.b16 %v1181, %v1173
    %v1846 = vpack.c.b16 %v1182, %v1174
    %v1847 = vpack.c.b16 %v1183, %v1175
    %v1848 = vpack.c.b16 %v1184, %v1176
    %v1849 = vpack.c.b16 %v1185, %v1177
    %v1850 = vpack.c.b16 %v1186, %v1178
    %v1851 = vpack.c.b16 %v1187, %v1179
    %v1852 = vpack.c.b16 %v1196, %v1188
    %v1853 = vpack.c.b16 %v1197, %v1189
    %v1854 = vpack.c.b16 %v1198, %v1190
    %v1855 = vpack.c.b16 %v1199, %v1191
    %v1856 = vpack.c.b16 %v1200, %v1192
    %v1857 = vpack.c.b16 %v1201, %v1193
    %v1858 = vpack.c.b16 %v1202, %v1194
    %v1859 = vpack.c.b16 %v1203, %v1195
    %v1860 = vpack.c.b16 %v1212, %v1204
    %v1861 = vpack.c.b16 %v1213, %v1205
    %v1862 = vpack.c.b16 %v1214, %v1206
    %v1863 = vpack.c.b16 %v1215, %v1207
    %v1864 = vpack.c.b16 %v1216, %v1208
    %v1865 = vpack.c.b16 %v1217, %v1209
    %v1866 = vpack.c.b16 %v1218, %v1210
    %v1867 = vpack.c.b16 %v1219, %v1211
    %v1868 = vpack.c.b16 %v1228, %v1220
    %v1869 = vpack.c.b16 %v1229, %v1221
    %v1870 = vpack.c.b16 %v1230, %v1222
    %v1871 = vpack.c.b16 %v1231, %v1223
    %v1872 = vpack.c.b16 %v1232, %v1224
    %v1873 = vpack.c.b16 %v1233, %v1225
    %v1874 = vpack.c.b16 %v1234, %v1226
    %v1875 = vpack.c.b16 %v1235, %v1227
    %v1876 = vpack.c.b16 %v1244, %v1236
    %v1877 = vpack.c.b16 %v1245, %v1237
    %v1878 = vpack.c.b16 %v1246, %v1238
    %v1879 = vpack.c.b16 %v1247, %v1239
    %v1880 = vpack.c.b16 %v1248, %v1240
    %v1881 = vpack.c.b16 %v1249, %v1241
    %v1882 = vpack.c.b16 %v1250, %v1242
    %v1883 = vpack.c.b16 %v1251, %v1243
    %v1884 = vpack.c.b16 %v1260, %v1252
    %v1885 = vpack.c.b16 %v1261, %v1253
    %v1886 = vpack.c.b16 %v1262, %v1254
    %v1887 = vpack.c.b16 %v1263, %v1255
    %v1888 = vpack.c.b16 %v1264, %v1256
    %v1889 = vpack.c.b16 %v1265, %v1257
    %v1890 = vpack.c.b16 %v1266, %v1258
    %v1891 = vpack.c.b16 %v1267, %v1259
    %v1892 = vpack.c.b16 %v1276, %v1268
    %v1893 = vpack.c.b16 %v1277, %v1269
    %v1894 = vpack.c.b16 %v1278, %v1270
    %v1895 = vpack.c.b16 %v1279, %v1271
    %v1896 = vpack.c.b16 %v1280, %v1272
    %v1897 = vpack.c.b16 %v1281, %v1273
    %v1898 = vpack.c.b16 %v1282, %v1274
    %v1899 = vpack.c.b16 %v1283, %v1275
    %v1900 = vpack.c.b16 %v1292, %v1284
    %v1901 = vpack.c.b16 %v1293, %v1285
    %v1902 = vpack.c.b16 %v1294, %v1286
    %v1903 = vpack.c.b16 %v1295, %v1287
    %v1904 = vpack.c.b16 %v1296, %v1288
    %v1905 = vpack.c.b16 %v1297, %v1289
    %v1906 = vpack.c.b16 %v1298, %v1290
    %v1907 = vpack.c.b16 %v1299, %v1291
    %v1908 = vpack.c.b16 %v1308, %v1300
    %v1909 = vpack.c.b16 %v1309, %v1301
    %v1910 = vpack.c.b16 %v1310, %v1302
    %v1911 = vpack.c.b16 %v1311, %v1303
    %v1912 = vpack.c.b16 %v1312, %v1304
    %v1913 = vpack.c.b16 %v1313, %v1305
    %v1914 = vpack.c.b16 %v1314, %v1306
    %v1915 = vpack.c.b16 %v1315, %v1307
    %v1916 = vpack.c.b16 %v1324, %v1316
    %v1917 = vpack.c.b16 %v1325, %v1317
    %v1918 = vpack.c.b16 %v1326, %v1318
    %v1919 = vpack.c.b16 %v1327, %v1319
    %v1920 = vpack.c.b16 %v1328, %v1320
    %v1921 = vpack.c.b16 %v1329, %v1321
    %v1922 = vpack.c.b16 %v1330, %v1322
    %v1923 = vpack.c.b16 %v1331, %v1323
    %v1924 = vpack.c.b16 %v1340, %v1332
    %v1925 = vpack.c.b16 %v1341, %v1333
    %v1926 = vpack.c.b16 %v1342, %v1334
    %v1927 = vpack.c.b16 %v1343, %v1335
    %v1928 = vpack.c.b16 %v1344, %v1336
    %v1929 = vpack.c.b16 %v1345, %v1337
    %v1930 = vpack.c.b16 %v1346, %v1338
    %v1931 = vpack.c.b16 %v1347, %v1339
    %v1932 = vpack.c.b16 %v1356, %v1348
    %v1933 = vpack.c.b16 %v1357, %v1349
    %v1934 = vpack.c.b16 %v1358, %v1350
    %v1935 = vpack.c.b16 %v1359, %v1351
    %v1936 = vpack.c.b16 %v1360, %v1352
    %v1937 = vpack.c.b16 %v1361, %v1353
    %v1938 = vpack.c.b16 %v1362, %v1354
    %v1939 = vpack.c.b16 %v1363, %v1355
    %v1940 = vpack.c.b16 %v1372, %v1364
    %v1941 = vpack.c.b16 %v1373, %v1365
    %v1942 = vpack.c.b16 %v1374, %v1366
    %v1943 = vpack.c.b16 %v1375, %v1367
    %v1944 = vpack.c.b16 %v1376, %v1368
    %v1945 = vpack.c.b16 %v1377, %v1369
    %v1946 = vpack.c.b16 %v1378, %v1370
    %v1947 = vpack.c.b16 %v1379, %v1371
    %v1948 = vpack.c.b16 %v1388, %v1380
    %v1949 = vpack.c.b16 %v1389, %v1381
    %v1950 = vpack.c.b16 %v1390, %v1382
    %v1951 = vpack.c.b16 %v1391, %v1383
    %v1952 = vpack.c.b16 %v1392, %v1384
    %v1953 = vpack.c.b16 %v1393, %v1385
    %v1954 = vpack.c.b16 %v1394, %v1386
    %v1955 = vpack.c.b16 %v1395, %v1387
    %v1956 = vpack.c.b16 %v1404, %v1396
    %v1957 = vpack.c.b16 %v1405, %v1397
    %v1958 = vpack.c.b16 %v1406, %v1398
    %v1959 = vpack.c.b16 %v1407, %v1399
    %v1960 = vpack.c.b16 %v1408, %v1400
    %v1961 = vpack.c.b16 %v1409, %v1401
    %v1962 = vpack.c.b16 %v1410, %v1402
    %v1963 = vpack.c.b16 %v1411, %v1403
    %v1964 = vpack.c.b16 %v1420, %v1412
    %v1965 = vpack.c.b16 %v1421, %v1413
    %v1966 = vpack.c.b16 %v1422, %v1414
    %v1967 = vpack.c.b16 %v1423, %v1415
    %v1968 = vpack.c.b16 %v1424, %v1416
    %v1969 = vpack.c.b16 %v1425, %v1417
    %v1970 = vpack.c.b16 %v1426, %v1418
    %v1971 = vpack.c.b16 %v1427, %v1419
    %v1972 = vpack.c.b16 %v1436, %v1428
    %v1973 = vpack.c.b16 %v1437, %v1429
    %v1974 = vpack.c.b16 %v1438, %v1430
    %v1975 = vpack.c.b16 %v1439, %v1431
    %v1976 = vpack.c.b16 %v1440, %v1432
    %v1977 = vpack.c.b16 %v1441, %v1433
    %v1978 = vpack.c.b16 %v1442, %v1434
    %v1979 = vpack.c.b16 %v1443, %v1435
    %v1980 = vpack.c.b16 %v1452, %v1444
    %v1981 = vpack.c.b16 %v1453, %v1445
    %v1982 = vpack.c.b16 %v1454, %v1446
    %v1983 = vpack.c.b16 %v1455, %v1447
    %v1984 = vpack.c.b16 %v1456, %v1448
    %v1985 = vpack.c.b16 %v1457, %v1449
    %v1986 = vpack.c.b16 %v1458, %v1450
    %v1987 = vpack.c.b16 %v1459, %v1451
    %v1988 = vpack.c.b16 %v1468, %v1460
    %v1989 = vpack.c.b16 %v1469, %v1461
    %v1990 = vpack.c.b16 %v1470, %v1462
    %v1991 = vpack.c.b16 %v1471, %v1463
    %v1992 = vpack.c.b16 %v1472, %v1464
    %v1993 = vpack.c.b16 %v1473, %v1465
    %v1994 = vpack.c.b16 %v1474, %v1466
    %v1995 = vpack.c.b16 %v1475, %v1467
    %v1996 = vpack.c.b16 %v1484, %v1476
    %v1997 = vpack.c.b16 %v1485, %v1477
    %v1998 = vpack.c.b16 %v1486, %v1478
    %v1999 = vpack.c.b16 %v1487, %v1479
    %v2000 = vpack.c.b16 %v1488, %v1480
    %v2001 = vpack.c.b16 %v1489, %v1481
    %v2002 = vpack.c.b16 %v1490, %v1482
    %v2003 = vpack.c.b16 %v1491, %v1483
    %v2004 = vpack.c.b16 %v1500, %v1492
    %v2005 = vpack.c.b16 %v1501, %v1493
    %v2006 = vpack.c.b16 %v1502, %v1494
    %v2007 = vpack.c.b16 %v1503, %v1495
    %v2008 = vpack.c.b16 %v1504, %v1496
    %v2009 = vpack.c.b16 %v1505, %v1497
    %v2010 = vpack.c.b16 %v1506, %v1498
    %v2011 = vpack.c.b16 %v1507, %v1499
    %v2012 = vpack.c.b16 %v1516, %v1508
    %v2013 = vpack.c.b16 %v1517, %v1509
    %v2014 = vpack.c.b16 %v1518, %v1510
    %v2015 = vpack.c.b16 %v1519, %v1511
    %v2016 = vpack.c.b16 %v1520, %v1512
    %v2017 = vpack.c.b16 %v1521, %v1513
    %v2018 = vpack.c.b16 %v1522, %v1514
    %v2019 = vpack.c.b16 %v1523, %v1515
    %v2020 = vpack.c.b16 %v1532, %v1524
    %v2021 = vpack.c.b16 %v1533, %v1525
    %v2022 = vpack.c.b16 %v1534, %v1526
    %v2023 = vpack.c.b16 %v1535, %v1527
    %v2024 = vpack.c.b16 %v1536, %v1528
    %v2025 = vpack.c.b16 %v1537, %v1529
    %v2026 = vpack.c.b16 %v1538, %v1530
    %v2027 = vpack.c.b16 %v1539, %v1531
    %v2028 = vpack.c.b16 %v1548, %v1540
    %v2029 = vpack.c.b16 %v1549, %v1541
    %v2030 = vpack.c.b16 %v1550, %v1542
    %v2031 = vpack.c.b16 %v1551, %v1543
    %v2032 = vpack.c.b16 %v1552, %v1544
    %v2033 = vpack.c.b16 %v1553, %v1545
    %v2034 = vpack.c.b16 %v1554, %v1546
    %v2035 = vpack.c.b16 %v1555, %v1547
    %v2036 = vpack.c.b16 %v1564, %v1556
    %v2037 = vpack.c.b16 %v1565, %v1557
    %v2038 = vpack.c.b16 %v1566, %v1558
    %v2039 = vpack.c.b16 %v1567, %v1559
    %v2040 = vpack.c.b16 %v1568, %v1560
    %v2041 = vpack.c.b16 %v1569, %v1561
    %v2042 = vpack.c.b16 %v1570, %v1562
    %v2043 = vpack.c.b16 %v1571, %v1563
    %v2044 = vpack.c.b16 %v1580, %v1572
    %v2045 = vpack.c.b16 %v1581, %v1573
    %v2046 = vpack.c.b16 %v1582, %v1574
    %v2047 = vpack.c.b16 %v1583, %v1575
    %v2048 = vpack.c.b16 %v1584, %v1576
    %v2049 = vpack.c.b16 %v1585, %v1577
    %v2050 = vpack.c.b16 %v1586, %v1578
    %v2051 = vpack.c.b16 %v1587, %v1579
    %v2052 = vpack.c.b16 %v1596, %v1588
    %v2053 = vpack.c.b16 %v1597, %v1589
    %v2054 = vpack.c.b16 %v1598, %v1590
    %v2055 = vpack.c.b16 %v1599, %v1591
    %v2056 = vpack.c.b16 %v1600, %v1592
    %v2057 = vpack.c.b16 %v1601, %v1593
    %v2058 = vpack.c.b16 %v1602, %v1594
    %v2059 = vpack.c.b16 %v1603, %v1595
    %v2060 = vpack.c.b16 %v1612, %v1604
    %v2061 = vpack.c.b16 %v1613, %v1605
    %v2062 = vpack.c.b16 %v1614, %v1606
    %v2063 = vpack.c.b16 %v1615, %v1607
    %v2064 = vpack.c.b16 %v1616, %v1608
    %v2065 = vpack.c.b16 %v1617, %v1609
    %v2066 = vpack.c.b16 %v1618, %v1610
    %v2067 = vpack.c.b16 %v1619, %v1611
    %v2068 = vpack.c.b16 %v1628, %v1620
    %v2069 = vpack.c.b16 %v1629, %v1621
    %v2070 = vpack.c.b16 %v1630, %v1622
    %v2071 = vpack.c.b16 %v1631, %v1623
    %v2072 = vpack.c.b16 %v1632, %v1624
    %v2073 = vpack.c.b16 %v1633, %v1625
    %v2074 = vpack.c.b16 %v1634, %v1626
    %v2075 = vpack.c.b16 %v1635, %v1627
    %v2076 = vpack.c.b16 %v1644, %v1636
    %v2077 = vpack.c.b16 %v1645, %v1637
    %v2078 = vpack.c.b16 %v1646, %v1638
    %v2079 = vpack.c.b16 %v1647, %v1639
    %v2080 = vpack.c.b16 %v1648, %v1640
    %v2081 = vpack.c.b16 %v1649, %v1641
    %v2082 = vpack.c.b16 %v1650, %v1642
    %v2083 = vpack.c.b16 %v1651, %v1643
    %v2084 = vpack.c.b16 %v1660, %v1652
    %v2085 = vpack.c.b16 %v1661, %v1653
    %v2086 = vpack.c.b16 %v1662, %v1654
    %v2087 = vpack.c.b16 %v1663, %v1655
    %v2088 = vpack.c.b16 %v1664, %v1656
    %v2089 = vpack.c.b16 %v1665, %v1657
    %v2090 = vpack.c.b16 %v1666, %v1658
    %v2091 = vpack.c.b16 %v1667, %v1659
    %v2092 = vpack.c.b16 %v1676, %v1668
    %v2093 = vpack.c.b16 %v1677, %v1669
    %v2094 = vpack.c.b16 %v1678, %v1670
    %v2095 = vpack.c.b16 %v1679, %v1671
    %v2096 = vpack.c.b16 %v1680, %v1672
    %v2097 = vpack.c.b16 %v1681, %v1673
    %v2098 = vpack.c.b16 %v1682, %v1674
    %v2099 = vpack.c.b16 %v1683, %v1675
    %v2100 = vpack.c.b16 %v1692, %v1684
    %v2101 = vpack.c.b16 %v1693, %v1685
    %v2102 = vpack.c.b16 %v1694, %v1686
    %v2103 = vpack.c.b16 %v1695, %v1687
    %v2104 = vpack.c.b16 %v1696, %v1688
    %v2105 = vpack.c.b16 %v1697, %v1689
    %v2106 = vpack.c.b16 %v1698, %v1690
    %v2107 = vpack.c.b16 %v1699, %v1691
    %v2108 = vpack.c.b16 %v1708, %v1700
    %v2109 = vpack.c.b16 %v1709, %v1701
    %v2110 = vpack.c.b16 %v1710, %v1702
    %v2111 = vpack.c.b16 %v1711, %v1703
    %v2112 = vpack.c.b16 %v1712, %v1704
    %v2113 = vpack.c.b16 %v1713, %v1705
    %v2114 = vpack.c.b16 %v1714, %v1706
    %v2115 = vpack.c.b16 %v1715, %v1707
    %v2116 = vpack.c.b16 %v1724, %v1716
    %v2117 = vpack.c.b16 %v1725, %v1717
    %v2118 = vpack.c.b16 %v1726, %v1718
    %v2119 = vpack.c.b16 %v1727, %v1719
    %v2120 = vpack.c.b16 %v1728, %v1720
    %v2121 = vpack.c.b16 %v1729, %v1721
    %v2122 = vpack.c.b16 %v1730, %v1722
    %v2123 = vpack.c.b16 %v1731, %v1723
    %v2124 = vpack.c.b16 %v1740, %v1732
    %v2125 = vpack.c.b16 %v1741, %v1733
    %v2126 = vpack.c.b16 %v1742, %v1734
    %v2127 = vpack.c.b16 %v1743, %v1735
    %v2128 = vpack.c.b16 %v1744, %v1736
    %v2129 = vpack.c.b16 %v1745, %v1737
    %v2130 = vpack.c.b16 %v1746, %v1738
    %v2131 = vpack.c.b16 %v1747, %v1739
    %2516 = vmatprep.subr.bf16.mxu0 %v1749
    %2517 = vmatpush1.bf16.msra.mxu0 %v1748
    %2518 = vmatprep.subr.bf16.mxu0 %v1757
    %2519 = vmatpush1.bf16.msra.mxu0 %v1756
    %2520 = vmatprep.subr.bf16.mxu0 %v1765
    %2521 = vmatpush1.bf16.msra.mxu0 %v1764
    %2522 = vmatprep.subr.bf16.mxu0 %v1773
    %2523 = vmatpush1.bf16.msra.mxu0 %v1772
    %2524 = vmatprep.subr.bf16.mxu0 %v1781
    %2525 = vmatpush1.bf16.msra.mxu0 %v1780
    %2526 = vmatprep.subr.bf16.mxu0 %v1789
    %2527 = vmatpush1.bf16.msra.mxu0 %v1788
    %2528 = vmatprep.subr.bf16.mxu0 %v1797
    %2529 = vmatpush1.bf16.msra.mxu0 %v1796
    %2530 = vmatprep.subr.bf16.mxu0 %v1805
    %2531 = vmatpush1.bf16.msra.mxu0 %v1804
    %2532 = vmatprep.subr.bf16.mxu0 %v1813
    %2533 = vmatpush1.bf16.msra.mxu0 %v1812
    %2534 = vmatprep.subr.bf16.mxu0 %v1821
    %2535 = vmatpush1.bf16.msra.mxu0 %v1820
    %2536 = vmatprep.subr.bf16.mxu0 %v1829
    %2537 = vmatpush1.bf16.msra.mxu0 %v1828
    %2538 = vmatprep.subr.bf16.mxu0 %v1837
    %2539 = vmatpush1.bf16.msra.mxu0 %v1836
    %2540 = vmatprep.subr.bf16.mxu0 %v1845
    %2541 = vmatpush1.bf16.msra.mxu0 %v1844
    %2542 = vmatprep.subr.bf16.mxu0 %v1853
    %2543 = vmatpush1.bf16.msra.mxu0 %v1852
    %2544 = vmatprep.subr.bf16.mxu0 %v1861
    %2545 = vmatpush1.bf16.msra.mxu0 %v1860
    %2546 = vmatprep.subr.bf16.mxu0 %v1869
    %2547 = vmatpush1.bf16.msra.mxu0 %v1868
    %2548 = vmatprep.mubr.bf16.mxu0 %v580
    %2549 = vmatmul.mubr.bf16.gmra.mrb[0].mxu0 %v566
    %v2550 = vpop.f32.mrb[0].mxu0
    %v2551 = vadd.f32 %v505, %v2550
    %v2552 = vpop.f32.mrb[0].mxu0
    %v2553 = vadd.f32 %v509, %v2552
    %v2554 = vpop.f32.mrb[0].mxu0
    %v2555 = vpop.f32.mrb[0].mxu0
    %2556 = vdwg.mxu0
    %2557 = vmatprep.subr.bf16.mxu0 %v1877
    %2558 = vmatpush1.bf16.msra.mxu0 %v1876
    %2559 = vmatprep.subr.bf16.mxu0 %v1885
    %2560 = vmatpush1.bf16.msra.mxu0 %v1884
    %2561 = vmatprep.subr.bf16.mxu0 %v1893
    %2562 = vmatpush1.bf16.msra.mxu0 %v1892
    %2563 = vmatprep.subr.bf16.mxu0 %v1901
    %2564 = vmatpush1.bf16.msra.mxu0 %v1900
    %2565 = vmatprep.subr.bf16.mxu0 %v1909
    %2566 = vmatpush1.bf16.msra.mxu0 %v1908
    %2567 = vmatprep.subr.bf16.mxu0 %v1917
    %2568 = vmatpush1.bf16.msra.mxu0 %v1916
    %2569 = vmatprep.subr.bf16.mxu0 %v1925
    %2570 = vmatpush1.bf16.msra.mxu0 %v1924
    %2571 = vmatprep.subr.bf16.mxu0 %v1933
    %2572 = vmatpush1.bf16.msra.mxu0 %v1932
    %2573 = vmatprep.subr.bf16.mxu0 %v1941
    %2574 = vmatpush1.bf16.msra.mxu0 %v1940
    %2575 = vmatprep.subr.bf16.mxu0 %v1949
    %2576 = vmatpush1.bf16.msra.mxu0 %v1948
    %2577 = vmatprep.subr.bf16.mxu0 %v1957
    %2578 = vmatpush1.bf16.msra.mxu0 %v1956
    %2579 = vmatprep.subr.bf16.mxu0 %v1965
    %2580 = vmatpush1.bf16.msra.mxu0 %v1964
    %2581 = vmatprep.subr.bf16.mxu0 %v1973
    %2582 = vmatpush1.bf16.msra.mxu0 %v1972
    %2583 = vmatprep.subr.bf16.mxu0 %v1981
    %2584 = vmatpush1.bf16.msra.mxu0 %v1980
    %2585 = vmatprep.subr.bf16.mxu0 %v1989
    %2586 = vmatpush1.bf16.msra.mxu0 %v1988
    %2587 = vmatprep.subr.bf16.mxu0 %v1997
    %2588 = vmatpush1.bf16.msra.mxu0 %v1996
    %2589 = vmatprep.mubr.bf16.mxu0 %v589
    %2590 = vmatmul.mubr.bf16.gmra.mrb[0].mxu0 %v588
    %v2591 = vpop.f32.mrb[0].mxu0
    %v2592 = vadd.f32 %v2551, %v2591
    %v2593 = vpop.f32.mrb[0].mxu0
    %v2594 = vadd.f32 %v2553, %v2593
    %v2595 = vpop.f32.mrb[0].mxu0
    %v2596 = vpop.f32.mrb[0].mxu0
    %2597 = vdwg.mxu0
    %2598 = vmatprep.subr.bf16.mxu0 %v2005
    %2599 = vmatpush1.bf16.msra.mxu0 %v2004
    %2600 = vmatprep.subr.bf16.mxu0 %v2013
    %2601 = vmatpush1.bf16.msra.mxu0 %v2012
    %2602 = vmatprep.subr.bf16.mxu0 %v2021
    %2603 = vmatpush1.bf16.msra.mxu0 %v2020
    %2604 = vmatprep.subr.bf16.mxu0 %v2029
    %2605 = vmatpush1.bf16.msra.mxu0 %v2028
    %2606 = vmatprep.subr.bf16.mxu0 %v2037
    %2607 = vmatpush1.bf16.msra.mxu0 %v2036
    %2608 = vmatprep.subr.bf16.mxu0 %v2045
    %2609 = vmatpush1.bf16.msra.mxu0 %v2044
    %2610 = vmatprep.subr.bf16.mxu0 %v2053
    %2611 = vmatpush1.bf16.msra.mxu0 %v2052
    %2612 = vmatprep.subr.bf16.mxu0 %v2061
    %2613 = vmatpush1.bf16.msra.mxu0 %v2060
    %2614 = vmatprep.subr.bf16.mxu0 %v2069
    %2615 = vmatpush1.bf16.msra.mxu0 %v2068
    %2616 = vmatprep.subr.bf16.mxu0 %v2077
    %2617 = vmatpush1.bf16.msra.mxu0 %v2076
    %2618 = vmatprep.subr.bf16.mxu0 %v2085
    %2619 = vmatpush1.bf16.msra.mxu0 %v2084
    %2620 = vmatprep.subr.bf16.mxu0 %v2093
    %2621 = vmatpush1.bf16.msra.mxu0 %v2092
    %2622 = vmatprep.subr.bf16.mxu0 %v2101
    %2623 = vmatpush1.bf16.msra.mxu0 %v2100
    %2624 = vmatprep.subr.bf16.mxu0 %v2109
    %2625 = vmatpush1.bf16.msra.mxu0 %v2108
    %2626 = vmatprep.subr.bf16.mxu0 %v2117
    %2627 = vmatpush1.bf16.msra.mxu0 %v2116
    %2628 = vmatprep.subr.bf16.mxu0 %v2125
    %2629 = vmatpush1.bf16.msra.mxu0 %v2124
    %2630 = vmatprep.mubr.bf16.mxu0 %v587
    %2631 = vmatmul.mubr.bf16.gmra.mrb[0].mxu0 %v573
    %v2632 = vpop.f32.mrb[0].mxu0
    %v2633 = vadd.f32 %v2592, %v2632
    %v2634 = vpop.f32.mrb[0].mxu0
    %v2635 = vadd.f32 %v2594, %v2634
    %v2636 = vpop.f32.mrb[0].mxu0
    %v2637 = vpop.f32.mrb[0].mxu0
    %2638 = vdwg.mxu0
    %2639 = vmatprep.subr.bf16.mxu0 %v1751
    %2640 = vmatpush1.bf16.msra.mxu0 %v1750
    %2641 = vmatprep.subr.bf16.mxu0 %v1759
    %2642 = vmatpush1.bf16.msra.mxu0 %v1758
    %2643 = vmatprep.subr.bf16.mxu0 %v1767
    %2644 = vmatpush1.bf16.msra.mxu0 %v1766
    %2645 = vmatprep.subr.bf16.mxu0 %v1775
    %2646 = vmatpush1.bf16.msra.mxu0 %v1774
    %2647 = vmatprep.subr.bf16.mxu0 %v1783
    %2648 = vmatpush1.bf16.msra.mxu0 %v1782
    %2649 = vmatprep.subr.bf16.mxu0 %v1791
    %2650 = vmatpush1.bf16.msra.mxu0 %v1790
    %2651 = vmatprep.subr.bf16.mxu0 %v1799
    %2652 = vmatpush1.bf16.msra.mxu0 %v1798
    %2653 = vmatprep.subr.bf16.mxu0 %v1807
    %2654 = vmatpush1.bf16.msra.mxu0 %v1806
    %2655 = vmatprep.subr.bf16.mxu0 %v1815
    %2656 = vmatpush1.bf16.msra.mxu0 %v1814
    %2657 = vmatprep.subr.bf16.mxu0 %v1823
    %2658 = vmatpush1.bf16.msra.mxu0 %v1822
    %2659 = vmatprep.subr.bf16.mxu0 %v1831
    %2660 = vmatpush1.bf16.msra.mxu0 %v1830
    %2661 = vmatprep.subr.bf16.mxu0 %v1839
    %2662 = vmatpush1.bf16.msra.mxu0 %v1838
    %2663 = vmatprep.subr.bf16.mxu0 %v1847
    %2664 = vmatpush1.bf16.msra.mxu0 %v1846
    %2665 = vmatprep.subr.bf16.mxu0 %v1855
    %2666 = vmatpush1.bf16.msra.mxu0 %v1854
    %2667 = vmatprep.subr.bf16.mxu0 %v1863
    %2668 = vmatpush1.bf16.msra.mxu0 %v1862
    %2669 = vmatprep.subr.bf16.mxu0 %v1871
    %2670 = vmatpush1.bf16.msra.mxu0 %v1870
    %2671 = vmatprep.mubr.bf16.mxu0 %v580
    %2672 = vmatmul.mubr.bf16.gmra.mrb[0].mxu0 %v566
    %v2673 = vpop.f32.mrb[0].mxu0
    %v2674 = vadd.f32 %v513, %v2673
    %v2675 = vpop.f32.mrb[0].mxu0
    %v2676 = vadd.f32 %v517, %v2675
    %v2677 = vpop.f32.mrb[0].mxu0
    %v2678 = vpop.f32.mrb[0].mxu0
    %2679 = vdwg.mxu0
    %2680 = vmatprep.subr.bf16.mxu0 %v1879
    %2681 = vmatpush1.bf16.msra.mxu0 %v1878
    %2682 = vmatprep.subr.bf16.mxu0 %v1887
    %2683 = vmatpush1.bf16.msra.mxu0 %v1886
    %2684 = vmatprep.subr.bf16.mxu0 %v1895
    %2685 = vmatpush1.bf16.msra.mxu0 %v1894
    %2686 = vmatprep.subr.bf16.mxu0 %v1903
    %2687 = vmatpush1.bf16.msra.mxu0 %v1902
    %2688 = vmatprep.subr.bf16.mxu0 %v1911
    %2689 = vmatpush1.bf16.msra.mxu0 %v1910
    %2690 = vmatprep.subr.bf16.mxu0 %v1919
    %2691 = vmatpush1.bf16.msra.mxu0 %v1918
    %2692 = vmatprep.subr.bf16.mxu0 %v1927
    %2693 = vmatpush1.bf16.msra.mxu0 %v1926
    %2694 = vmatprep.subr.bf16.mxu0 %v1935
    %2695 = vmatpush1.bf16.msra.mxu0 %v1934
    %2696 = vmatprep.subr.bf16.mxu0 %v1943
    %2697 = vmatpush1.bf16.msra.mxu0 %v1942
    %2698 = vmatprep.subr.bf16.mxu0 %v1951
    %2699 = vmatpush1.bf16.msra.mxu0 %v1950
    %2700 = vmatprep.subr.bf16.mxu0 %v1959
    %2701 = vmatpush1.bf16.msra.mxu0 %v1958
    %2702 = vmatprep.subr.bf16.mxu0 %v1967
    %2703 = vmatpush1.bf16.msra.mxu0 %v1966
    %2704 = vmatprep.subr.bf16.mxu0 %v1975
    %2705 = vmatpush1.bf16.msra.mxu0 %v1974
    %2706 = vmatprep.subr.bf16.mxu0 %v1983
    %2707 = vmatpush1.bf16.msra.mxu0 %v1982
    %2708 = vmatprep.subr.bf16.mxu0 %v1991
    %2709 = vmatpush1.bf16.msra.mxu0 %v1990
    %2710 = vmatprep.subr.bf16.mxu0 %v1999
    %2711 = vmatpush1.bf16.msra.mxu0 %v1998
    %2712 = vmatprep.mubr.bf16.mxu0 %v589
    %2713 = vmatmul.mubr.bf16.gmra.mrb[0].mxu0 %v588
    %v2714 = vpop.f32.mrb[0].mxu0
    %v2715 = vadd.f32 %v2674, %v2714
    %v2716 = vpop.f32.mrb[0].mxu0
    %v2717 = vadd.f32 %v2676, %v2716
    %v2718 = vpop.f32.mrb[0].mxu0
    %v2719 = vpop.f32.mrb[0].mxu0
    %2720 = vdwg.mxu0
    %2721 = vmatprep.subr.bf16.mxu0 %v2007
    %2722 = vmatpush1.bf16.msra.mxu0 %v2006
    %2723 = vmatprep.subr.bf16.mxu0 %v2015
    %2724 = vmatpush1.bf16.msra.mxu0 %v2014
    %2725 = vmatprep.subr.bf16.mxu0 %v2023
    %2726 = vmatpush1.bf16.msra.mxu0 %v2022
    %2727 = vmatprep.subr.bf16.mxu0 %v2031
    %2728 = vmatpush1.bf16.msra.mxu0 %v2030
    %2729 = vmatprep.subr.bf16.mxu0 %v2039
    %2730 = vmatpush1.bf16.msra.mxu0 %v2038
    %2731 = vmatprep.subr.bf16.mxu0 %v2047
    %2732 = vmatpush1.bf16.msra.mxu0 %v2046
    %2733 = vmatprep.subr.bf16.mxu0 %v2055
    %2734 = vmatpush1.bf16.msra.mxu0 %v2054
    %2735 = vmatprep.subr.bf16.mxu0 %v2063
    %2736 = vmatpush1.bf16.msra.mxu0 %v2062
    %2737 = vmatprep.subr.bf16.mxu0 %v2071
    %2738 = vmatpush1.bf16.msra.mxu0 %v2070
    %2739 = vmatprep.subr.bf16.mxu0 %v2079
    %2740 = vmatpush1.bf16.msra.mxu0 %v2078
    %2741 = vmatprep.subr.bf16.mxu0 %v2087
    %2742 = vmatpush1.bf16.msra.mxu0 %v2086
    %2743 = vmatprep.subr.bf16.mxu0 %v2095
    %2744 = vmatpush1.bf16.msra.mxu0 %v2094
    %2745 = vmatprep.subr.bf16.mxu0 %v2103
    %2746 = vmatpush1.bf16.msra.mxu0 %v2102
    %2747 = vmatprep.subr.bf16.mxu0 %v2111
    %2748 = vmatpush1.bf16.msra.mxu0 %v2110
    %2749 = vmatprep.subr.bf16.mxu0 %v2119
    %2750 = vmatpush1.bf16.msra.mxu0 %v2118
    %2751 = vmatprep.subr.bf16.mxu0 %v2127
    %2752 = vmatpush1.bf16.msra.mxu0 %v2126
    %2753 = vmatprep.mubr.bf16.mxu0 %v587
    %2754 = vmatmul.mubr.bf16.gmra.mrb[0].mxu0 %v573
    %v2755 = vpop.f32.mrb[0].mxu0
    %v2756 = vadd.f32 %v2715, %v2755
    %v2757 = vpop.f32.mrb[0].mxu0
    %v2758 = vadd.f32 %v2717, %v2757
    %v2759 = vpop.f32.mrb[0].mxu0
    %v2760 = vpop.f32.mrb[0].mxu0
    %2761 = vdwg.mxu0
    %2762 = vmatprep.subr.bf16.mxu0 %v1753
    %2763 = vmatpush1.bf16.msra.mxu0 %v1752
    %2764 = vmatprep.subr.bf16.mxu0 %v1761
    %2765 = vmatpush1.bf16.msra.mxu0 %v1760
    %2766 = vmatprep.subr.bf16.mxu0 %v1769
    %2767 = vmatpush1.bf16.msra.mxu0 %v1768
    %2768 = vmatprep.subr.bf16.mxu0 %v1777
    %2769 = vmatpush1.bf16.msra.mxu0 %v1776
    %2770 = vmatprep.subr.bf16.mxu0 %v1785
    %2771 = vmatpush1.bf16.msra.mxu0 %v1784
    %2772 = vmatprep.subr.bf16.mxu0 %v1793
    %2773 = vmatpush1.bf16.msra.mxu0 %v1792
    %2774 = vmatprep.subr.bf16.mxu0 %v1801
    %2775 = vmatpush1.bf16.msra.mxu0 %v1800
    %2776 = vmatprep.subr.bf16.mxu0 %v1809
    %2777 = vmatpush1.bf16.msra.mxu0 %v1808
    %2778 = vmatprep.subr.bf16.mxu0 %v1817
    %2779 = vmatpush1.bf16.msra.mxu0 %v1816
    %2780 = vmatprep.subr.bf16.mxu0 %v1825
    %2781 = vmatpush1.bf16.msra.mxu0 %v1824
    %2782 = vmatprep.subr.bf16.mxu0 %v1833
    %2783 = vmatpush1.bf16.msra.mxu0 %v1832
    %2784 = vmatprep.subr.bf16.mxu0 %v1841
    %2785 = vmatpush1.bf16.msra.mxu0 %v1840
    %2786 = vmatprep.subr.bf16.mxu0 %v1849
    %2787 = vmatpush1.bf16.msra.mxu0 %v1848
    %2788 = vmatprep.subr.bf16.mxu0 %v1857
    %2789 = vmatpush1.bf16.msra.mxu0 %v1856
    %2790 = vmatprep.subr.bf16.mxu0 %v1865
    %2791 = vmatpush1.bf16.msra.mxu0 %v1864
    %2792 = vmatprep.subr.bf16.mxu0 %v1873
    %2793 = vmatpush1.bf16.msra.mxu0 %v1872
    %2794 = vmatprep.mubr.bf16.mxu0 %v580
    %2795 = vmatmul.mubr.bf16.gmra.mrb[0].mxu0 %v566
    %v2796 = vpop.f32.mrb[0].mxu0
    %v2797 = vadd.f32 %v521, %v2796
    %v2798 = vpop.f32.mrb[0].mxu0
    %v2799 = vadd.f32 %v525, %v2798
    %v2800 = vpop.f32.mrb[0].mxu0
    %v2801 = vpop.f32.mrb[0].mxu0
    %2802 = vdwg.mxu0
    %2803 = vmatprep.subr.bf16.mxu0 %v1881
    %2804 = vmatpush1.bf16.msra.mxu0 %v1880
    %2805 = vmatprep.subr.bf16.mxu0 %v1889
    %2806 = vmatpush1.bf16.msra.mxu0 %v1888
    %2807 = vmatprep.subr.bf16.mxu0 %v1897
    %2808 = vmatpush1.bf16.msra.mxu0 %v1896
    %2809 = vmatprep.subr.bf16.mxu0 %v1905
    %2810 = vmatpush1.bf16.msra.mxu0 %v1904
    %2811 = vmatprep.subr.bf16.mxu0 %v1913
    %2812 = vmatpush1.bf16.msra.mxu0 %v1912
    %2813 = vmatprep.subr.bf16.mxu0 %v1921
    %2814 = vmatpush1.bf16.msra.mxu0 %v1920
    %2815 = vmatprep.subr.bf16.mxu0 %v1929
    %2816 = vmatpush1.bf16.msra.mxu0 %v1928
    %2817 = vmatprep.subr.bf16.mxu0 %v1937
    %2818 = vmatpush1.bf16.msra.mxu0 %v1936
    %2819 = vmatprep.subr.bf16.mxu0 %v1945
    %2820 = vmatpush1.bf16.msra.mxu0 %v1944
    %2821 = vmatprep.subr.bf16.mxu0 %v1953
    %2822 = vmatpush1.bf16.msra.mxu0 %v1952
    %2823 = vmatprep.subr.bf16.mxu0 %v1961
    %2824 = vmatpush1.bf16.msra.mxu0 %v1960
    %2825 = vmatprep.subr.bf16.mxu0 %v1969
    %2826 = vmatpush1.bf16.msra.mxu0 %v1968
    %2827 = vmatprep.subr.bf16.mxu0 %v1977
    %2828 = vmatpush1.bf16.msra.mxu0 %v1976
    %2829 = vmatprep.subr.bf16.mxu0 %v1985
    %2830 = vmatpush1.bf16.msra.mxu0 %v1984
    %2831 = vmatprep.subr.bf16.mxu0 %v1993
    %2832 = vmatpush1.bf16.msra.mxu0 %v1992
    %2833 = vmatprep.subr.bf16.mxu0 %v2001
    %2834 = vmatpush1.bf16.msra.mxu0 %v2000
    %2835 = vmatprep.mubr.bf16.mxu0 %v589
    %2836 = vmatmul.mubr.bf16.gmra.mrb[0].mxu0 %v588
    %v2837 = vpop.f32.mrb[0].mxu0
    %v2838 = vadd.f32 %v2797, %v2837
    %v2839 = vpop.f32.mrb[0].mxu0
    %v2840 = vadd.f32 %v2799, %v2839
    %v2841 = vpop.f32.mrb[0].mxu0
    %v2842 = vpop.f32.mrb[0].mxu0
    %2843 = vdwg.mxu0
    %2844 = vmatprep.subr.bf16.mxu0 %v2009
    %2845 = vmatpush1.bf16.msra.mxu0 %v2008
    %2846 = vmatprep.subr.bf16.mxu0 %v2017
    %2847 = vmatpush1.bf16.msra.mxu0 %v2016
    %2848 = vmatprep.subr.bf16.mxu0 %v2025
    %2849 = vmatpush1.bf16.msra.mxu0 %v2024
    %2850 = vmatprep.subr.bf16.mxu0 %v2033
    %2851 = vmatpush1.bf16.msra.mxu0 %v2032
    %2852 = vmatprep.subr.bf16.mxu0 %v2041
    %2853 = vmatpush1.bf16.msra.mxu0 %v2040
    %2854 = vmatprep.subr.bf16.mxu0 %v2049
    %2855 = vmatpush1.bf16.msra.mxu0 %v2048
    %2856 = vmatprep.subr.bf16.mxu0 %v2057
    %2857 = vmatpush1.bf16.msra.mxu0 %v2056
    %2858 = vmatprep.subr.bf16.mxu0 %v2065
    %2859 = vmatpush1.bf16.msra.mxu0 %v2064
    %2860 = vmatprep.subr.bf16.mxu0 %v2073
    %2861 = vmatpush1.bf16.msra.mxu0 %v2072
    %2862 = vmatprep.subr.bf16.mxu0 %v2081
    %2863 = vmatpush1.bf16.msra.mxu0 %v2080
    %2864 = vmatprep.subr.bf16.mxu0 %v2089
    %2865 = vmatpush1.bf16.msra.mxu0 %v2088
    %2866 = vmatprep.subr.bf16.mxu0 %v2097
    %2867 = vmatpush1.bf16.msra.mxu0 %v2096
    %2868 = vmatprep.subr.bf16.mxu0 %v2105
    %2869 = vmatpush1.bf16.msra.mxu0 %v2104
    %2870 = vmatprep.subr.bf16.mxu0 %v2113
    %2871 = vmatpush1.bf16.msra.mxu0 %v2112
    %2872 = vmatprep.subr.bf16.mxu0 %v2121
    %2873 = vmatpush1.bf16.msra.mxu0 %v2120
    %2874 = vmatprep.subr.bf16.mxu0 %v2129
    %2875 = vmatpush1.bf16.msra.mxu0 %v2128
    %2876 = vmatprep.mubr.bf16.mxu0 %v587
    %2877 = vmatmul.mubr.bf16.gmra.mrb[0].mxu0 %v573
    %v2878 = vpop.f32.mrb[0].mxu0
    %v2879 = vadd.f32 %v2838, %v2878
    %v2880 = vpop.f32.mrb[0].mxu0
    %v2881 = vadd.f32 %v2840, %v2880
    %v2882 = vpop.f32.mrb[0].mxu0
    %v2883 = vpop.f32.mrb[0].mxu0
    %2884 = vdwg.mxu0
    %2885 = vmatprep.subr.bf16.mxu0 %v1755
    %2886 = vmatpush1.bf16.msra.mxu0 %v1754
    %2887 = vmatprep.subr.bf16.mxu0 %v1763
    %2888 = vmatpush1.bf16.msra.mxu0 %v1762
    %2889 = vmatprep.subr.bf16.mxu0 %v1771
    %2890 = vmatpush1.bf16.msra.mxu0 %v1770
    %2891 = vmatprep.subr.bf16.mxu0 %v1779
    %2892 = vmatpush1.bf16.msra.mxu0 %v1778
    %2893 = vmatprep.subr.bf16.mxu0 %v1787
    %2894 = vmatpush1.bf16.msra.mxu0 %v1786
    %2895 = vmatprep.subr.bf16.mxu0 %v1795
    %2896 = vmatpush1.bf16.msra.mxu0 %v1794
    %2897 = vmatprep.subr.bf16.mxu0 %v1803
    %2898 = vmatpush1.bf16.msra.mxu0 %v1802
    %2899 = vmatprep.subr.bf16.mxu0 %v1811
    %2900 = vmatpush1.bf16.msra.mxu0 %v1810
    %2901 = vmatprep.subr.bf16.mxu0 %v1819
    %2902 = vmatpush1.bf16.msra.mxu0 %v1818
    %2903 = vmatprep.subr.bf16.mxu0 %v1827
    %2904 = vmatpush1.bf16.msra.mxu0 %v1826
    %2905 = vmatprep.subr.bf16.mxu0 %v1835
    %2906 = vmatpush1.bf16.msra.mxu0 %v1834
    %2907 = vmatprep.subr.bf16.mxu0 %v1843
    %2908 = vmatpush1.bf16.msra.mxu0 %v1842
    %2909 = vmatprep.subr.bf16.mxu0 %v1851
    %2910 = vmatpush1.bf16.msra.mxu0 %v1850
    %2911 = vmatprep.subr.bf16.mxu0 %v1859
    %2912 = vmatpush1.bf16.msra.mxu0 %v1858
    %2913 = vmatprep.subr.bf16.mxu0 %v1867
    %2914 = vmatpush1.bf16.msra.mxu0 %v1866
    %2915 = vmatprep.subr.bf16.mxu0 %v1875
    %2916 = vmatpush1.bf16.msra.mxu0 %v1874
    %2917 = vmatprep.mubr.bf16.mxu0 %v580
    %2918 = vmatmul.mubr.bf16.gmra.mrb[0].mxu0 %v566
    %v2919 = vpop.f32.mrb[0].mxu0
    %v2920 = vadd.f32 %v529, %v2919
    %v2921 = vpop.f32.mrb[0].mxu0
    %v2922 = vadd.f32 %v533, %v2921
    %v2923 = vpop.f32.mrb[0].mxu0
    %v2924 = vpop.f32.mrb[0].mxu0
    %2925 = vdwg.mxu0
    %2926 = vmatprep.subr.bf16.mxu0 %v1883
    %2927 = vmatpush1.bf16.msra.mxu0 %v1882
    %2928 = vmatprep.subr.bf16.mxu0 %v1891
    %2929 = vmatpush1.bf16.msra.mxu0 %v1890
    %2930 = vmatprep.subr.bf16.mxu0 %v1899
    %2931 = vmatpush1.bf16.msra.mxu0 %v1898
    %2932 = vmatprep.subr.bf16.mxu0 %v1907
    %2933 = vmatpush1.bf16.msra.mxu0 %v1906
    %2934 = vmatprep.subr.bf16.mxu0 %v1915
    %2935 = vmatpush1.bf16.msra.mxu0 %v1914
    %2936 = vmatprep.subr.bf16.mxu0 %v1923
    %2937 = vmatpush1.bf16.msra.mxu0 %v1922
    %2938 = vmatprep.subr.bf16.mxu0 %v1931
    %2939 = vmatpush1.bf16.msra.mxu0 %v1930
    %2940 = vmatprep.subr.bf16.mxu0 %v1939
    %2941 = vmatpush1.bf16.msra.mxu0 %v1938
    %2942 = vmatprep.subr.bf16.mxu0 %v1947
    %2943 = vmatpush1.bf16.msra.mxu0 %v1946
    %2944 = vmatprep.subr.bf16.mxu0 %v1955
    %2945 = vmatpush1.bf16.msra.mxu0 %v1954
    %2946 = vmatprep.subr.bf16.mxu0 %v1963
    %2947 = vmatpush1.bf16.msra.mxu0 %v1962
    %2948 = vmatprep.subr.bf16.mxu0 %v1971
    %2949 = vmatpush1.bf16.msra.mxu0 %v1970
    %2950 = vmatprep.subr.bf16.mxu0 %v1979
    %2951 = vmatpush1.bf16.msra.mxu0 %v1978
    %2952 = vmatprep.subr.bf16.mxu0 %v1987
    %2953 = vmatpush1.bf16.msra.mxu0 %v1986
    %2954 = vmatprep.subr.bf16.mxu0 %v1995
    %2955 = vmatpush1.bf16.msra.mxu0 %v1994
    %2956 = vmatprep.subr.bf16.mxu0 %v2003
    %2957 = vmatpush1.bf16.msra.mxu0 %v2002
    %2958 = vmatprep.mubr.bf16.mxu0 %v589
    %2959 = vmatmul.mubr.bf16.gmra.mrb[0].mxu0 %v588
    %v2960 = vpop.f32.mrb[0].mxu0
    %v2961 = vadd.f32 %v2920, %v2960
    %v2962 = vpop.f32.mrb[0].mxu0
    %v2963 = vadd.f32 %v2922, %v2962
    %v2964 = vpop.f32.mrb[0].mxu0
    %v2965 = vpop.f32.mrb[0].mxu0
    %2966 = vdwg.mxu0
    %2967 = vmatprep.subr.bf16.mxu0 %v2011
    %2968 = vmatpush1.bf16.msra.mxu0 %v2010
    %2969 = vmatprep.subr.bf16.mxu0 %v2019
    %2970 = vmatpush1.bf16.msra.mxu0 %v2018
    %2971 = vmatprep.subr.bf16.mxu0 %v2027
    %2972 = vmatpush1.bf16.msra.mxu0 %v2026
    %2973 = vmatprep.subr.bf16.mxu0 %v2035
    %2974 = vmatpush1.bf16.msra.mxu0 %v2034
    %2975 = vmatprep.subr.bf16.mxu0 %v2043
    %2976 = vmatpush1.bf16.msra.mxu0 %v2042
    %2977 = vmatprep.subr.bf16.mxu0 %v2051
    %2978 = vmatpush1.bf16.msra.mxu0 %v2050
    %2979 = vmatprep.subr.bf16.mxu0 %v2059
    %2980 = vmatpush1.bf16.msra.mxu0 %v2058
    %2981 = vmatprep.subr.bf16.mxu0 %v2067
    %2982 = vmatpush1.bf16.msra.mxu0 %v2066
    %2983 = vmatprep.subr.bf16.mxu0 %v2075
    %2984 = vmatpush1.bf16.msra.mxu0 %v2074
    %2985 = vmatprep.subr.bf16.mxu0 %v2083
    %2986 = vmatpush1.bf16.msra.mxu0 %v2082
    %2987 = vmatprep.subr.bf16.mxu0 %v2091
    %2988 = vmatpush1.bf16.msra.mxu0 %v2090
    %2989 = vmatprep.subr.bf16.mxu0 %v2099
    %2990 = vmatpush1.bf16.msra.mxu0 %v2098
    %2991 = vmatprep.subr.bf16.mxu0 %v2107
    %2992 = vmatpush1.bf16.msra.mxu0 %v2106
    %2993 = vmatprep.subr.bf16.mxu0 %v2115
    %2994 = vmatpush1.bf16.msra.mxu0 %v2114
    %2995 = vmatprep.subr.bf16.mxu0 %v2123
    %2996 = vmatpush1.bf16.msra.mxu0 %v2122
    %2997 = vmatprep.subr.bf16.mxu0 %v2131
    %2998 = vmatpush1.bf16.msra.mxu0 %v2130
    %2999 = vmatprep.mubr.bf16.mxu0 %v587
    %3000 = vmatmul.mubr.bf16.gmra.mrb[0].mxu0 %v573
    %v3001 = vpop.f32.mrb[0].mxu0
    %v3002 = vadd.f32 %v2961, %v3001
    %v3003 = vpop.f32.mrb[0].mxu0
    %v3004 = vadd.f32 %v2963, %v3003
    %v3005 = vpop.f32.mrb[0].mxu0
    %v3006 = vpop.f32.mrb[0].mxu0
    %3007 = vdwg.mxu0
    %v3008 = vmax.f32 %v2633, 0.0
    %v3009 = vmax.f32 %v2635, 0.0
    %v3010 = vmax.f32 %v2756, 0.0
    %v3011 = vmax.f32 %v2758, 0.0
    %v3012 = vmax.f32 %v2879, 0.0
    %v3013 = vmax.f32 %v2881, 0.0
    %v3014 = vmax.f32 %v3002, 0.0
    %v3015 = vmax.f32 %v3004, 0.0
    %v3016 = vpack.c.bf16 %v3008, %v3008
    %v3017 = vpack.c.bf16 %v3009, %v3009
    %v3018 = vpack.c.bf16 %v3010, %v3010
    %v3019 = vpack.c.bf16 %v3011, %v3011
    %v3020 = vpack.c.bf16 %v3012, %v3012
    %v3021 = vpack.c.bf16 %v3013, %v3013
    %v3022 = vpack.c.bf16 %v3014, %v3014
    %v3023 = vpack.c.bf16 %v3015, %v3015
    %v3024 = vld [vmem:[#allocation8] sm:$0xff]
    %v3025 = vld [vmem:[#allocation8 + $0x8] sm:$0xff]
    %v3026 = vld [vmem:[#allocation8 + $0x10] sm:$0xff]
    %v3027 = vld [vmem:[#allocation8 + $0x18] sm:$0xff]
    %v3028 = vld [vmem:[#allocation8 + $0x20] sm:$0xff]
    %v3029 = vld [vmem:[#allocation8 + $0x28] sm:$0xff]
    %v3030 = vld [vmem:[#allocation8 + $0x30] sm:$0xff]
    %v3031 = vld [vmem:[#allocation8 + $0x38] sm:$0xff]
    %v3032 = vld [vmem:[#allocation8 + $0x40] sm:$0xff]
    %v3033 = vld [vmem:[#allocation8 + $0x48] sm:$0xff]
    %v3034 = vld [vmem:[#allocation8 + $0x50] sm:$0xff]
    %v3035 = vld [vmem:[#allocation8 + $0x58] sm:$0xff]
    %v3036 = vld [vmem:[#allocation8 + $0x60] sm:$0xff]
    %v3037 = vld [vmem:[#allocation8 + $0x68] sm:$0xff]
    %v3038 = vld [vmem:[#allocation8 + $0x70] sm:$0xff]
    %v3039 = vld [vmem:[#allocation8 + $0x78] sm:$0xff]
    %v3040 = vld [vmem:[#allocation8 + $0x80] sm:$0xff]
    %v3041 = vld [vmem:[#allocation8 + $0x88] sm:$0xff]
    %v3042 = vld [vmem:[#allocation8 + $0x90] sm:$0xff]
    %v3043 = vld [vmem:[#allocation8 + $0x98] sm:$0xff]
    %v3044 = vld [vmem:[#allocation8 + $0xa0] sm:$0xff]
    %v3045 = vld [vmem:[#allocation8 + $0xa8] sm:$0xff]
    %v3046 = vld [vmem:[#allocation8 + $0xb0] sm:$0xff]
    %v3047 = vld [vmem:[#allocation8 + $0xb8] sm:$0xff]
    %v3048 = vld [vmem:[#allocation8 + $0xc0] sm:$0xff]
    %v3049 = vld [vmem:[#allocation8 + $0xc8] sm:$0xff]
    %v3050 = vld [vmem:[#allocation8 + $0xd0] sm:$0xff]
    %v3051 = vld [vmem:[#allocation8 + $0xd8] sm:$0xff]
    %v3052 = vld [vmem:[#allocation8 + $0xe0] sm:$0xff]
    %v3053 = vld [vmem:[#allocation8 + $0xe8] sm:$0xff]
    %v3054 = vld [vmem:[#allocation8 + $0xf0] sm:$0xff]
    %v3055 = vld [vmem:[#allocation8 + $0xf8] sm:$0xff]
    %v3056 = vld [vmem:[#allocation8 + $0x100] sm:$0xff]
    %v3057 = vld [vmem:[#allocation8 + $0x108] sm:$0xff]
    %v3058 = vld [vmem:[#allocation8 + $0x110] sm:$0xff]
    %v3059 = vld [vmem:[#allocation8 + $0x118] sm:$0xff]
    %v3060 = vld [vmem:[#allocation8 + $0x120] sm:$0xff]
    %v3061 = vld [vmem:[#allocation8 + $0x128] sm:$0xff]
    %v3062 = vld [vmem:[#allocation8 + $0x130] sm:$0xff]
    %v3063 = vld [vmem:[#allocation8 + $0x138] sm:$0xff]
    %v3064 = vld [vmem:[#allocation8 + $0x140] sm:$0xff]
    %v3065 = vld [vmem:[#allocation8 + $0x148] sm:$0xff]
    %v3066 = vld [vmem:[#allocation8 + $0x150] sm:$0xff]
    %v3067 = vld [vmem:[#allocation8 + $0x158] sm:$0xff]
    %v3068 = vld [vmem:[#allocation8 + $0x160] sm:$0xff]
    %v3069 = vld [vmem:[#allocation8 + $0x168] sm:$0xff]
    %v3070 = vld [vmem:[#allocation8 + $0x170] sm:$0xff]
    %v3071 = vld [vmem:[#allocation8 + $0x178] sm:$0xff]
    %v3072 = vld [vmem:[#allocation8 + $0x180] sm:$0xff]
    %v3073 = vld [vmem:[#allocation8 + $0x188] sm:$0xff]
    %v3074 = vld [vmem:[#allocation8 + $0x190] sm:$0xff]
    %v3075 = vld [vmem:[#allocation8 + $0x198] sm:$0xff]
    %v3076 = vld [vmem:[#allocation8 + $0x1a0] sm:$0xff]
    %v3077 = vld [vmem:[#allocation8 + $0x1a8] sm:$0xff]
    %v3078 = vld [vmem:[#allocation8 + $0x1b0] sm:$0xff]
    %v3079 = vld [vmem:[#allocation8 + $0x1b8] sm:$0xff]
    %v3080 = vld [vmem:[#allocation8 + $0x1c0] sm:$0xff]
    %v3081 = vld [vmem:[#allocation8 + $0x1c8] sm:$0xff]
    %v3082 = vld [vmem:[#allocation8 + $0x1d0] sm:$0xff]
    %v3083 = vld [vmem:[#allocation8 + $0x1d8] sm:$0xff]
    %v3084 = vld [vmem:[#allocation8 + $0x1e0] sm:$0xff]
    %v3085 = vld [vmem:[#allocation8 + $0x1e8] sm:$0xff]
    %v3086 = vld [vmem:[#allocation8 + $0x1f0] sm:$0xff]
    %v3087 = vld [vmem:[#allocation8 + $0x1f8] sm:$0xff]
    %v3088 = vld [vmem:[#allocation8 + $0x200] sm:$0xff]
    %v3089 = vld [vmem:[#allocation8 + $0x208] sm:$0xff]
    %v3090 = vld [vmem:[#allocation8 + $0x210] sm:$0xff]
    %v3091 = vld [vmem:[#allocation8 + $0x218] sm:$0xff]
    %v3092 = vld [vmem:[#allocation8 + $0x220] sm:$0xff]
    %v3093 = vld [vmem:[#allocation8 + $0x228] sm:$0xff]
    %v3094 = vld [vmem:[#allocation8 + $0x230] sm:$0xff]
    %v3095 = vld [vmem:[#allocation8 + $0x238] sm:$0xff]
    %v3096 = vld [vmem:[#allocation8 + $0x240] sm:$0xff]
    %v3097 = vld [vmem:[#allocation8 + $0x248] sm:$0xff]
    %v3098 = vld [vmem:[#allocation8 + $0x250] sm:$0xff]
    %v3099 = vld [vmem:[#allocation8 + $0x258] sm:$0xff]
    %v3100 = vld [vmem:[#allocation8 + $0x260] sm:$0xff]
    %v3101 = vld [vmem:[#allocation8 + $0x268] sm:$0xff]
    %v3102 = vld [vmem:[#allocation8 + $0x270] sm:$0xff]
    %v3103 = vld [vmem:[#allocation8 + $0x278] sm:$0xff]
    %v3104 = vld [vmem:[#allocation8 + $0x280] sm:$0xff]
    %v3105 = vld [vmem:[#allocation8 + $0x288] sm:$0xff]
    %v3106 = vld [vmem:[#allocation8 + $0x290] sm:$0xff]
    %v3107 = vld [vmem:[#allocation8 + $0x298] sm:$0xff]
    %v3108 = vld [vmem:[#allocation8 + $0x2a0] sm:$0xff]
    %v3109 = vld [vmem:[#allocation8 + $0x2a8] sm:$0xff]
    %v3110 = vld [vmem:[#allocation8 + $0x2b0] sm:$0xff]
    %v3111 = vld [vmem:[#allocation8 + $0x2b8] sm:$0xff]
    %v3112 = vld [vmem:[#allocation8 + $0x2c0] sm:$0xff]
    %v3113 = vld [vmem:[#allocation8 + $0x2c8] sm:$0xff]
    %v3114 = vld [vmem:[#allocation8 + $0x2d0] sm:$0xff]
    %v3115 = vld [vmem:[#allocation8 + $0x2d8] sm:$0xff]
    %v3116 = vld [vmem:[#allocation8 + $0x2e0] sm:$0xff]
    %v3117 = vld [vmem:[#allocation8 + $0x2e8] sm:$0xff]
    %v3118 = vld [vmem:[#allocation8 + $0x2f0] sm:$0xff]
    %v3119 = vld [vmem:[#allocation8 + $0x2f8] sm:$0xff]
    %v3120 = vld [vmem:[#allocation8 + $0x300] sm:$0xff]
    %v3121 = vld [vmem:[#allocation8 + $0x308] sm:$0xff]
    %v3122 = vld [vmem:[#allocation8 + $0x310] sm:$0xff]
    %v3123 = vld [vmem:[#allocation8 + $0x318] sm:$0xff]
    %v3124 = vld [vmem:[#allocation8 + $0x320] sm:$0xff]
    %v3125 = vld [vmem:[#allocation8 + $0x328] sm:$0xff]
    %v3126 = vld [vmem:[#allocation8 + $0x330] sm:$0xff]
    %v3127 = vld [vmem:[#allocation8 + $0x338] sm:$0xff]
    %v3128 = vld [vmem:[#allocation8 + $0x340] sm:$0xff]
    %v3129 = vld [vmem:[#allocation8 + $0x348] sm:$0xff]
    %v3130 = vld [vmem:[#allocation8 + $0x350] sm:$0xff]
    %v3131 = vld [vmem:[#allocation8 + $0x358] sm:$0xff]
    %v3132 = vld [vmem:[#allocation8 + $0x360] sm:$0xff]
    %v3133 = vld [vmem:[#allocation8 + $0x368] sm:$0xff]
    %v3134 = vld [vmem:[#allocation8 + $0x370] sm:$0xff]
    %v3135 = vld [vmem:[#allocation8 + $0x378] sm:$0xff]
    %v3136 = vld [vmem:[#allocation8 + $0x380] sm:$0xff]
    %v3137 = vld [vmem:[#allocation8 + $0x388] sm:$0xff]
    %v3138 = vld [vmem:[#allocation8 + $0x390] sm:$0xff]
    %v3139 = vld [vmem:[#allocation8 + $0x398] sm:$0xff]
    %v3140 = vld [vmem:[#allocation8 + $0x3a0] sm:$0xff]
    %v3141 = vld [vmem:[#allocation8 + $0x3a8] sm:$0xff]
    %v3142 = vld [vmem:[#allocation8 + $0x3b0] sm:$0xff]
    %v3143 = vld [vmem:[#allocation8 + $0x3b8] sm:$0xff]
    %v3144 = vld [vmem:[#allocation8 + $0x3c0] sm:$0xff]
    %v3145 = vld [vmem:[#allocation8 + $0x3c8] sm:$0xff]
    %v3146 = vld [vmem:[#allocation8 + $0x3d0] sm:$0xff]
    %v3147 = vld [vmem:[#allocation8 + $0x3d8] sm:$0xff]
    %v3148 = vld [vmem:[#allocation8 + $0x3e0] sm:$0xff]
    %v3149 = vld [vmem:[#allocation8 + $0x3e8] sm:$0xff]
    %v3150 = vld [vmem:[#allocation8 + $0x3f0] sm:$0xff]
    %v3151 = vld [vmem:[#allocation8 + $0x3f8] sm:$0xff]
    %v3152 = vld [vmem:[#allocation10] sm:$0x3]
    %v3154 = vlaneseq
    %v3155 = vshrl.u32 %v3154, 7
    %v3156 = vsub.s32 0, %v3155
    %v3157 = vrot.slane %v3152, %v3156
    %v3158 = vlaneseq
    %v3159 = vshrl.u32 %v3158, 7
    %v3160 = vsub.s32 1, %v3159
    %v3161 = vrot.slane %v3152, %v3160
    %v3292 = vunpack.c.l.b16 %v3024
    %v3293 = vunpack.c.h.b16 %v3024
    %v3294 = vunpack.c.l.b16 %v3025
    %v3295 = vunpack.c.h.b16 %v3025
    %v3296 = vunpack.c.l.b16 %v3026
    %v3297 = vunpack.c.h.b16 %v3026
    %v3298 = vunpack.c.l.b16 %v3027
    %v3299 = vunpack.c.h.b16 %v3027
    %v3300 = vunpack.c.l.b16 %v3028
    %v3301 = vunpack.c.h.b16 %v3028
    %v3302 = vunpack.c.l.b16 %v3029
    %v3303 = vunpack.c.h.b16 %v3029
    %v3304 = vunpack.c.l.b16 %v3030
    %v3305 = vunpack.c.h.b16 %v3030
    %v3306 = vunpack.c.l.b16 %v3031
    %v3307 = vunpack.c.h.b16 %v3031
    %v3308 = vunpack.c.l.b16 %v3032
    %v3309 = vunpack.c.h.b16 %v3032
    %v3310 = vunpack.c.l.b16 %v3033
    %v3311 = vunpack.c.h.b16 %v3033
    %v3312 = vunpack.c.l.b16 %v3034
    %v3313 = vunpack.c.h.b16 %v3034
    %v3314 = vunpack.c.l.b16 %v3035
    %v3315 = vunpack.c.h.b16 %v3035
    %v3316 = vunpack.c.l.b16 %v3036
    %v3317 = vunpack.c.h.b16 %v3036
    %v3318 = vunpack.c.l.b16 %v3037
    %v3319 = vunpack.c.h.b16 %v3037
    %v3320 = vunpack.c.l.b16 %v3038
    %v3321 = vunpack.c.h.b16 %v3038
    %v3322 = vunpack.c.l.b16 %v3039
    %v3323 = vunpack.c.h.b16 %v3039
    %v3324 = vunpack.c.l.b16 %v3040
    %v3325 = vunpack.c.h.b16 %v3040
    %v3326 = vunpack.c.l.b16 %v3041
    %v3327 = vunpack.c.h.b16 %v3041
    %v3328 = vunpack.c.l.b16 %v3042
    %v3329 = vunpack.c.h.b16 %v3042
    %v3330 = vunpack.c.l.b16 %v3043
    %v3331 = vunpack.c.h.b16 %v3043
    %v3332 = vunpack.c.l.b16 %v3044
    %v3333 = vunpack.c.h.b16 %v3044
    %v3334 = vunpack.c.l.b16 %v3045
    %v3335 = vunpack.c.h.b16 %v3045
    %v3336 = vunpack.c.l.b16 %v3046
    %v3337 = vunpack.c.h.b16 %v3046
    %v3338 = vunpack.c.l.b16 %v3047
    %v3339 = vunpack.c.h.b16 %v3047
    %v3340 = vunpack.c.l.b16 %v3048
    %v3341 = vunpack.c.h.b16 %v3048
    %v3342 = vunpack.c.l.b16 %v3049
    %v3343 = vunpack.c.h.b16 %v3049
    %v3344 = vunpack.c.l.b16 %v3050
    %v3345 = vunpack.c.h.b16 %v3050
    %v3346 = vunpack.c.l.b16 %v3051
    %v3347 = vunpack.c.h.b16 %v3051
    %v3348 = vunpack.c.l.b16 %v3052
    %v3349 = vunpack.c.h.b16 %v3052
    %v3350 = vunpack.c.l.b16 %v3053
    %v3351 = vunpack.c.h.b16 %v3053
    %v3352 = vunpack.c.l.b16 %v3054
    %v3353 = vunpack.c.h.b16 %v3054
    %v3354 = vunpack.c.l.b16 %v3055
    %v3355 = vunpack.c.h.b16 %v3055
    %v3356 = vunpack.c.l.b16 %v3056
    %v3357 = vunpack.c.h.b16 %v3056
    %v3358 = vunpack.c.l.b16 %v3057
    %v3359 = vunpack.c.h.b16 %v3057
    %v3360 = vunpack.c.l.b16 %v3058
    %v3361 = vunpack.c.h.b16 %v3058
    %v3362 = vunpack.c.l.b16 %v3059
    %v3363 = vunpack.c.h.b16 %v3059
    %v3364 = vunpack.c.l.b16 %v3060
    %v3365 = vunpack.c.h.b16 %v3060
    %v3366 = vunpack.c.l.b16 %v3061
    %v3367 = vunpack.c.h.b16 %v3061
    %v3368 = vunpack.c.l.b16 %v3062
    %v3369 = vunpack.c.h.b16 %v3062
    %v3370 = vunpack.c.l.b16 %v3063
    %v3371 = vunpack.c.h.b16 %v3063
    %v3372 = vunpack.c.l.b16 %v3064
    %v3373 = vunpack.c.h.b16 %v3064
    %v3374 = vunpack.c.l.b16 %v3065
    %v3375 = vunpack.c.h.b16 %v3065
    %v3376 = vunpack.c.l.b16 %v3066
    %v3377 = vunpack.c.h.b16 %v3066
    %v3378 = vunpack.c.l.b16 %v3067
    %v3379 = vunpack.c.h.b16 %v3067
    %v3380 = vunpack.c.l.b16 %v3068
    %v3381 = vunpack.c.h.b16 %v3068
    %v3382 = vunpack.c.l.b16 %v3069
    %v3383 = vunpack.c.h.b16 %v3069
    %v3384 = vunpack.c.l.b16 %v3070
    %v3385 = vunpack.c.h.b16 %v3070
    %v3386 = vunpack.c.l.b16 %v3071
    %v3387 = vunpack.c.h.b16 %v3071
    %v3388 = vunpack.c.l.b16 %v3072
    %v3389 = vunpack.c.h.b16 %v3072
    %v3390 = vunpack.c.l.b16 %v3073
    %v3391 = vunpack.c.h.b16 %v3073
    %v3392 = vunpack.c.l.b16 %v3074
    %v3393 = vunpack.c.h.b16 %v3074
    %v3394 = vunpack.c.l.b16 %v3075
    %v3395 = vunpack.c.h.b16 %v3075
    %v3396 = vunpack.c.l.b16 %v3076
    %v3397 = vunpack.c.h.b16 %v3076
    %v3398 = vunpack.c.l.b16 %v3077
    %v3399 = vunpack.c.h.b16 %v3077
    %v3400 = vunpack.c.l.b16 %v3078
    %v3401 = vunpack.c.h.b16 %v3078
    %v3402 = vunpack.c.l.b16 %v3079
    %v3403 = vunpack.c.h.b16 %v3079
    %v3404 = vunpack.c.l.b16 %v3080
    %v3405 = vunpack.c.h.b16 %v3080
    %v3406 = vunpack.c.l.b16 %v3081
    %v3407 = vunpack.c.h.b16 %v3081
    %v3408 = vunpack.c.l.b16 %v3082
    %v3409 = vunpack.c.h.b16 %v3082
    %v3410 = vunpack.c.l.b16 %v3083
    %v3411 = vunpack.c.h.b16 %v3083
    %v3412 = vunpack.c.l.b16 %v3084
    %v3413 = vunpack.c.h.b16 %v3084
    %v3414 = vunpack.c.l.b16 %v3085
    %v3415 = vunpack.c.h.b16 %v3085
    %v3416 = vunpack.c.l.b16 %v3086
    %v3417 = vunpack.c.h.b16 %v3086
    %v3418 = vunpack.c.l.b16 %v3087
    %v3419 = vunpack.c.h.b16 %v3087
    %v3420 = vunpack.c.l.b16 %v3088
    %v3421 = vunpack.c.h.b16 %v3088
    %v3422 = vunpack.c.l.b16 %v3089
    %v3423 = vunpack.c.h.b16 %v3089
    %v3424 = vunpack.c.l.b16 %v3090
    %v3425 = vunpack.c.h.b16 %v3090
    %v3426 = vunpack.c.l.b16 %v3091
    %v3427 = vunpack.c.h.b16 %v3091
    %v3428 = vunpack.c.l.b16 %v3092
    %v3429 = vunpack.c.h.b16 %v3092
    %v3430 = vunpack.c.l.b16 %v3093
    %v3431 = vunpack.c.h.b16 %v3093
    %v3432 = vunpack.c.l.b16 %v3094
    %v3433 = vunpack.c.h.b16 %v3094
    %v3434 = vunpack.c.l.b16 %v3095
    %v3435 = vunpack.c.h.b16 %v3095
    %v3436 = vunpack.c.l.b16 %v3096
    %v3437 = vunpack.c.h.b16 %v3096
    %v3438 = vunpack.c.l.b16 %v3097
    %v3439 = vunpack.c.h.b16 %v3097
    %v3440 = vunpack.c.l.b16 %v3098
    %v3441 = vunpack.c.h.b16 %v3098
    %v3442 = vunpack.c.l.b16 %v3099
    %v3443 = vunpack.c.h.b16 %v3099
    %v3444 = vunpack.c.l.b16 %v3100
    %v3445 = vunpack.c.h.b16 %v3100
    %v3446 = vunpack.c.l.b16 %v3101
    %v3447 = vunpack.c.h.b16 %v3101
    %v3448 = vunpack.c.l.b16 %v3102
    %v3449 = vunpack.c.h.b16 %v3102
    %v3450 = vunpack.c.l.b16 %v3103
    %v3451 = vunpack.c.h.b16 %v3103
    %v3452 = vunpack.c.l.b16 %v3104
    %v3453 = vunpack.c.h.b16 %v3104
    %v3454 = vunpack.c.l.b16 %v3105
    %v3455 = vunpack.c.h.b16 %v3105
    %v3456 = vunpack.c.l.b16 %v3106
    %v3457 = vunpack.c.h.b16 %v3106
    %v3458 = vunpack.c.l.b16 %v3107
    %v3459 = vunpack.c.h.b16 %v3107
    %v3460 = vunpack.c.l.b16 %v3108
    %v3461 = vunpack.c.h.b16 %v3108
    %v3462 = vunpack.c.l.b16 %v3109
    %v3463 = vunpack.c.h.b16 %v3109
    %v3464 = vunpack.c.l.b16 %v3110
    %v3465 = vunpack.c.h.b16 %v3110
    %v3466 = vunpack.c.l.b16 %v3111
    %v3467 = vunpack.c.h.b16 %v3111
    %v3468 = vunpack.c.l.b16 %v3112
    %v3469 = vunpack.c.h.b16 %v3112
    %v3470 = vunpack.c.l.b16 %v3113
    %v3471 = vunpack.c.h.b16 %v3113
    %v3472 = vunpack.c.l.b16 %v3114
    %v3473 = vunpack.c.h.b16 %v3114
    %v3474 = vunpack.c.l.b16 %v3115
    %v3475 = vunpack.c.h.b16 %v3115
    %v3476 = vunpack.c.l.b16 %v3116
    %v3477 = vunpack.c.h.b16 %v3116
    %v3478 = vunpack.c.l.b16 %v3117
    %v3479 = vunpack.c.h.b16 %v3117
    %v3480 = vunpack.c.l.b16 %v3118
    %v3481 = vunpack.c.h.b16 %v3118
    %v3482 = vunpack.c.l.b16 %v3119
    %v3483 = vunpack.c.h.b16 %v3119
    %v3484 = vunpack.c.l.b16 %v3120
    %v3485 = vunpack.c.h.b16 %v3120
    %v3486 = vunpack.c.l.b16 %v3121
    %v3487 = vunpack.c.h.b16 %v3121
    %v3488 = vunpack.c.l.b16 %v3122
    %v3489 = vunpack.c.h.b16 %v3122
    %v3490 = vunpack.c.l.b16 %v3123
    %v3491 = vunpack.c.h.b16 %v3123
    %v3492 = vunpack.c.l.b16 %v3124
    %v3493 = vunpack.c.h.b16 %v3124
    %v3494 = vunpack.c.l.b16 %v3125
    %v3495 = vunpack.c.h.b16 %v3125
    %v3496 = vunpack.c.l.b16 %v3126
    %v3497 = vunpack.c.h.b16 %v3126
    %v3498 = vunpack.c.l.b16 %v3127
    %v3499 = vunpack.c.h.b16 %v3127
    %v3500 = vunpack.c.l.b16 %v3128
    %v3501 = vunpack.c.h.b16 %v3128
    %v3502 = vunpack.c.l.b16 %v3129
    %v3503 = vunpack.c.h.b16 %v3129
    %v3504 = vunpack.c.l.b16 %v3130
    %v3505 = vunpack.c.h.b16 %v3130
    %v3506 = vunpack.c.l.b16 %v3131
    %v3507 = vunpack.c.h.b16 %v3131
    %v3508 = vunpack.c.l.b16 %v3132
    %v3509 = vunpack.c.h.b16 %v3132
    %v3510 = vunpack.c.l.b16 %v3133
    %v3511 = vunpack.c.h.b16 %v3133
    %v3512 = vunpack.c.l.b16 %v3134
    %v3513 = vunpack.c.h.b16 %v3134
    %v3514 = vunpack.c.l.b16 %v3135
    %v3515 = vunpack.c.h.b16 %v3135
    %v3516 = vunpack.c.l.b16 %v3136
    %v3517 = vunpack.c.h.b16 %v3136
    %v3518 = vunpack.c.l.b16 %v3137
    %v3519 = vunpack.c.h.b16 %v3137
    %v3520 = vunpack.c.l.b16 %v3138
    %v3521 = vunpack.c.h.b16 %v3138
    %v3522 = vunpack.c.l.b16 %v3139
    %v3523 = vunpack.c.h.b16 %v3139
    %v3524 = vunpack.c.l.b16 %v3140
    %v3525 = vunpack.c.h.b16 %v3140
    %v3526 = vunpack.c.l.b16 %v3141
    %v3527 = vunpack.c.h.b16 %v3141
    %v3528 = vunpack.c.l.b16 %v3142
    %v3529 = vunpack.c.h.b16 %v3142
    %v3530 = vunpack.c.l.b16 %v3143
    %v3531 = vunpack.c.h.b16 %v3143
    %v3532 = vunpack.c.l.b16 %v3144
    %v3533 = vunpack.c.h.b16 %v3144
    %v3534 = vunpack.c.l.b16 %v3145
    %v3535 = vunpack.c.h.b16 %v3145
    %v3536 = vunpack.c.l.b16 %v3146
    %v3537 = vunpack.c.h.b16 %v3146
    %v3538 = vunpack.c.l.b16 %v3147
    %v3539 = vunpack.c.h.b16 %v3147
    %v3540 = vunpack.c.l.b16 %v3148
    %v3541 = vunpack.c.h.b16 %v3148
    %v3542 = vunpack.c.l.b16 %v3149
    %v3543 = vunpack.c.h.b16 %v3149
    %v3544 = vunpack.c.l.b16 %v3150
    %v3545 = vunpack.c.h.b16 %v3150
    %v3546 = vunpack.c.l.b16 %v3151
    %v3547 = vunpack.c.h.b16 %v3151
    %v3548 = vpack.c.b16 %v3294, %v3292
    %v3549 = vpack.c.b16 %v3295, %v3293
    %v3550 = vpack.c.b16 %v3298, %v3296
    %v3551 = vpack.c.b16 %v3299, %v3297
    %v3552 = vpack.c.b16 %v3302, %v3300
    %v3553 = vpack.c.b16 %v3303, %v3301
    %v3554 = vpack.c.b16 %v3306, %v3304
    %v3555 = vpack.c.b16 %v3307, %v3305
    %v3556 = vpack.c.b16 %v3310, %v3308
    %v3557 = vpack.c.b16 %v3311, %v3309
    %v3558 = vpack.c.b16 %v3314, %v3312
    %v3559 = vpack.c.b16 %v3315, %v3313
    %v3560 = vpack.c.b16 %v3318, %v3316
    %v3561 = vpack.c.b16 %v3319, %v3317
    %v3562 = vpack.c.b16 %v3322, %v3320
    %v3563 = vpack.c.b16 %v3323, %v3321
    %v3564 = vpack.c.b16 %v3326, %v3324
    %v3565 = vpack.c.b16 %v3327, %v3325
    %v3566 = vpack.c.b16 %v3330, %v3328
    %v3567 = vpack.c.b16 %v3331, %v3329
    %v3568 = vpack.c.b16 %v3334, %v3332
    %v3569 = vpack.c.b16 %v3335, %v3333
    %v3570 = vpack.c.b16 %v3338, %v3336
    %v3571 = vpack.c.b16 %v3339, %v3337
    %v3572 = vpack.c.b16 %v3342, %v3340
    %v3573 = vpack.c.b16 %v3343, %v3341
    %v3574 = vpack.c.b16 %v3346, %v3344
    %v3575 = vpack.c.b16 %v3347, %v3345
    %v3576 = vpack.c.b16 %v3350, %v3348
    %v3577 = vpack.c.b16 %v3351, %v3349
    %v3578 = vpack.c.b16 %v3354, %v3352
    %v3579 = vpack.c.b16 %v3355, %v3353
    %v3580 = vpack.c.b16 %v3358, %v3356
    %v3581 = vpack.c.b16 %v3359, %v3357
    %v3582 = vpack.c.b16 %v3362, %v3360
    %v3583 = vpack.c.b16 %v3363, %v3361
    %v3584 = vpack.c.b16 %v3366, %v3364
    %v3585 = vpack.c.b16 %v3367, %v3365
    %v3586 = vpack.c.b16 %v3370, %v3368
    %v3587 = vpack.c.b16 %v3371, %v3369
    %v3588 = vpack.c.b16 %v3374, %v3372
    %v3589 = vpack.c.b16 %v3375, %v3373
    %v3590 = vpack.c.b16 %v3378, %v3376
    %v3591 = vpack.c.b16 %v3379, %v3377
    %v3592 = vpack.c.b16 %v3382, %v3380
    %v3593 = vpack.c.b16 %v3383, %v3381
    %v3594 = vpack.c.b16 %v3386, %v3384
    %v3595 = vpack.c.b16 %v3387, %v3385
    %v3596 = vpack.c.b16 %v3390, %v3388
    %v3597 = vpack.c.b16 %v3391, %v3389
    %v3598 = vpack.c.b16 %v3394, %v3392
    %v3599 = vpack.c.b16 %v3395, %v3393
    %v3600 = vpack.c.b16 %v3398, %v3396
    %v3601 = vpack.c.b16 %v3399, %v3397
    %v3602 = vpack.c.b16 %v3402, %v3400
    %v3603 = vpack.c.b16 %v3403, %v3401
    %v3604 = vpack.c.b16 %v3406, %v3404
    %v3605 = vpack.c.b16 %v3407, %v3405
    %v3606 = vpack.c.b16 %v3410, %v3408
    %v3607 = vpack.c.b16 %v3411, %v3409
    %v3608 = vpack.c.b16 %v3414, %v3412
    %v3609 = vpack.c.b16 %v3415, %v3413
    %v3610 = vpack.c.b16 %v3418, %v3416
    %v3611 = vpack.c.b16 %v3419, %v3417
    %v3612 = vpack.c.b16 %v3422, %v3420
    %v3613 = vpack.c.b16 %v3423, %v3421
    %v3614 = vpack.c.b16 %v3426, %v3424
    %v3615 = vpack.c.b16 %v3427, %v3425
    %v3616 = vpack.c.b16 %v3430, %v3428
    %v3617 = vpack.c.b16 %v3431, %v3429
    %v3618 = vpack.c.b16 %v3434, %v3432
    %v3619 = vpack.c.b16 %v3435, %v3433
    %v3620 = vpack.c.b16 %v3438, %v3436
    %v3621 = vpack.c.b16 %v3439, %v3437
    %v3622 = vpack.c.b16 %v3442, %v3440
    %v3623 = vpack.c.b16 %v3443, %v3441
    %v3624 = vpack.c.b16 %v3446, %v3444
    %v3625 = vpack.c.b16 %v3447, %v3445
    %v3626 = vpack.c.b16 %v3450, %v3448
    %v3627 = vpack.c.b16 %v3451, %v3449
    %v3628 = vpack.c.b16 %v3454, %v3452
    %v3629 = vpack.c.b16 %v3455, %v3453
    %v3630 = vpack.c.b16 %v3458, %v3456
    %v3631 = vpack.c.b16 %v3459, %v3457
    %v3632 = vpack.c.b16 %v3462, %v3460
    %v3633 = vpack.c.b16 %v3463, %v3461
    %v3634 = vpack.c.b16 %v3466, %v3464
    %v3635 = vpack.c.b16 %v3467, %v3465
    %v3636 = vpack.c.b16 %v3470, %v3468
    %v3637 = vpack.c.b16 %v3471, %v3469
    %v3638 = vpack.c.b16 %v3474, %v3472
    %v3639 = vpack.c.b16 %v3475, %v3473
    %v3640 = vpack.c.b16 %v3478, %v3476
    %v3641 = vpack.c.b16 %v3479, %v3477
    %v3642 = vpack.c.b16 %v3482, %v3480
    %v3643 = vpack.c.b16 %v3483, %v3481
    %v3644 = vpack.c.b16 %v3486, %v3484
    %v3645 = vpack.c.b16 %v3487, %v3485
    %v3646 = vpack.c.b16 %v3490, %v3488
    %v3647 = vpack.c.b16 %v3491, %v3489
    %v3648 = vpack.c.b16 %v3494, %v3492
    %v3649 = vpack.c.b16 %v3495, %v3493
    %v3650 = vpack.c.b16 %v3498, %v3496
    %v3651 = vpack.c.b16 %v3499, %v3497
    %v3652 = vpack.c.b16 %v3502, %v3500
    %v3653 = vpack.c.b16 %v3503, %v3501
    %v3654 = vpack.c.b16 %v3506, %v3504
    %v3655 = vpack.c.b16 %v3507, %v3505
    %v3656 = vpack.c.b16 %v3510, %v3508
    %v3657 = vpack.c.b16 %v3511, %v3509
    %v3658 = vpack.c.b16 %v3514, %v3512
    %v3659 = vpack.c.b16 %v3515, %v3513
    %v3660 = vpack.c.b16 %v3518, %v3516
    %v3661 = vpack.c.b16 %v3519, %v3517
    %v3662 = vpack.c.b16 %v3522, %v3520
    %v3663 = vpack.c.b16 %v3523, %v3521
    %v3664 = vpack.c.b16 %v3526, %v3524
    %v3665 = vpack.c.b16 %v3527, %v3525
    %v3666 = vpack.c.b16 %v3530, %v3528
    %v3667 = vpack.c.b16 %v3531, %v3529
    %v3668 = vpack.c.b16 %v3534, %v3532
    %v3669 = vpack.c.b16 %v3535, %v3533
    %v3670 = vpack.c.b16 %v3538, %v3536
    %v3671 = vpack.c.b16 %v3539, %v3537
    %v3672 = vpack.c.b16 %v3542, %v3540
    %v3673 = vpack.c.b16 %v3543, %v3541
    %v3674 = vpack.c.b16 %v3546, %v3544
    %v3675 = vpack.c.b16 %v3547, %v3545
    %3804 = vmatprep.subr.bf16.mxu0 %v3549
    %3805 = vmatpush1.bf16.msra.mxu0 %v3548
    %3806 = vmatprep.subr.bf16.mxu0 %v3551
    %3807 = vmatpush1.bf16.msra.mxu0 %v3550
    %3808 = vmatprep.subr.bf16.mxu0 %v3553
    %3809 = vmatpush1.bf16.msra.mxu0 %v3552
    %3810 = vmatprep.subr.bf16.mxu0 %v3555
    %3811 = vmatpush1.bf16.msra.mxu0 %v3554
    %3812 = vmatprep.subr.bf16.mxu0 %v3557
    %3813 = vmatpush1.bf16.msra.mxu0 %v3556
    %3814 = vmatprep.subr.bf16.mxu0 %v3559
    %3815 = vmatpush1.bf16.msra.mxu0 %v3558
    %3816 = vmatprep.subr.bf16.mxu0 %v3561
    %3817 = vmatpush1.bf16.msra.mxu0 %v3560
    %3818 = vmatprep.subr.bf16.mxu0 %v3563
    %3819 = vmatpush1.bf16.msra.mxu0 %v3562
    %3820 = vmatprep.subr.bf16.mxu0 %v3565
    %3821 = vmatpush1.bf16.msra.mxu0 %v3564
    %3822 = vmatprep.subr.bf16.mxu0 %v3567
    %3823 = vmatpush1.bf16.msra.mxu0 %v3566
    %3824 = vmatprep.subr.bf16.mxu0 %v3569
    %3825 = vmatpush1.bf16.msra.mxu0 %v3568
    %3826 = vmatprep.subr.bf16.mxu0 %v3571
    %3827 = vmatpush1.bf16.msra.mxu0 %v3570
    %3828 = vmatprep.subr.bf16.mxu0 %v3573
    %3829 = vmatpush1.bf16.msra.mxu0 %v3572
    %3830 = vmatprep.subr.bf16.mxu0 %v3575
    %3831 = vmatpush1.bf16.msra.mxu0 %v3574
    %3832 = vmatprep.subr.bf16.mxu0 %v3577
    %3833 = vmatpush1.bf16.msra.mxu0 %v3576
    %3834 = vmatprep.subr.bf16.mxu0 %v3579
    %3835 = vmatpush1.bf16.msra.mxu0 %v3578
    %3836 = vmatprep.mubr.bf16.mxu0 %v3017
    %3837 = vmatmul.mubr.bf16.gmra.mrb[0].mxu0 %v3016
    %v3838 = vpop.f32.mrb[0].mxu0
    %v3839 = vadd.f32 %v3157, %v3838
    %v3840 = vpop.f32.mrb[0].mxu0
    %v3841 = vadd.f32 %v3161, %v3840
    %v3842 = vpop.f32.mrb[0].mxu0
    %v3843 = vpop.f32.mrb[0].mxu0
    %3844 = vdwg.mxu0
    %3845 = vmatprep.subr.bf16.mxu0 %v3581
    %3846 = vmatpush1.bf16.msra.mxu0 %v3580
    %3847 = vmatprep.subr.bf16.mxu0 %v3583
    %3848 = vmatpush1.bf16.msra.mxu0 %v3582
    %3849 = vmatprep.subr.bf16.mxu0 %v3585
    %3850 = vmatpush1.bf16.msra.mxu0 %v3584
    %3851 = vmatprep.subr.bf16.mxu0 %v3587
    %3852 = vmatpush1.bf16.msra.mxu0 %v3586
    %3853 = vmatprep.subr.bf16.mxu0 %v3589
    %3854 = vmatpush1.bf16.msra.mxu0 %v3588
    %3855 = vmatprep.subr.bf16.mxu0 %v3591
    %3856 = vmatpush1.bf16.msra.mxu0 %v3590
    %3857 = vmatprep.subr.bf16.mxu0 %v3593
    %3858 = vmatpush1.bf16.msra.mxu0 %v3592
    %3859 = vmatprep.subr.bf16.mxu0 %v3595
    %3860 = vmatpush1.bf16.msra.mxu0 %v3594
    %3861 = vmatprep.subr.bf16.mxu0 %v3597
    %3862 = vmatpush1.bf16.msra.mxu0 %v3596
    %3863 = vmatprep.subr.bf16.mxu0 %v3599
    %3864 = vmatpush1.bf16.msra.mxu0 %v3598
    %3865 = vmatprep.subr.bf16.mxu0 %v3601
    %3866 = vmatpush1.bf16.msra.mxu0 %v3600
    %3867 = vmatprep.subr.bf16.mxu0 %v3603
    %3868 = vmatpush1.bf16.msra.mxu0 %v3602
    %3869 = vmatprep.subr.bf16.mxu0 %v3605
    %3870 = vmatpush1.bf16.msra.mxu0 %v3604
    %3871 = vmatprep.subr.bf16.mxu0 %v3607
    %3872 = vmatpush1.bf16.msra.mxu0 %v3606
    %3873 = vmatprep.subr.bf16.mxu0 %v3609
    %3874 = vmatpush1.bf16.msra.mxu0 %v3608
    %3875 = vmatprep.subr.bf16.mxu0 %v3611
    %3876 = vmatpush1.bf16.msra.mxu0 %v3610
    %3877 = vmatprep.mubr.bf16.mxu0 %v3019
    %3878 = vmatmul.mubr.bf16.gmra.mrb[0].mxu0 %v3018
    %v3879 = vpop.f32.mrb[0].mxu0
    %v3880 = vadd.f32 %v3839, %v3879
    %v3881 = vpop.f32.mrb[0].mxu0
    %v3882 = vadd.f32 %v3841, %v3881
    %v3883 = vpop.f32.mrb[0].mxu0
    %v3884 = vpop.f32.mrb[0].mxu0
    %3885 = vdwg.mxu0
    %3886 = vmatprep.subr.bf16.mxu0 %v3613
    %3887 = vmatpush1.bf16.msra.mxu0 %v3612
    %3888 = vmatprep.subr.bf16.mxu0 %v3615
    %3889 = vmatpush1.bf16.msra.mxu0 %v3614
    %3890 = vmatprep.subr.bf16.mxu0 %v3617
    %3891 = vmatpush1.bf16.msra.mxu0 %v3616
    %3892 = vmatprep.subr.bf16.mxu0 %v3619
    %3893 = vmatpush1.bf16.msra.mxu0 %v3618
    %3894 = vmatprep.subr.bf16.mxu0 %v3621
    %3895 = vmatpush1.bf16.msra.mxu0 %v3620
    %3896 = vmatprep.subr.bf16.mxu0 %v3623
    %3897 = vmatpush1.bf16.msra.mxu0 %v3622
    %3898 = vmatprep.subr.bf16.mxu0 %v3625
    %3899 = vmatpush1.bf16.msra.mxu0 %v3624
    %3900 = vmatprep.subr.bf16.mxu0 %v3627
    %3901 = vmatpush1.bf16.msra.mxu0 %v3626
    %3902 = vmatprep.subr.bf16.mxu0 %v3629
    %3903 = vmatpush1.bf16.msra.mxu0 %v3628
    %3904 = vmatprep.subr.bf16.mxu0 %v3631
    %3905 = vmatpush1.bf16.msra.mxu0 %v3630
    %3906 = vmatprep.subr.bf16.mxu0 %v3633
    %3907 = vmatpush1.bf16.msra.mxu0 %v3632
    %3908 = vmatprep.subr.bf16.mxu0 %v3635
    %3909 = vmatpush1.bf16.msra.mxu0 %v3634
    %3910 = vmatprep.subr.bf16.mxu0 %v3637
    %3911 = vmatpush1.bf16.msra.mxu0 %v3636
    %3912 = vmatprep.subr.bf16.mxu0 %v3639
    %3913 = vmatpush1.bf16.msra.mxu0 %v3638
    %3914 = vmatprep.subr.bf16.mxu0 %v3641
    %3915 = vmatpush1.bf16.msra.mxu0 %v3640
    %3916 = vmatprep.subr.bf16.mxu0 %v3643
    %3917 = vmatpush1.bf16.msra.mxu0 %v3642
    %3918 = vmatprep.mubr.bf16.mxu0 %v3021
    %3919 = vmatmul.mubr.bf16.gmra.mrb[0].mxu0 %v3020
    %v3920 = vpop.f32.mrb[0].mxu0
    %v3921 = vadd.f32 %v3880, %v3920
    %v3922 = vpop.f32.mrb[0].mxu0
    %v3923 = vadd.f32 %v3882, %v3922
    %v3924 = vpop.f32.mrb[0].mxu0
    %v3925 = vpop.f32.mrb[0].mxu0
    %3926 = vdwg.mxu0
    %3927 = vmatprep.subr.bf16.mxu0 %v3645
    %3928 = vmatpush1.bf16.msra.mxu0 %v3644
    %3929 = vmatprep.subr.bf16.mxu0 %v3647
    %3930 = vmatpush1.bf16.msra.mxu0 %v3646
    %3931 = vmatprep.subr.bf16.mxu0 %v3649
    %3932 = vmatpush1.bf16.msra.mxu0 %v3648
    %3933 = vmatprep.subr.bf16.mxu0 %v3651
    %3934 = vmatpush1.bf16.msra.mxu0 %v3650
    %3935 = vmatprep.subr.bf16.mxu0 %v3653
    %3936 = vmatpush1.bf16.msra.mxu0 %v3652
    %3937 = vmatprep.subr.bf16.mxu0 %v3655
    %3938 = vmatpush1.bf16.msra.mxu0 %v3654
    %3939 = vmatprep.subr.bf16.mxu0 %v3657
    %3940 = vmatpush1.bf16.msra.mxu0 %v3656
    %3941 = vmatprep.subr.bf16.mxu0 %v3659
    %3942 = vmatpush1.bf16.msra.mxu0 %v3658
    %3943 = vmatprep.subr.bf16.mxu0 %v3661
    %3944 = vmatpush1.bf16.msra.mxu0 %v3660
    %3945 = vmatprep.subr.bf16.mxu0 %v3663
    %3946 = vmatpush1.bf16.msra.mxu0 %v3662
    %3947 = vmatprep.subr.bf16.mxu0 %v3665
    %3948 = vmatpush1.bf16.msra.mxu0 %v3664
    %3949 = vmatprep.subr.bf16.mxu0 %v3667
    %3950 = vmatpush1.bf16.msra.mxu0 %v3666
    %3951 = vmatprep.subr.bf16.mxu0 %v3669
    %3952 = vmatpush1.bf16.msra.mxu0 %v3668
    %3953 = vmatprep.subr.bf16.mxu0 %v3671
    %3954 = vmatpush1.bf16.msra.mxu0 %v3670
    %3955 = vmatprep.subr.bf16.mxu0 %v3673
    %3956 = vmatpush1.bf16.msra.mxu0 %v3672
    %3957 = vmatprep.subr.bf16.mxu0 %v3675
    %3958 = vmatpush1.bf16.msra.mxu0 %v3674
    %3959 = vmatprep.mubr.bf16.mxu0 %v3023
    %3960 = vmatmul.mubr.bf16.gmra.mrb[0].mxu0 %v3022
    %v3961 = vpop.f32.mrb[0].mxu0
    %v3962 = vadd.f32 %v3921, %v3961
    %v3963 = vpop.f32.mrb[0].mxu0
    %v3964 = vadd.f32 %v3923, %v3963
    %v3965 = vpop.f32.mrb[0].mxu0
    %v3966 = vpop.f32.mrb[0].mxu0
    %3967 = vdwg.mxu0
    %v3968 = vmax.f32 %v3962, 0.0
    %v3969 = vmax.f32 %v3964, 0.0
    %v3970 = vpack.c.bf16 %v3968, %v3968
    %v3971 = vpack.c.bf16 %v3969, %v3969
    %v3972 = vld [vmem:[#allocation11] sm:$0xf]
    %v3973 = vld [vmem:[#allocation11 + $0x4] sm:$0xf]
    %v3974 = vld [vmem:[#allocation11 + $0x8] sm:$0xf]
    %v3975 = vld [vmem:[#allocation11 + $0xc] sm:$0xf]
    %v3976 = vld [vmem:[#allocation11 + $0x10] sm:$0xf]
    %v3977 = vld [vmem:[#allocation11 + $0x14] sm:$0xf]
    %v3978 = vld [vmem:[#allocation11 + $0x18] sm:$0xf]
    %v3979 = vld [vmem:[#allocation11 + $0x1c] sm:$0xf]
    %v3980 = vld [vmem:[#allocation11 + $0x20] sm:$0xf]
    %v3981 = vld [vmem:[#allocation11 + $0x24] sm:$0xf]
    %v3982 = vld [vmem:[#allocation11 + $0x28] sm:$0xf]
    %v3983 = vld [vmem:[#allocation11 + $0x2c] sm:$0xf]
    %v3984 = vld [vmem:[#allocation11 + $0x30] sm:$0xf]
    %v3985 = vld [vmem:[#allocation11 + $0x34] sm:$0xf]
    %v3986 = vld [vmem:[#allocation11 + $0x38] sm:$0xf]
    %v3987 = vld [vmem:[#allocation11 + $0x3c] sm:$0xf]
    %v3988 = vld [vmem:[#allocation11 + $0x40] sm:$0xf]
    %v3989 = vld [vmem:[#allocation11 + $0x44] sm:$0xf]
    %v3990 = vld [vmem:[#allocation11 + $0x48] sm:$0xf]
    %v3991 = vld [vmem:[#allocation11 + $0x4c] sm:$0xf]
    %v3992 = vld [vmem:[#allocation11 + $0x50] sm:$0xf]
    %v3993 = vld [vmem:[#allocation11 + $0x54] sm:$0xf]
    %v3994 = vld [vmem:[#allocation11 + $0x58] sm:$0xf]
    %v3995 = vld [vmem:[#allocation11 + $0x5c] sm:$0xf]
    %v3996 = vld [vmem:[#allocation11 + $0x60] sm:$0xf]
    %v3997 = vld [vmem:[#allocation11 + $0x64] sm:$0xf]
    %v3998 = vld [vmem:[#allocation11 + $0x68] sm:$0xf]
    %v3999 = vld [vmem:[#allocation11 + $0x6c] sm:$0xf]
    %v4000 = vld [vmem:[#allocation11 + $0x70] sm:$0xf]
    %v4001 = vld [vmem:[#allocation11 + $0x74] sm:$0xf]
    %v4002 = vld [vmem:[#allocation11 + $0x78] sm:$0xf]
    %v4003 = vld [vmem:[#allocation11 + $0x7c] sm:$0xf]
    %v4004 = vld [vmem:[#allocation13] sm:$0x1]
    %v4006 = vlaneseq
    %v4007 = vshrl.u32 %v4006, 7
    %v4008 = vsub.s32 0, %v4007
    %v4009 = vrot.slane %v4004, %v4008
    %v4043 = vunpack.c.l.b16 %v3972
    %v4044 = vunpack.c.l.b16 %v3973
    %v4045 = vunpack.c.l.b16 %v3974
    %v4046 = vunpack.c.l.b16 %v3975
    %v4047 = vunpack.c.l.b16 %v3976
    %v4048 = vunpack.c.l.b16 %v3977
    %v4049 = vunpack.c.l.b16 %v3978
    %v4050 = vunpack.c.l.b16 %v3979
    %v4051 = vunpack.c.l.b16 %v3980
    %v4052 = vunpack.c.l.b16 %v3981
    %v4053 = vunpack.c.l.b16 %v3982
    %v4054 = vunpack.c.l.b16 %v3983
    %v4055 = vunpack.c.l.b16 %v3984
    %v4056 = vunpack.c.l.b16 %v3985
    %v4057 = vunpack.c.l.b16 %v3986
    %v4058 = vunpack.c.l.b16 %v3987
    %v4059 = vunpack.c.l.b16 %v3988
    %v4060 = vunpack.c.l.b16 %v3989
    %v4061 = vunpack.c.l.b16 %v3990
    %v4062 = vunpack.c.l.b16 %v3991
    %v4063 = vunpack.c.l.b16 %v3992
    %v4064 = vunpack.c.l.b16 %v3993
    %v4065 = vunpack.c.l.b16 %v3994
    %v4066 = vunpack.c.l.b16 %v3995
    %v4067 = vunpack.c.l.b16 %v3996
    %v4068 = vunpack.c.l.b16 %v3997
    %v4069 = vunpack.c.l.b16 %v3998
    %v4070 = vunpack.c.l.b16 %v3999
    %v4071 = vunpack.c.l.b16 %v4000
    %v4072 = vunpack.c.l.b16 %v4001
    %v4073 = vunpack.c.l.b16 %v4002
    %v4074 = vunpack.c.l.b16 %v4003
    %v4075 = vpack.c.b16 %v4044, %v4043
    %v4076 = vpack.c.b16 %v4046, %v4045
    %v4077 = vpack.c.b16 %v4048, %v4047
    %v4078 = vpack.c.b16 %v4050, %v4049
    %v4079 = vpack.c.b16 %v4052, %v4051
    %v4080 = vpack.c.b16 %v4054, %v4053
    %v4081 = vpack.c.b16 %v4056, %v4055
    %v4082 = vpack.c.b16 %v4058, %v4057
    %v4083 = vpack.c.b16 %v4060, %v4059
    %v4084 = vpack.c.b16 %v4062, %v4061
    %v4085 = vpack.c.b16 %v4064, %v4063
    %v4086 = vpack.c.b16 %v4066, %v4065
    %v4087 = vpack.c.b16 %v4068, %v4067
    %v4088 = vpack.c.b16 %v4070, %v4069
    %v4089 = vpack.c.b16 %v4072, %v4071
    %v4090 = vpack.c.b16 %v4074, %v4073
    %4107 = vmatprep.subr.bf16.mxu0 0
    %4108 = vmatpush1.bf16.msra.mxu0 %v4075
    %4109 = vmatprep.subr.bf16.mxu0 0
    %4110 = vmatpush1.bf16.msra.mxu0 %v4076
    %4111 = vmatprep.subr.bf16.mxu0 0
    %4112 = vmatpush1.bf16.msra.mxu0 %v4077
    %4113 = vmatprep.subr.bf16.mxu0 0
    %4114 = vmatpush1.bf16.msra.mxu0 %v4078
    %4115 = vmatprep.subr.bf16.mxu0 0
    %4116 = vmatpush1.bf16.msra.mxu0 %v4079
    %4117 = vmatprep.subr.bf16.mxu0 0
    %4118 = vmatpush1.bf16.msra.mxu0 %v4080
    %4119 = vmatprep.subr.bf16.mxu0 0
    %4120 = vmatpush1.bf16.msra.mxu0 %v4081
    %4121 = vmatprep.subr.bf16.mxu0 0
    %4122 = vmatpush1.bf16.msra.mxu0 %v4082
    %4123 = vmatprep.subr.bf16.mxu0 0
    %4124 = vmatpush1.bf16.msra.mxu0 %v4083
    %4125 = vmatprep.subr.bf16.mxu0 0
    %4126 = vmatpush1.bf16.msra.mxu0 %v4084
    %4127 = vmatprep.subr.bf16.mxu0 0
    %4128 = vmatpush1.bf16.msra.mxu0 %v4085
    %4129 = vmatprep.subr.bf16.mxu0 0
    %4130 = vmatpush1.bf16.msra.mxu0 %v4086
    %4131 = vmatprep.subr.bf16.mxu0 0
    %4132 = vmatpush1.bf16.msra.mxu0 %v4087
    %4133 = vmatprep.subr.bf16.mxu0 0
    %4134 = vmatpush1.bf16.msra.mxu0 %v4088
    %4135 = vmatprep.subr.bf16.mxu0 0
    %4136 = vmatpush1.bf16.msra.mxu0 %v4089
    %4137 = vmatprep.subr.bf16.mxu0 0
    %4138 = vmatpush1.bf16.msra.mxu0 %v4090
    %4139 = vmatprep.mubr.bf16.mxu0 %v3971
    %4140 = vmatmul.mubr.bf16.gmra.mrb[0].mxu0 %v3970
    %v4141 = vpop.f32.mrb[0].mxu0
    %v4142 = vadd.f32 %v4009, %v4141
    %v4143 = vpop.f32.mrb[0].mxu0
    %v4144 = vpop.f32.mrb[0].mxu0
    %v4145 = vpop.f32.mrb[0].mxu0
    %4146 = vdwg.mxu0
    %4147 = vst [vmem:[#allocation14] sm:$0x3] %v4142
    // Predicated region
    $region58: #{tpu_custom_call.1} parent=1 // pred_check
      _
    $region59: #{tpu_custom_call.1} parent=1 // pred_check_branch
      %4149 = sbr.rel (0) target = $region61
    $region60: #{tpu_custom_call.1} parent=1 // pred_region
      %s4151 = ssub.s32 32, 32
      %4152 = vsyncadd [#allocation4], %s4151
      %s4154 = sshll.u32 [#allocation14], 4
      %s4155 = int_to_ptr.vmem [resolvable:$true] %s4154
      %4157 = dma.vmem_to_hbm [thread:$0]  %s4155, 32, %s7, [#allocation4]
    $region61: #{tpu_custom_call.1} parent=1 // pred_fallthru
      _
    // Predicated region
    $region62: #{tpu_custom_call.1} parent=1 // pred_check
      _
    $region63: #{tpu_custom_call.1} parent=1 // pred_check_branch
      %4159 = sbr.rel (0) target = $region65
    $region64: #{tpu_custom_call.1} parent=1 // pred_region
      %4160 = dma.done [#allocation4], 32
    $region65: #{tpu_custom_call.1} parent=1 // pred_fallthru
      _
    %4161 = vsyncpa [#allocation3], 1
    %4162 = vsyncpa [#allocation6], 1
    %4163 = vsyncpa [#allocation9], 1
    %4164 = vsyncpa [#allocation12], 1
    %4165 = vsyncpa [#allocation4], 1

</llo_original>
